<compile_context>
chip_gen: v7x
topology: tpu7x:2x2x1
jax: 0.10.0
libtpu: 0.0.40
codegen_flags: <defaults>
</compile_context>

<pallas_src>
import jax
import jax.numpy as jnp
from jax.experimental import pallas as pl
from jax.experimental.pallas import tpu as pltpu

_VMEM_LIMIT = 48 * 1024 * 1024   # leave headroom on v7x (64 MiB physical)


def _round_up(x, m):
    return (x + m - 1) // m * m


def _largest_divisor_leq(n, cap):
    d = 1
    for k in range(1, min(n, cap) + 1):
        if n % k == 0:
            d = k
    return d


# ----------------------------- row-tiled linears -----------------------------

def _linear_kernel(x_ref, w_ref, b_ref, o_ref):
    x = x_ref[...].astype(jnp.bfloat16)
    o_ref[...] = jnp.dot(x, w_ref[...],
                         preferred_element_type=jnp.float32) + b_ref[...]


def _sum_halves_linear_kernel(x_ref, w_ref, b_ref, o_ref):
    # x holds [fwd | bwd] lane halves; add them on the VPU before the dot.
    h = w_ref.shape[0]
    x = (x_ref[:, :h] + x_ref[:, h:]).astype(jnp.bfloat16)
    o_ref[...] = jnp.dot(x, w_ref[...],
                         preferred_element_type=jnp.float32) + b_ref[...]


def _rowwise_matmul(kernel, x2d, w_bf16, b, tm_target=256):
    """Tile over rows; pad M to a multiple of the tile (no single-block fallback)."""
    M, In = x2d.shape
    Out = w_bf16.shape[1]
    tm = min(tm_target, _round_up(M, 8))
    Mp = _round_up(M, tm)
    if Mp != M:
        x2d = jnp.pad(x2d, ((0, Mp - M), (0, 0)))
    y = pl.pallas_call(
        kernel,
        out_shape=jax.ShapeDtypeStruct((Mp, Out), jnp.float32),
        grid=(Mp // tm,),
        in_specs=[pl.BlockSpec((tm, In), lambda i: (i, 0)),
                  pl.BlockSpec(w_bf16.shape, lambda i: (0, 0)),
                  pl.BlockSpec((1, Out), lambda i: (0, 0))],
        out_specs=pl.BlockSpec((tm, Out), lambda i: (i, 0)),
        compiler_params=pltpu.CompilerParams(
            dimension_semantics=("parallel",),
            vmem_limit_bytes=_VMEM_LIMIT),
    )(x2d, w_bf16, b.reshape(1, Out))
    return y[:M] if Mp != M else y


def linear(x2d, w_bf16, b):
    return _rowwise_matmul(_linear_kernel, x2d, w_bf16, b)


def sum_halves_linear(x2d, w_bf16, b):
    return _rowwise_matmul(_sum_halves_linear_kernel, x2d, w_bf16, b)


def linear_lane_dense(x2d, w_bf16, b):
    """Linear whose Out dim is padded to a multiple of 128 lanes (dense vst)."""
    Out = w_bf16.shape[1]
    pad = (-Out) % 128
    if pad:
        w_bf16 = jnp.pad(w_bf16, ((0, 0), (0, pad)))
        b = jnp.pad(b, (0, pad))
    return linear(x2d, w_bf16, b)[:, :Out]


# ----------------------------- conv 3x3 --------------------------------------

def _conv3x3_kernel(xp_ref, w_ref, b_ref, y_ref, st_ref):
    # xp_ref: (Bblk, Hf+2, Wf+2, Cin) halo-padded NHWC images (f32, in VMEM)
    # w_ref:  (9, Cin, Cout) tap-major weights, bf16
    # b_ref:  (1, Cout) f32
    # y_ref:  (Bblk, Hf*Wf, Cout) conv + bias output
    # st_ref: (8, Cout) partial BN stats [sum; sumsq; 0...] for this block
    bblk, hp, wp, cin = xp_ref.shape
    hf, wf = hp - 2, wp - 2
    r = bblk * hf * wf
    cout = y_ref.shape[-1]
    acc = jnp.zeros((r, cout), jnp.float32)
    for k in range(9):                      # 9 shifted taps accumulated on MXU
        kh, kw = divmod(k, 3)
        tap = xp_ref[:, kh:kh + hf, kw:kw + wf, :].reshape(r, cin)
        acc = acc + jnp.dot(tap.astype(jnp.bfloat16), w_ref[k],
                            preferred_element_type=jnp.float32)
    y = acc + b_ref[...]
    y_ref[...] = y.reshape(bblk, hf * wf, cout)
    # partial BN stats, padded to 8 sublanes for a dense writeback
    rows = jax.lax.broadcasted_iota(jnp.int32, (8, cout), 0)
    s1 = jnp.sum(y, axis=0, keepdims=True)
    s2 = jnp.sum(y * y, axis=0, keepdims=True)
    st_ref[...] = jnp.where(rows == 0, s1, jnp.where(rows == 1, s2, 0.0))


def conv3x3(xp, w9_bf16, bias, hf, wf):
    """xp: (B, Hf+2, Wf+2, Cin) f32 padded NHWC, w9: (9, Cin, Cout) bf16.
    Returns y: (B, Hf*Wf, Cout) and partial stats: (B//Bblk, 8, Cout)."""
    B, Hp, Wp, Cin = xp.shape
    Cout = w9_bf16.shape[-1]
    bblk = _largest_divisor_leq(B, 8)        # several images per grid step
    return pl.pallas_call(
        _conv3x3_kernel,
        out_shape=(jax.ShapeDtypeStruct((B, hf * wf, Cout), jnp.float32),
                   jax.ShapeDtypeStruct((B // bblk, 8, Cout), jnp.float32)),
        grid=(B // bblk,),
        in_specs=[pl.BlockSpec((bblk, Hp, Wp, Cin), lambda b: (b, 0, 0, 0)),
                  pl.BlockSpec((9, Cin, Cout), lambda b: (0, 0, 0)),
                  pl.BlockSpec((1, Cout), lambda b: (0, 0))],
        out_specs=(pl.BlockSpec((bblk, hf * wf, Cout), lambda b: (b, 0, 0)),
                   pl.BlockSpec((None, 8, Cout), lambda b: (b, 0, 0))),
        compiler_params=pltpu.CompilerParams(
            dimension_semantics=("parallel",),
            vmem_limit_bytes=_VMEM_LIMIT),
    )(xp, w9_bf16, bias.reshape(1, Cout))


# ------------------- fused BN(apply) + ReLU + linear1 ------------------------
# Consumes the conv output layout directly: grid = (batch blocks, Hf) where Hf
# is a reduction axis; lin1_w is pre-grouped by h outside (wg[h] = rows c*Hf+h).

def _bn_relu_lin1_kernel(y_ref, s_ref, t_ref, w_ref, b_ref, o_ref, acc_ref):
    h = pl.program_id(1)
    bblk, wf, c6 = y_ref.shape
    x = jnp.maximum(y_ref[...] * s_ref[...] + t_ref[...], 0.0)
    x = x.reshape(bblk * wf, c6).astype(jnp.bfloat16)

    @pl.when(h == 0)
    def _():
        acc_ref[...] = jnp.zeros_like(acc_ref)

    acc_ref[...] += jnp.dot(x, w_ref[...], preferred_element_type=jnp.float32)

    @pl.when(h == pl.num_programs(1) - 1)
    def _():
        o_ref[...] = (acc_ref[...] + b_ref[...]).reshape(o_ref.shape)


def bn_relu_linear1(y_conv, scale_c, shift_c, wg_bf16, b, wf):
    """y_conv: (B, Hf*Wf, C6), wg: (Hf, C6, Out) bf16 -> (B, Wf, Out)."""
    B, HW, C6 = y_conv.shape
    Hf = HW // wf
    Out = wg_bf16.shape[-1]
    bblk = _largest_divisor_leq(B, 8)
    return pl.pallas_call(
        _bn_relu_lin1_kernel,
        out_shape=jax.ShapeDtypeStruct((B, wf, Out), jnp.float32),
        grid=(B // bblk, Hf),
        in_specs=[pl.BlockSpec((bblk, wf, C6), lambda b, h: (b, h, 0)),
                  pl.BlockSpec((1, 1, C6), lambda b, h: (0, 0, 0)),
                  pl.BlockSpec((1, 1, C6), lambda b, h: (0, 0, 0)),
                  pl.BlockSpec((None, C6, Out), lambda b, h: (h, 0, 0)),
                  pl.BlockSpec((1, Out), lambda b, h: (0, 0))],
        out_specs=pl.BlockSpec((bblk, wf, Out), lambda b, h: (b, 0, 0)),
        scratch_shapes=[pltpu.VMEM((bblk * wf, Out), jnp.float32)],
        compiler_params=pltpu.CompilerParams(
            dimension_semantics=("parallel", "arbitrary"),
            vmem_limit_bytes=_VMEM_LIMIT),
    )(y_conv, scale_c.reshape(1, 1, C6), shift_c.reshape(1, 1, C6),
      wg_bf16, b.reshape(1, Out))


# ----------------------------- bi-LSTM recurrence ----------------------------
# Both directions fused in one kernel invocation: per time step two independent
# h@Whh -> gates chains (fwd at t, bwd at T-1-t); output written directly in
# concatenated [fwd | bwd] lane layout.

def _bilstm_rec_kernel(gx_ref, whhf_ref, whhb_ref, o_ref):
    T, N, _ = gx_ref.shape
    H = whhf_ref.shape[0]
    G4 = 4 * H
    whh_f = whhf_ref[...]
    whh_b = whhb_ref[...]

    def lstm_cell(g, c):
        i = jax.nn.sigmoid(g[:, 0:H])
        f = jax.nn.sigmoid(g[:, H:2 * H])
        gg = jnp.tanh(g[:, 2 * H:3 * H])
        o = jax.nn.sigmoid(g[:, 3 * H:4 * H])
        c = f * c + i * gg
        return o * jnp.tanh(c), c

    def step(t, carry):
        hf, cf, hb, cb = carry
        tb = T - 1 - t
        gf = gx_ref[t, :, 0:G4] + jnp.dot(
            hf.astype(jnp.bfloat16), whh_f, preferred_element_type=jnp.float32)
        gb = gx_ref[tb, :, G4:2 * G4] + jnp.dot(
            hb.astype(jnp.bfloat16), whh_b, preferred_element_type=jnp.float32)
        hf, cf = lstm_cell(gf, cf)
        hb, cb = lstm_cell(gb, cb)
        o_ref[t, :, 0:H] = hf
        o_ref[tb, :, H:2 * H] = hb
        return (hf, cf, hb, cb)

    z = jnp.zeros((N, H), jnp.float32)
    jax.lax.fori_loop(0, T, step, (z, z, z, z), unroll=min(2, T))


def bilstm_rec(gx, whh_f_bf16, whh_b_bf16):
    """gx: (T, N, 8H) [fwd gates | bwd gates] -> (T, N, 2H) [fwd h | bwd h]."""
    T, N, _ = gx.shape
    H = whh_f_bf16.shape[0]
    return pl.pallas_call(
        _bilstm_rec_kernel,
        out_shape=jax.ShapeDtypeStruct((T, N, 2 * H), jnp.float32),
        compiler_params=pltpu.CompilerParams(vmem_limit_bytes=_VMEM_LIMIT),
    )(gx, whh_f_bf16, whh_b_bf16)


def bilstm(y, p, sum_halves=False):
    """y: (T, N, F) -> (T, N, 2H).  Input projection (both directions) hoisted
    out of the recurrence into one tiled matmul.  If sum_halves, the projection
    also fuses the previous layer's add_output (fwd + bwd lane halves)."""
    T, N, F = y.shape
    H = p["whh_f"].shape[0]
    wih2 = jnp.concatenate([p["wih_f"], p["wih_b"]], axis=1).astype(jnp.bfloat16)
    b2 = jnp.concatenate([p["b_f"], p["b_b"]])
    x2d = y.reshape(T * N, F)
    gx = (sum_halves_linear if sum_halves else linear)(x2d, wih2, b2)
    gx = gx.reshape(T, N, 8 * H)
    return bilstm_rec(gx, p["whh_f"].astype(jnp.bfloat16),
                      p["whh_b"].astype(jnp.bfloat16))


# ----------------------------- CRNN forward ----------------------------------

def crnn_forward(x_feat, params):
    """x_feat: (B, C_feat, Hf, Wf) backbone feature map (NCHW)."""
    B, Cin, Hf, Wf = x_feat.shape
    C6 = params["conv_w"].shape[0]

    # --- cn6 conv (3x3, stride 1, pad 1) + per-block partial BN stats ---
    x = jnp.transpose(x_feat, (0, 2, 3, 1))                       # NHWC
    xp = jnp.pad(x, ((0, 0), (1, 1), (1, 1), (0, 0)))             # halo pad
    w9 = jnp.transpose(params["conv_w"], (2, 3, 1, 0)).reshape(9, Cin, C6)
    y, pstats = conv3x3(xp, w9.astype(jnp.bfloat16), params["conv_b"], Hf, Wf)

    # --- training-mode BN stats (biased var), folded to per-channel scale/shift
    n = B * Hf * Wf
    mean = jnp.sum(pstats[:, 0, :], axis=0) / n
    var = jnp.sum(pstats[:, 1, :], axis=0) / n - mean * mean
    inv = jax.lax.rsqrt(var + 1e-5)
    scale_c = params["bn_g"] * inv
    shift_c = params["bn_b"] - mean * scale_c

    # --- fused BN + ReLU + linear1, reading conv layout directly (no HBM
    #     transpose); linear1 weight rows regrouped by h once outside.
    wg = params["lin1_w"].reshape(C6, Hf, -1).transpose(1, 0, 2)  # (Hf, C6, Out)
    y = bn_relu_linear1(y, scale_c, shift_c, wg.astype(jnp.bfloat16),
                        params["lin1_b"], Wf)                     # (B, Wf, 2*hid)

    # --- gru1 (bi-LSTM); add_output=True fused into gru2's input projection ---
    o1 = bilstm(y, params["lstm1"])                               # (B, Wf, 2H)
    o2 = bilstm(o1, params["lstm2"], sum_halves=True)             # (B, Wf, 2H)

    # --- linear2 (lane-dense padded output) ---
    T, N, twoH = o2.shape
    V = params["lin2_w"].shape[1]
    y = linear_lane_dense(o2.reshape(T * N, twoH),
                          params["lin2_w"].astype(jnp.bfloat16),
                          params["lin2_b"]).reshape(T, N, V)

    # --- permute(1, 0, 2) ---
    return jnp.transpose(y, (1, 0, 2))


# ----------------------------- pure-JAX reference ----------------------------
# Mirrors the kernels' bf16-operand / f32-accumulation precision choice.

def _lstm_ref_dir(x, wih, whh, b, reverse):
    H = whh.shape[0]
    N = x.shape[1]
    wih_b = wih.astype(jnp.bfloat16)
    whh_b = whh.astype(jnp.bfloat16)

    def step(carry, xt):
        h, c = carry
        gates = (jnp.dot(xt.astype(jnp.bfloat16), wih_b,
                         preferred_element_type=jnp.float32)
                 + jnp.dot(h.astype(jnp.bfloat16), whh_b,
                           preferred_element_type=jnp.float32) + b)
        i = jax.nn.sigmoid(gates[:, :H])
        f = jax.nn.sigmoid(gates[:, H:2 * H])
        g = jnp.tanh(gates[:, 2 * H:3 * H])
        o = jax.nn.sigmoid(gates[:, 3 * H:])
        c = f * c + i * g
        h = o * jnp.tanh(c)
        return (h, c), h

    xs = x[::-1] if reverse else x
    _, ys = jax.lax.scan(step, (jnp.zeros((N, H)), jnp.zeros((N, H))), xs)
    return ys[::-1] if reverse else ys


def crnn_ref(x_feat, params):
    B = x_feat.shape[0]
    bf = jnp.bfloat16
    y = jax.lax.conv_general_dilated(
        x_feat.astype(bf), params["conv_w"].astype(bf), (1, 1), ((1, 1), (1, 1)),
        dimension_numbers=("NCHW", "OIHW", "NCHW"),
        preferred_element_type=jnp.float32)
    y = y + params["conv_b"][None, :, None, None]
    mean = y.mean(axis=(0, 2, 3), keepdims=True)
    var = ((y - mean) ** 2).mean(axis=(0, 2, 3), keepdims=True)
    y = (y - mean) * jax.lax.rsqrt(var + 1e-5)
    y = y * params["bn_g"][None, :, None, None] + params["bn_b"][None, :, None, None]
    y = jnp.maximum(y, 0.0)
    y = jnp.transpose(y, (0, 3, 1, 2))             # (B, W, C6, H)
    n_ch = y.shape[1]
    y = y.reshape(B, n_ch, -1)                     # (B, W, C6*H)
    y = jnp.dot(y.astype(bf), params["lin1_w"].astype(bf),
                preferred_element_type=jnp.float32) + params["lin1_b"]
    p = params["lstm1"]
    o = jnp.concatenate(
        [_lstm_ref_dir(y, p["wih_f"], p["whh_f"], p["b_f"], False),
         _lstm_ref_dir(y, p["wih_b"], p["whh_b"], p["b_b"], True)], axis=-1)
    H = o.shape[-1] // 2
    y = o[:, :, :H] + o[:, :, H:]
    p = params["lstm2"]
    y = jnp.concatenate(
        [_lstm_ref_dir(y, p["wih_f"], p["whh_f"], p["b_f"], False),
         _lstm_ref_dir(y, p["wih_b"], p["whh_b"], p["b_b"], True)], axis=-1)
    y = jnp.dot(y.astype(bf), params["lin2_w"].astype(bf),
                preferred_element_type=jnp.float32) + params["lin2_b"]
    return jnp.transpose(y, (1, 0, 2))


# ----------------------------- parameter init --------------------------------

def _uniform(key, shape, scale):
    return jax.random.uniform(key, shape, jnp.float32, -scale, scale)


def init_lstm(key, insize, hidden):
    ks = jax.random.split(key, 6)
    s = 1.0 / hidden ** 0.5
    return {"wih_f": _uniform(ks[0], (insize, 4 * hidden), s),
            "whh_f": _uniform(ks[1], (hidden, 4 * hidden), s),
            "b_f": _uniform(ks[2], (4 * hidden,), s),     # b_ih + b_hh combined
            "wih_b": _uniform(ks[3], (insize, 4 * hidden), s),
            "whh_b": _uniform(ks[4], (hidden, 4 * hidden), s),
            "b_b": _uniform(ks[5], (4 * hidden,), s)}


def init_params(key, c_feat, c6, hf, hidden, vocab):
    ks = jax.random.split(key, 8)
    conv_s = 1.0 / (c_feat * 9) ** 0.5
    lin1_in = c6 * hf
    lin1_out = 2 * hidden
    return {
        "conv_w": _uniform(ks[0], (c6, c_feat, 3, 3), conv_s),
        "conv_b": _uniform(ks[1], (c6,), conv_s),
        "bn_g": jnp.ones((c6,), jnp.float32),
        "bn_b": jnp.zeros((c6,), jnp.float32),
        "lin1_w": _uniform(ks[2], (lin1_in, lin1_out), 1.0 / lin1_in ** 0.5),
        "lin1_b": _uniform(ks[3], (lin1_out,), 1.0 / lin1_in ** 0.5),
        "lstm1": init_lstm(ks[4], lin1_out, hidden),
        "lstm2": init_lstm(ks[5], hidden, hidden),
        "lin2_w": _uniform(ks[6], (2 * hidden, vocab), 1.0 / (2 * hidden) ** 0.5),
        "lin2_b": _uniform(ks[7], (vocab,), 1.0 / (2 * hidden) ** 0.5),
    }


# ----------------------------- main -------------------------------------------

if __name__ == "__main__":
    # Small, structure-consistent, lane-friendly shapes (original: C_feat=1024,
    # C6=256, Hf=4, hidden=256, vocab=11 -> scaled down here).
    B, C_FEAT, HF, WF = 2, 32, 8, 8
    C6, HIDDEN, VOCAB = 128, 128, 11

    key = jax.random.PRNGKey(0)
    kx, kp = jax.random.split(key)
    x_feat = jax.random.normal(kx, (B, C_FEAT, HF, WF), jnp.float32)
    params = init_params(kp, C_FEAT, C6, HF, HIDDEN, VOCAB)

    out = jax.jit(crnn_forward)(x_feat, params)
    out = jax.block_until_ready(out)
    assert out.shape == (WF, B, VOCAB), out.shape

    ref = jax.jit(crnn_ref)(x_feat, params)
    ref = jax.block_until_ready(ref)
    err = float(jnp.max(jnp.abs(out - ref)))
    assert bool(jnp.allclose(out, ref, atol=2e-2, rtol=2e-2)), err

    print("KERNEL_OK")
</pallas_src>

<mosaic_0001>
module attributes {stable_mosaic.version = 11 : i64} {
  func.func @_conv3x3_kernel(%arg0: i32, %arg1: memref<2x10x10x32xf32, #tpu.memory_space<vmem>>, %arg2: memref<9x32x128xbf16, #tpu.memory_space<vmem>>, %arg3: memref<1x128xf32, #tpu.memory_space<vmem>>, %arg4: memref<2x64x128xf32, #tpu.memory_space<vmem>>, %arg5: memref<1x8x128xf32, #tpu.memory_space<vmem>>) attributes {dimension_semantics = [#tpu.dimension_semantics<parallel>], iteration_bounds = array<i64: 1>, scalar_prefetch = 0 : i64, scratch_operands = 0 : i64, tpu.core_type = #tpu.core_type<tc>, window_params = [{transform_indices = @transform_0, window_bounds = array<i64: 2, 10, 10, 32>}, {pipeline_mode = #tpu.pipeline_mode<synchronous>, transform_indices = @transform_1, window_bounds = array<i64: 9, 32, 128>}, {pipeline_mode = #tpu.pipeline_mode<synchronous>, transform_indices = @transform_2, window_bounds = array<i64: 1, 128>}, {transform_indices = @transform_3, window_bounds = array<i64: 2, 64, 128>}, {transform_indices = @transform_4, window_bounds = array<i64: 1, 8, 128>}]} {
    %cst = arith.constant 0.000000e+00 : f32
    %0 = vector.broadcast %cst : f32 to vector<128x128xf32>
    %c0 = arith.constant 0 : index
    %c0_0 = arith.constant 0 : index
    %c0_1 = arith.constant 0 : index
    %c0_2 = arith.constant 0 : index
    %1 = vector.load %arg1[%c0, %c0_0, %c0_1, %c0_2] : memref<2x10x10x32xf32, #tpu.memory_space<vmem>>, vector<2x8x8x32xf32>
    %2 = vector.shape_cast %1 : vector<2x8x8x32xf32> to vector<128x32xf32>
    %3 = arith.truncf %2 : vector<128x32xf32> to vector<128x32xbf16>
    %c0_3 = arith.constant 0 : index
    %c0_4 = arith.constant 0 : index
    %c0_5 = arith.constant 0 : index
    %4 = vector.load %arg2[%c0_3, %c0_4, %c0_5] : memref<9x32x128xbf16, #tpu.memory_space<vmem>>, vector<1x32x128xbf16>
    %5 = vector.shape_cast %4 : vector<1x32x128xbf16> to vector<32x128xbf16>
    %cst_6 = arith.constant dense<0.000000e+00> : vector<128x128xf32>
    %6 = tpu.matmul %3, %5, %cst_6 {dimension_numbers = #tpu.dot_dimension_numbers<[1], [0], [0], [1], [0, 0, 1, 1], [], []>} : vector<128x32xbf16>, vector<32x128xbf16>, vector<128x128xf32> -> vector<128x128xf32>
    %7 = arith.addf %0, %6 : vector<128x128xf32>
    %c0_7 = arith.constant 0 : index
    %c0_8 = arith.constant 0 : index
    %c1 = arith.constant 1 : index
    %c0_9 = arith.constant 0 : index
    %8 = vector.load %arg1[%c0_7, %c0_8, %c1, %c0_9] : memref<2x10x10x32xf32, #tpu.memory_space<vmem>>, vector<2x8x8x32xf32>
    %9 = vector.shape_cast %8 : vector<2x8x8x32xf32> to vector<128x32xf32>
    %10 = arith.truncf %9 : vector<128x32xf32> to vector<128x32xbf16>
    %c1_10 = arith.constant 1 : index
    %c0_11 = arith.constant 0 : index
    %c0_12 = arith.constant 0 : index
    %11 = vector.load %arg2[%c1_10, %c0_11, %c0_12] : memref<9x32x128xbf16, #tpu.memory_space<vmem>>, vector<1x32x128xbf16>
    %12 = vector.shape_cast %11 : vector<1x32x128xbf16> to vector<32x128xbf16>
    %cst_13 = arith.constant dense<0.000000e+00> : vector<128x128xf32>
    %13 = tpu.matmul %10, %12, %cst_13 {dimension_numbers = #tpu.dot_dimension_numbers<[1], [0], [0], [1], [0, 0, 1, 1], [], []>} : vector<128x32xbf16>, vector<32x128xbf16>, vector<128x128xf32> -> vector<128x128xf32>
    %14 = arith.addf %7, %13 : vector<128x128xf32>
    %c0_14 = arith.constant 0 : index
    %c0_15 = arith.constant 0 : index
    %c2 = arith.constant 2 : index
    %c0_16 = arith.constant 0 : index
    %15 = vector.load %arg1[%c0_14, %c0_15, %c2, %c0_16] : memref<2x10x10x32xf32, #tpu.memory_space<vmem>>, vector<2x8x8x32xf32>
    %16 = vector.shape_cast %15 : vector<2x8x8x32xf32> to vector<128x32xf32>
    %17 = arith.truncf %16 : vector<128x32xf32> to vector<128x32xbf16>
    %c2_17 = arith.constant 2 : index
    %c0_18 = arith.constant 0 : index
    %c0_19 = arith.constant 0 : index
    %18 = vector.load %arg2[%c2_17, %c0_18, %c0_19] : memref<9x32x128xbf16, #tpu.memory_space<vmem>>, vector<1x32x128xbf16>
    %19 = vector.shape_cast %18 : vector<1x32x128xbf16> to vector<32x128xbf16>
    %cst_20 = arith.constant dense<0.000000e+00> : vector<128x128xf32>
    %20 = tpu.matmul %17, %19, %cst_20 {dimension_numbers = #tpu.dot_dimension_numbers<[1], [0], [0], [1], [0, 0, 1, 1], [], []>} : vector<128x32xbf16>, vector<32x128xbf16>, vector<128x128xf32> -> vector<128x128xf32>
    %21 = arith.addf %14, %20 : vector<128x128xf32>
    %c0_21 = arith.constant 0 : index
    %c1_22 = arith.constant 1 : index
    %c0_23 = arith.constant 0 : index
    %c0_24 = arith.constant 0 : index
    %22 = vector.load %arg1[%c0_21, %c1_22, %c0_23, %c0_24] : memref<2x10x10x32xf32, #tpu.memory_space<vmem>>, vector<2x8x8x32xf32>
    %23 = vector.shape_cast %22 : vector<2x8x8x32xf32> to vector<128x32xf32>
    %24 = arith.truncf %23 : vector<128x32xf32> to vector<128x32xbf16>
    %c3 = arith.constant 3 : index
    %c0_25 = arith.constant 0 : index
    %c0_26 = arith.constant 0 : index
    %25 = vector.load %arg2[%c3, %c0_25, %c0_26] : memref<9x32x128xbf16, #tpu.memory_space<vmem>>, vector<1x32x128xbf16>
    %26 = vector.shape_cast %25 : vector<1x32x128xbf16> to vector<32x128xbf16>
    %cst_27 = arith.constant dense<0.000000e+00> : vector<128x128xf32>
    %27 = tpu.matmul %24, %26, %cst_27 {dimension_numbers = #tpu.dot_dimension_numbers<[1], [0], [0], [1], [0, 0, 1, 1], [], []>} : vector<128x32xbf16>, vector<32x128xbf16>, vector<128x128xf32> -> vector<128x128xf32>
    %28 = arith.addf %21, %27 : vector<128x128xf32>
    %c0_28 = arith.constant 0 : index
    %c1_29 = arith.constant 1 : index
    %c1_30 = arith.constant 1 : index
    %c0_31 = arith.constant 0 : index
    %29 = vector.load %arg1[%c0_28, %c1_29, %c1_30, %c0_31] : memref<2x10x10x32xf32, #tpu.memory_space<vmem>>, vector<2x8x8x32xf32>
    %30 = vector.shape_cast %29 : vector<2x8x8x32xf32> to vector<128x32xf32>
    %31 = arith.truncf %30 : vector<128x32xf32> to vector<128x32xbf16>
    %c4 = arith.constant 4 : index
    %c0_32 = arith.constant 0 : index
    %c0_33 = arith.constant 0 : index
    %32 = vector.load %arg2[%c4, %c0_32, %c0_33] : memref<9x32x128xbf16, #tpu.memory_space<vmem>>, vector<1x32x128xbf16>
    %33 = vector.shape_cast %32 : vector<1x32x128xbf16> to vector<32x128xbf16>
    %cst_34 = arith.constant dense<0.000000e+00> : vector<128x128xf32>
    %34 = tpu.matmul %31, %33, %cst_34 {dimension_numbers = #tpu.dot_dimension_numbers<[1], [0], [0], [1], [0, 0, 1, 1], [], []>} : vector<128x32xbf16>, vector<32x128xbf16>, vector<128x128xf32> -> vector<128x128xf32>
    %35 = arith.addf %28, %34 : vector<128x128xf32>
    %c0_35 = arith.constant 0 : index
    %c1_36 = arith.constant 1 : index
    %c2_37 = arith.constant 2 : index
    %c0_38 = arith.constant 0 : index
    %36 = vector.load %arg1[%c0_35, %c1_36, %c2_37, %c0_38] : memref<2x10x10x32xf32, #tpu.memory_space<vmem>>, vector<2x8x8x32xf32>
    %37 = vector.shape_cast %36 : vector<2x8x8x32xf32> to vector<128x32xf32>
    %38 = arith.truncf %37 : vector<128x32xf32> to vector<128x32xbf16>
    %c5 = arith.constant 5 : index
    %c0_39 = arith.constant 0 : index
    %c0_40 = arith.constant 0 : index
    %39 = vector.load %arg2[%c5, %c0_39, %c0_40] : memref<9x32x128xbf16, #tpu.memory_space<vmem>>, vector<1x32x128xbf16>
    %40 = vector.shape_cast %39 : vector<1x32x128xbf16> to vector<32x128xbf16>
    %cst_41 = arith.constant dense<0.000000e+00> : vector<128x128xf32>
    %41 = tpu.matmul %38, %40, %cst_41 {dimension_numbers = #tpu.dot_dimension_numbers<[1], [0], [0], [1], [0, 0, 1, 1], [], []>} : vector<128x32xbf16>, vector<32x128xbf16>, vector<128x128xf32> -> vector<128x128xf32>
    %42 = arith.addf %35, %41 : vector<128x128xf32>
    %c0_42 = arith.constant 0 : index
    %c2_43 = arith.constant 2 : index
    %c0_44 = arith.constant 0 : index
    %c0_45 = arith.constant 0 : index
    %43 = vector.load %arg1[%c0_42, %c2_43, %c0_44, %c0_45] : memref<2x10x10x32xf32, #tpu.memory_space<vmem>>, vector<2x8x8x32xf32>
    %44 = vector.shape_cast %43 : vector<2x8x8x32xf32> to vector<128x32xf32>
    %45 = arith.truncf %44 : vector<128x32xf32> to vector<128x32xbf16>
    %c6 = arith.constant 6 : index
    %c0_46 = arith.constant 0 : index
    %c0_47 = arith.constant 0 : index
    %46 = vector.load %arg2[%c6, %c0_46, %c0_47] : memref<9x32x128xbf16, #tpu.memory_space<vmem>>, vector<1x32x128xbf16>
    %47 = vector.shape_cast %46 : vector<1x32x128xbf16> to vector<32x128xbf16>
    %cst_48 = arith.constant dense<0.000000e+00> : vector<128x128xf32>
    %48 = tpu.matmul %45, %47, %cst_48 {dimension_numbers = #tpu.dot_dimension_numbers<[1], [0], [0], [1], [0, 0, 1, 1], [], []>} : vector<128x32xbf16>, vector<32x128xbf16>, vector<128x128xf32> -> vector<128x128xf32>
    %49 = arith.addf %42, %48 : vector<128x128xf32>
    %c0_49 = arith.constant 0 : index
    %c2_50 = arith.constant 2 : index
    %c1_51 = arith.constant 1 : index
    %c0_52 = arith.constant 0 : index
    %50 = vector.load %arg1[%c0_49, %c2_50, %c1_51, %c0_52] : memref<2x10x10x32xf32, #tpu.memory_space<vmem>>, vector<2x8x8x32xf32>
    %51 = vector.shape_cast %50 : vector<2x8x8x32xf32> to vector<128x32xf32>
    %52 = arith.truncf %51 : vector<128x32xf32> to vector<128x32xbf16>
    %c7 = arith.constant 7 : index
    %c0_53 = arith.constant 0 : index
    %c0_54 = arith.constant 0 : index
    %53 = vector.load %arg2[%c7, %c0_53, %c0_54] : memref<9x32x128xbf16, #tpu.memory_space<vmem>>, vector<1x32x128xbf16>
    %54 = vector.shape_cast %53 : vector<1x32x128xbf16> to vector<32x128xbf16>
    %cst_55 = arith.constant dense<0.000000e+00> : vector<128x128xf32>
    %55 = tpu.matmul %52, %54, %cst_55 {dimension_numbers = #tpu.dot_dimension_numbers<[1], [0], [0], [1], [0, 0, 1, 1], [], []>} : vector<128x32xbf16>, vector<32x128xbf16>, vector<128x128xf32> -> vector<128x128xf32>
    %56 = arith.addf %49, %55 : vector<128x128xf32>
    %c0_56 = arith.constant 0 : index
    %c2_57 = arith.constant 2 : index
    %c2_58 = arith.constant 2 : index
    %c0_59 = arith.constant 0 : index
    %57 = vector.load %arg1[%c0_56, %c2_57, %c2_58, %c0_59] : memref<2x10x10x32xf32, #tpu.memory_space<vmem>>, vector<2x8x8x32xf32>
    %58 = vector.shape_cast %57 : vector<2x8x8x32xf32> to vector<128x32xf32>
    %59 = arith.truncf %58 : vector<128x32xf32> to vector<128x32xbf16>
    %c8 = arith.constant 8 : index
    %c0_60 = arith.constant 0 : index
    %c0_61 = arith.constant 0 : index
    %60 = vector.load %arg2[%c8, %c0_60, %c0_61] : memref<9x32x128xbf16, #tpu.memory_space<vmem>>, vector<1x32x128xbf16>
    %61 = vector.shape_cast %60 : vector<1x32x128xbf16> to vector<32x128xbf16>
    %cst_62 = arith.constant dense<0.000000e+00> : vector<128x128xf32>
    %62 = tpu.matmul %59, %61, %cst_62 {dimension_numbers = #tpu.dot_dimension_numbers<[1], [0], [0], [1], [0, 0, 1, 1], [], []>} : vector<128x32xbf16>, vector<32x128xbf16>, vector<128x128xf32> -> vector<128x128xf32>
    %63 = arith.addf %56, %62 : vector<128x128xf32>
    %c0_63 = arith.constant 0 : index
    %c0_64 = arith.constant 0 : index
    %64 = vector.load %arg3[%c0_63, %c0_64] : memref<1x128xf32, #tpu.memory_space<vmem>>, vector<1x128xf32>
    %65 = vector.broadcast %64 : vector<1x128xf32> to vector<128x128xf32>
    %66 = arith.addf %63, %65 : vector<128x128xf32>
    %67 = vector.shape_cast %66 : vector<128x128xf32> to vector<2x64x128xf32>
    %c0_65 = arith.constant 0 : index
    %c0_66 = arith.constant 0 : index
    %c0_67 = arith.constant 0 : index
    %68 = vector.load %arg4[%c0_65, %c0_66, %c0_67] : memref<2x64x128xf32, #tpu.memory_space<vmem>>, vector<2x64x128xf32>
    tpu.vector_store %arg4[%c0_65, %c0_66, %c0_67], %67 {strides = array<i32>} : memref<2x64x128xf32, #tpu.memory_space<vmem>>, vector<2x64x128xf32>,
    %69 = tpu.iota {dimensions = array<i32: 0>} : vector<8x128xi32>
    %cst_68 = arith.constant dense<0.000000e+00> : vector<128xf32>
    %70 = vector.multi_reduction <add>, %66, %cst_68 [0] : vector<128x128xf32> to vector<128xf32>
    %71 = vector.shape_cast %70 : vector<128xf32> to vector<1x128xf32>
    %72 = arith.mulf %66, %66 : vector<128x128xf32>
    %cst_69 = arith.constant dense<0.000000e+00> : vector<128xf32>
    %73 = vector.multi_reduction <add>, %72, %cst_69 [0] : vector<128x128xf32> to vector<128xf32>
    %74 = vector.shape_cast %73 : vector<128xf32> to vector<1x128xf32>
    %c0_i32 = arith.constant 0 : i32
    %75 = vector.broadcast %c0_i32 : i32 to vector<8x128xi32>
    %76 = arith.cmpi eq, %69, %75 : vector<8x128xi32>
    %c1_i32 = arith.constant 1 : i32
    %77 = vector.broadcast %c1_i32 : i32 to vector<8x128xi32>
    %78 = arith.cmpi eq, %69, %77 : vector<8x128xi32>
    %cst_70 = arith.constant 0.000000e+00 : f32
    %79 = vector.shape_cast %74 : vector<1x128xf32> to vector<1x128xf32>
    %80 = vector.broadcast %79 : vector<1x128xf32> to vector<8x128xf32>
    %81 = vector.broadcast %cst_70 : f32 to vector<8x128xf32>
    %82 = arith.select %78, %80, %81 : vector<8x128xi1>, vector<8x128xf32>
    %83 = vector.shape_cast %71 : vector<1x128xf32> to vector<1x128xf32>
    %84 = vector.broadcast %83 : vector<1x128xf32> to vector<8x128xf32>
    %85 = arith.select %76, %84, %82 : vector<8x128xi1>, vector<8x128xf32>
    %c0_71 = arith.constant 0 : index
    %c0_72 = arith.constant 0 : index
    %c0_73 = arith.constant 0 : index
    %86 = vector.load %arg5[%c0_71, %c0_72, %c0_73] : memref<1x8x128xf32, #tpu.memory_space<vmem>>, vector<1x8x128xf32>
    %87 = vector.shape_cast %86 : vector<1x8x128xf32> to vector<8x128xf32>
    %88 = vector.shape_cast %85 : vector<8x128xf32> to vector<1x8x128xf32>
    tpu.vector_store %arg5[%c0_71, %c0_72, %c0_73], %88 {strides = array<i32>} : memref<1x8x128xf32, #tpu.memory_space<vmem>>, vector<1x8x128xf32>,
    return
  }
  func.func @transform_0(%arg0: i32) -> (i32, i32, i32, i32) {
    %c0_i32 = arith.constant 0 : i32
    %c0_i32_0 = arith.constant 0 : i32
    %c0_i32_1 = arith.constant 0 : i32
    %c0_i32_2 = arith.constant 0 : i32
    return %arg0, %c0_i32, %c0_i32_0, %c0_i32_1 : i32, i32, i32, i32
  }
  func.func @transform_1(%arg0: i32) -> (i32, i32, i32) {
    %c0_i32 = arith.constant 0 : i32
    %c0_i32_0 = arith.constant 0 : i32
    %c0_i32_1 = arith.constant 0 : i32
    %c0_i32_2 = arith.constant 0 : i32
    return %c0_i32, %c0_i32_0, %c0_i32_1 : i32, i32, i32
  }
  func.func @transform_2(%arg0: i32) -> (i32, i32) {
    %c0_i32 = arith.constant 0 : i32
    %c0_i32_0 = arith.constant 0 : i32
    %c0_i32_1 = arith.constant 0 : i32
    return %c0_i32, %c0_i32_0 : i32, i32
  }
  func.func @transform_3(%arg0: i32) -> (i32, i32, i32) {
    %c0_i32 = arith.constant 0 : i32
    %c0_i32_0 = arith.constant 0 : i32
    %c0_i32_1 = arith.constant 0 : i32
    return %arg0, %c0_i32, %c0_i32_0 : i32, i32, i32
  }
  func.func @transform_4(%arg0: i32) -> (i32, i32, i32) {
    %c0_i32 = arith.constant 0 : i32
    %c0_i32_0 = arith.constant 0 : i32
    %c0_i32_1 = arith.constant 0 : i32
    return %arg0, %c0_i32, %c0_i32_0 : i32, i32, i32
  }
}

module attributes {stable_mosaic.version = 11 : i64} {
  func.func @_bn_relu_lin1_kernel(%arg0: i32, %arg1: i32, %arg2: memref<2x8x128xf32, #tpu.memory_space<vmem>>, %arg3: memref<1x1x128xf32, #tpu.memory_space<vmem>>, %arg4: memref<1x1x128xf32, #tpu.memory_space<vmem>>, %arg5: memref<1x128x256xbf16, #tpu.memory_space<vmem>>, %arg6: memref<1x256xf32, #tpu.memory_space<vmem>>, %arg7: memref<2x8x256xf32, #tpu.memory_space<vmem>>, %arg8: memref<16x256xf32, #tpu.memory_space<vmem>>) attributes {dimension_semantics = [#tpu.dimension_semantics<parallel>, #tpu.dimension_semantics<arbitrary>], iteration_bounds = array<i64: 1, 8>, scalar_prefetch = 0 : i64, scratch_operands = 1 : i64, tpu.core_type = #tpu.core_type<tc>, window_params = [{transform_indices = @transform_0, window_bounds = array<i64: 2, 8, 128>}, {pipeline_mode = #tpu.pipeline_mode<synchronous>, transform_indices = @transform_1, window_bounds = array<i64: 1, 1, 128>}, {pipeline_mode = #tpu.pipeline_mode<synchronous>, transform_indices = @transform_2, window_bounds = array<i64: 1, 1, 128>}, {transform_indices = @transform_3, window_bounds = array<i64: 1, 128, 256>}, {pipeline_mode = #tpu.pipeline_mode<synchronous>, transform_indices = @transform_4, window_bounds = array<i64: 1, 256>}, {transform_indices = @transform_5, window_bounds = array<i64: 2, 8, 256>}]} {
    %c0 = arith.constant 0 : index
    %c0_0 = arith.constant 0 : index
    %c0_1 = arith.constant 0 : index
    %0 = vector.load %arg2[%c0, %c0_0, %c0_1] : memref<2x8x128xf32, #tpu.memory_space<vmem>>, vector<2x8x128xf32>
    %c0_2 = arith.constant 0 : index
    %c0_3 = arith.constant 0 : index
    %c0_4 = arith.constant 0 : index
    %1 = vector.load %arg3[%c0_2, %c0_3, %c0_4] : memref<1x1x128xf32, #tpu.memory_space<vmem>>, vector<1x1x128xf32>
    %2 = vector.broadcast %1 : vector<1x1x128xf32> to vector<2x8x128xf32>
    %3 = arith.mulf %0, %2 : vector<2x8x128xf32>
    %c0_5 = arith.constant 0 : index
    %c0_6 = arith.constant 0 : index
    %c0_7 = arith.constant 0 : index
    %4 = vector.load %arg4[%c0_5, %c0_6, %c0_7] : memref<1x1x128xf32, #tpu.memory_space<vmem>>, vector<1x1x128xf32>
    %5 = vector.broadcast %4 : vector<1x1x128xf32> to vector<2x8x128xf32>
    %6 = arith.addf %3, %5 : vector<2x8x128xf32>
    %cst = arith.constant 0.000000e+00 : f32
    %7 = vector.broadcast %cst : f32 to vector<2x8x128xf32>
    %8 = arith.maximumf %6, %7 : vector<2x8x128xf32>
    %9 = vector.shape_cast %8 : vector<2x8x128xf32> to vector<16x128xf32>
    %10 = arith.truncf %9 : vector<16x128xf32> to vector<16x128xbf16>
    %c0_i32 = arith.constant 0 : i32
    %11 = arith.cmpi eq, %arg1, %c0_i32 : i32
    %12 = arith.extui %11 : i1 to i32
    %c0_i32_8 = arith.constant 0 : i32
    %13 = arith.cmpi ne, %12, %c0_i32_8 : i32
    scf.if %13 {
      %cst_18 = arith.constant 0.000000e+00 : f32
      %23 = vector.broadcast %cst_18 : f32 to vector<16x256xf32>
      %c0_19 = arith.constant 0 : index
      %c0_20 = arith.constant 0 : index
      %24 = vector.load %arg8[%c0_19, %c0_20] : memref<16x256xf32, #tpu.memory_space<vmem>>, vector<16x256xf32>
      tpu.vector_store %arg8[%c0_19, %c0_20], %23 {strides = array<i32>} : memref<16x256xf32, #tpu.memory_space<vmem>>, vector<16x256xf32>,
    } else {
    }
    %c0_9 = arith.constant 0 : index
    %c0_10 = arith.constant 0 : index
    %14 = vector.load %arg8[%c0_9, %c0_10] : memref<16x256xf32, #tpu.memory_space<vmem>>, vector<16x256xf32>
    %c0_11 = arith.constant 0 : index
    %c0_12 = arith.constant 0 : index
    %c0_13 = arith.constant 0 : index
    %15 = vector.load %arg5[%c0_11, %c0_12, %c0_13] : memref<1x128x256xbf16, #tpu.memory_space<vmem>>, vector<1x128x256xbf16>
    %16 = vector.shape_cast %15 : vector<1x128x256xbf16> to vector<128x256xbf16>
    %cst_14 = arith.constant dense<0.000000e+00> : vector<16x256xf32>
    %17 = tpu.matmul %10, %16, %cst_14 {dimension_numbers = #tpu.dot_dimension_numbers<[1], [0], [0], [1], [0, 0, 1, 1], [], []>} : vector<16x128xbf16>, vector<128x256xbf16>, vector<16x256xf32> -> vector<16x256xf32>
    %18 = arith.addf %14, %17 : vector<16x256xf32>
    %c0_15 = arith.constant 0 : index
    %c0_16 = arith.constant 0 : index
    %19 = vector.load %arg8[%c0_15, %c0_16] : memref<16x256xf32, #tpu.memory_space<vmem>>, vector<16x256xf32>
    tpu.vector_store %arg8[%c0_15, %c0_16], %18 {strides = array<i32>} : memref<16x256xf32, #tpu.memory_space<vmem>>, vector<16x256xf32>,
    %c7_i32 = arith.constant 7 : i32
    %20 = arith.cmpi eq, %arg1, %c7_i32 : i32
    %21 = arith.extui %20 : i1 to i32
    %c0_i32_17 = arith.constant 0 : i32
    %22 = arith.cmpi ne, %21, %c0_i32_17 : i32
    scf.if %22 {
      %c0_18 = arith.constant 0 : index
      %c0_19 = arith.constant 0 : index
      %23 = vector.load %arg8[%c0_18, %c0_19] : memref<16x256xf32, #tpu.memory_space<vmem>>, vector<16x256xf32>
      %c0_20 = arith.constant 0 : index
      %c0_21 = arith.constant 0 : index
      %24 = vector.load %arg6[%c0_20, %c0_21] : memref<1x256xf32, #tpu.memory_space<vmem>>, vector<1x256xf32>
      %25 = vector.broadcast %24 : vector<1x256xf32> to vector<16x256xf32>
      %26 = arith.addf %23, %25 : vector<16x256xf32>
      %27 = vector.shape_cast %26 : vector<16x256xf32> to vector<2x8x256xf32>
      %c0_22 = arith.constant 0 : index
      %c0_23 = arith.constant 0 : index
      %c0_24 = arith.constant 0 : index
      %28 = vector.load %arg7[%c0_22, %c0_23, %c0_24] : memref<2x8x256xf32, #tpu.memory_space<vmem>>, vector<2x8x256xf32>
      tpu.vector_store %arg7[%c0_22, %c0_23, %c0_24], %27 {strides = array<i32>} : memref<2x8x256xf32, #tpu.memory_space<vmem>>, vector<2x8x256xf32>,
    } else {
    }
    return
  }
  func.func @transform_0(%arg0: i32, %arg1: i32) -> (i32, i32, i32) {
    %c0_i32 = arith.constant 0 : i32
    %c0_i32_0 = arith.constant 0 : i32
    return %arg0, %arg1, %c0_i32 : i32, i32, i32
  }
  func.func @transform_1(%arg0: i32, %arg1: i32) -> (i32, i32, i32) {
    %c0_i32 = arith.constant 0 : i32
    %c0_i32_0 = arith.constant 0 : i32
    %c0_i32_1 = arith.constant 0 : i32
    %c0_i32_2 = arith.constant 0 : i32
    return %c0_i32, %c0_i32_0, %c0_i32_1 : i32, i32, i32
  }
  func.func @transform_2(%arg0: i32, %arg1: i32) -> (i32, i32, i32) {
    %c0_i32 = arith.constant 0 : i32
    %c0_i32_0 = arith.constant 0 : i32
    %c0_i32_1 = arith.constant 0 : i32
    %c0_i32_2 = arith.constant 0 : i32
    return %c0_i32, %c0_i32_0, %c0_i32_1 : i32, i32, i32
  }
  func.func @transform_3(%arg0: i32, %arg1: i32) -> (i32, i32, i32) {
    %c0_i32 = arith.constant 0 : i32
    %c0_i32_0 = arith.constant 0 : i32
    %c0_i32_1 = arith.constant 0 : i32
    return %arg1, %c0_i32, %c0_i32_0 : i32, i32, i32
  }
  func.func @transform_4(%arg0: i32, %arg1: i32) -> (i32, i32) {
    %c0_i32 = arith.constant 0 : i32
    %c0_i32_0 = arith.constant 0 : i32
    %c0_i32_1 = arith.constant 0 : i32
    return %c0_i32, %c0_i32_0 : i32, i32
  }
  func.func @transform_5(%arg0: i32, %arg1: i32) -> (i32, i32, i32) {
    %c0_i32 = arith.constant 0 : i32
    %c0_i32_0 = arith.constant 0 : i32
    %c0_i32_1 = arith.constant 0 : i32
    return %arg0, %c0_i32, %c0_i32_0 : i32, i32, i32
  }
}

module attributes {stable_mosaic.version = 11 : i64} {
  func.func @_linear_kernel(%arg0: i32, %arg1: memref<16x256xf32, #tpu.memory_space<vmem>>, %arg2: memref<256x1024xbf16, #tpu.memory_space<vmem>>, %arg3: memref<1x1024xf32, #tpu.memory_space<vmem>>, %arg4: memref<16x1024xf32, #tpu.memory_space<vmem>>) attributes {dimension_semantics = [#tpu.dimension_semantics<parallel>], iteration_bounds = array<i64: 1>, scalar_prefetch = 0 : i64, scratch_operands = 0 : i64, tpu.core_type = #tpu.core_type<tc>, window_params = [{transform_indices = @transform_0, window_bounds = array<i64: 16, 256>}, {pipeline_mode = #tpu.pipeline_mode<synchronous>, transform_indices = @transform_1, window_bounds = array<i64: 256, 1024>}, {pipeline_mode = #tpu.pipeline_mode<synchronous>, transform_indices = @transform_2, window_bounds = array<i64: 1, 1024>}, {transform_indices = @transform_3, window_bounds = array<i64: 16, 1024>}]} {
    %c0 = arith.constant 0 : index
    %c0_0 = arith.constant 0 : index
    %0 = vector.load %arg1[%c0, %c0_0] : memref<16x256xf32, #tpu.memory_space<vmem>>, vector<16x256xf32>
    %1 = arith.truncf %0 : vector<16x256xf32> to vector<16x256xbf16>
    %c0_1 = arith.constant 0 : index
    %c0_2 = arith.constant 0 : index
    %2 = vector.load %arg2[%c0_1, %c0_2] : memref<256x1024xbf16, #tpu.memory_space<vmem>>, vector<256x1024xbf16>
    %cst = arith.constant dense<0.000000e+00> : vector<16x1024xf32>
    %3 = tpu.matmul %1, %2, %cst {dimension_numbers = #tpu.dot_dimension_numbers<[1], [0], [0], [1], [0, 0, 1, 1], [], []>} : vector<16x256xbf16>, vector<256x1024xbf16>, vector<16x1024xf32> -> vector<16x1024xf32>
    %c0_3 = arith.constant 0 : index
    %c0_4 = arith.constant 0 : index
    %4 = vector.load %arg3[%c0_3, %c0_4] : memref<1x1024xf32, #tpu.memory_space<vmem>>, vector<1x1024xf32>
    %5 = vector.broadcast %4 : vector<1x1024xf32> to vector<16x1024xf32>
    %6 = arith.addf %3, %5 : vector<16x1024xf32>
    %c0_5 = arith.constant 0 : index
    %c0_6 = arith.constant 0 : index
    %7 = vector.load %arg4[%c0_5, %c0_6] : memref<16x1024xf32, #tpu.memory_space<vmem>>, vector<16x1024xf32>
    tpu.vector_store %arg4[%c0_5, %c0_6], %6 {strides = array<i32>} : memref<16x1024xf32, #tpu.memory_space<vmem>>, vector<16x1024xf32>,
    return
  }
  func.func @transform_0(%arg0: i32) -> (i32, i32) {
    %c0_i32 = arith.constant 0 : i32
    %c0_i32_0 = arith.constant 0 : i32
    return %arg0, %c0_i32 : i32, i32
  }
  func.func @transform_1(%arg0: i32) -> (i32, i32) {
    %c0_i32 = arith.constant 0 : i32
    %c0_i32_0 = arith.constant 0 : i32
    %c0_i32_1 = arith.constant 0 : i32
    return %c0_i32, %c0_i32_0 : i32, i32
  }
  func.func @transform_2(%arg0: i32) -> (i32, i32) {
    %c0_i32 = arith.constant 0 : i32
    %c0_i32_0 = arith.constant 0 : i32
    %c0_i32_1 = arith.constant 0 : i32
    return %c0_i32, %c0_i32_0 : i32, i32
  }
  func.func @transform_3(%arg0: i32) -> (i32, i32) {
    %c0_i32 = arith.constant 0 : i32
    %c0_i32_0 = arith.constant 0 : i32
    return %arg0, %c0_i32 : i32, i32
  }
}

module attributes {stable_mosaic.version = 11 : i64} {
  func.func @_bilstm_rec_kernel(%arg0: memref<2x8x1024xf32, #tpu.memory_space<vmem>>, %arg1: memref<128x512xbf16, #tpu.memory_space<vmem>>, %arg2: memref<128x512xbf16, #tpu.memory_space<vmem>>, %arg3: memref<2x8x256xf32, #tpu.memory_space<vmem>>) attributes {dimension_semantics = [], scalar_prefetch = 0 : i64, scratch_operands = 0 : i64, tpu.core_type = #tpu.core_type<tc>} {
    %c0 = arith.constant 0 : index
    %c0_0 = arith.constant 0 : index
    %0 = vector.load %arg1[%c0, %c0_0] : memref<128x512xbf16, #tpu.memory_space<vmem>>, vector<128x512xbf16>
    %c0_1 = arith.constant 0 : index
    %c0_2 = arith.constant 0 : index
    %1 = vector.load %arg2[%c0_1, %c0_2] : memref<128x512xbf16, #tpu.memory_space<vmem>>, vector<128x512xbf16>
    %cst = arith.constant 0.000000e+00 : f32
    %2 = vector.broadcast %cst : f32 to vector<8x128xf32>
    %c0_i32 = arith.constant 0 : i32
    %c1_i32 = arith.constant 1 : i32
    %3 = arith.subi %c1_i32, %c0_i32 : i32
    %4 = arith.index_cast %c0_i32 : i32 to index
    %c0_3 = arith.constant 0 : index
    %c0_4 = arith.constant 0 : index
    %5 = vector.load %arg0[%4, %c0_3, %c0_4] : memref<2x8x1024xf32, #tpu.memory_space<vmem>>, vector<1x8x512xf32>
    %6 = vector.shape_cast %5 : vector<1x8x512xf32> to vector<8x512xf32>
    %7 = arith.truncf %2 : vector<8x128xf32> to vector<8x128xbf16>
    %cst_5 = arith.constant dense<0.000000e+00> : vector<8x512xf32>
    %8 = tpu.matmul %7, %0, %cst_5 {dimension_numbers = #tpu.dot_dimension_numbers<[1], [0], [0], [1], [0, 0, 1, 1], [], []>} : vector<8x128xbf16>, vector<128x512xbf16>, vector<8x512xf32> -> vector<8x512xf32>
    %9 = arith.addf %6, %8 : vector<8x512xf32>
    %10 = arith.index_cast %3 : i32 to index
    %c0_6 = arith.constant 0 : index
    %c512 = arith.constant 512 : index
    %11 = vector.load %arg0[%10, %c0_6, %c512] : memref<2x8x1024xf32, #tpu.memory_space<vmem>>, vector<1x8x512xf32>
    %12 = vector.shape_cast %11 : vector<1x8x512xf32> to vector<8x512xf32>
    %13 = arith.truncf %2 : vector<8x128xf32> to vector<8x128xbf16>
    %cst_7 = arith.constant dense<0.000000e+00> : vector<8x512xf32>
    %14 = tpu.matmul %13, %1, %cst_7 {dimension_numbers = #tpu.dot_dimension_numbers<[1], [0], [0], [1], [0, 0, 1, 1], [], []>} : vector<8x128xbf16>, vector<128x512xbf16>, vector<8x512xf32> -> vector<8x512xf32>
    %15 = arith.addf %12, %14 : vector<8x512xf32>
    %16 = vector.extract_strided_slice %9 {offsets = [0, 0], sizes = [8, 128], strides = [1, 1]} : vector<8x512xf32> to vector<8x128xf32>
    %17 = arith.negf %16 : vector<8x128xf32>
    %18 = math.exp %17 : vector<8x128xf32>
    %cst_8 = arith.constant 1.000000e+00 : f32
    %19 = vector.broadcast %cst_8 : f32 to vector<8x128xf32>
    %20 = arith.addf %19, %18 : vector<8x128xf32>
    %21 = arith.divf %19, %20 : vector<8x128xf32>
    %22 = vector.extract_strided_slice %9 {offsets = [0, 128], sizes = [8, 128], strides = [1, 1]} : vector<8x512xf32> to vector<8x128xf32>
    %23 = arith.negf %22 : vector<8x128xf32>
    %24 = math.exp %23 : vector<8x128xf32>
    %cst_9 = arith.constant 1.000000e+00 : f32
    %25 = vector.broadcast %cst_9 : f32 to vector<8x128xf32>
    %26 = arith.addf %25, %24 : vector<8x128xf32>
    %27 = arith.divf %25, %26 : vector<8x128xf32>
    %28 = vector.extract_strided_slice %9 {offsets = [0, 256], sizes = [8, 128], strides = [1, 1]} : vector<8x512xf32> to vector<8x128xf32>
    %29 = math.tanh %28 : vector<8x128xf32>
    %30 = vector.extract_strided_slice %9 {offsets = [0, 384], sizes = [8, 128], strides = [1, 1]} : vector<8x512xf32> to vector<8x128xf32>
    %31 = arith.negf %30 : vector<8x128xf32>
    %32 = math.exp %31 : vector<8x128xf32>
    %cst_10 = arith.constant 1.000000e+00 : f32
    %33 = vector.broadcast %cst_10 : f32 to vector<8x128xf32>
    %34 = arith.addf %33, %32 : vector<8x128xf32>
    %35 = arith.divf %33, %34 : vector<8x128xf32>
    %36 = arith.mulf %27, %2 : vector<8x128xf32>
    %37 = arith.mulf %21, %29 : vector<8x128xf32>
    %38 = arith.addf %36, %37 : vector<8x128xf32>
    %39 = math.tanh %38 : vector<8x128xf32>
    %40 = arith.mulf %35, %39 : vector<8x128xf32>
    %41 = vector.extract_strided_slice %15 {offsets = [0, 0], sizes = [8, 128], strides = [1, 1]} : vector<8x512xf32> to vector<8x128xf32>
    %42 = arith.negf %41 : vector<8x128xf32>
    %43 = math.exp %42 : vector<8x128xf32>
    %cst_11 = arith.constant 1.000000e+00 : f32
    %44 = vector.broadcast %cst_11 : f32 to vector<8x128xf32>
    %45 = arith.addf %44, %43 : vector<8x128xf32>
    %46 = arith.divf %44, %45 : vector<8x128xf32>
    %47 = vector.extract_strided_slice %15 {offsets = [0, 128], sizes = [8, 128], strides = [1, 1]} : vector<8x512xf32> to vector<8x128xf32>
    %48 = arith.negf %47 : vector<8x128xf32>
    %49 = math.exp %48 : vector<8x128xf32>
    %cst_12 = arith.constant 1.000000e+00 : f32
    %50 = vector.broadcast %cst_12 : f32 to vector<8x128xf32>
    %51 = arith.addf %50, %49 : vector<8x128xf32>
    %52 = arith.divf %50, %51 : vector<8x128xf32>
    %53 = vector.extract_strided_slice %15 {offsets = [0, 256], sizes = [8, 128], strides = [1, 1]} : vector<8x512xf32> to vector<8x128xf32>
    %54 = math.tanh %53 : vector<8x128xf32>
    %55 = vector.extract_strided_slice %15 {offsets = [0, 384], sizes = [8, 128], strides = [1, 1]} : vector<8x512xf32> to vector<8x128xf32>
    %56 = arith.negf %55 : vector<8x128xf32>
    %57 = math.exp %56 : vector<8x128xf32>
    %cst_13 = arith.constant 1.000000e+00 : f32
    %58 = vector.broadcast %cst_13 : f32 to vector<8x128xf32>
    %59 = arith.addf %58, %57 : vector<8x128xf32>
    %60 = arith.divf %58, %59 : vector<8x128xf32>
    %61 = arith.mulf %52, %2 : vector<8x128xf32>
    %62 = arith.mulf %46, %54 : vector<8x128xf32>
    %63 = arith.addf %61, %62 : vector<8x128xf32>
    %64 = math.tanh %63 : vector<8x128xf32>
    %65 = arith.mulf %60, %64 : vector<8x128xf32>
    %66 = arith.index_cast %c0_i32 : i32 to index
    %c0_14 = arith.constant 0 : index
    %c0_15 = arith.constant 0 : index
    %67 = vector.load %arg3[%66, %c0_14, %c0_15] : memref<2x8x256xf32, #tpu.memory_space<vmem>>, vector<1x8x128xf32>
    %68 = vector.shape_cast %67 : vector<1x8x128xf32> to vector<8x128xf32>
    %69 = vector.shape_cast %40 : vector<8x128xf32> to vector<1x8x128xf32>
    tpu.vector_store %arg3[%66, %c0_14, %c0_15], %69 {strides = array<i32>} : memref<2x8x256xf32, #tpu.memory_space<vmem>>, vector<1x8x128xf32>,
    %70 = arith.index_cast %3 : i32 to index
    %c0_16 = arith.constant 0 : index
    %c128 = arith.constant 128 : index
    %71 = vector.load %arg3[%70, %c0_16, %c128] : memref<2x8x256xf32, #tpu.memory_space<vmem>>, vector<1x8x128xf32>
    %72 = vector.shape_cast %71 : vector<1x8x128xf32> to vector<8x128xf32>
    %73 = vector.shape_cast %65 : vector<8x128xf32> to vector<1x8x128xf32>
    tpu.vector_store %arg3[%70, %c0_16, %c128], %73 {strides = array<i32>} : memref<2x8x256xf32, #tpu.memory_space<vmem>>, vector<1x8x128xf32>,
    %c1_i32_17 = arith.constant 1 : i32
    %c1_i32_18 = arith.constant 1 : i32
    %74 = arith.subi %c1_i32_18, %c1_i32_17 : i32
    %75 = arith.index_cast %c1_i32_17 : i32 to index
    %c0_19 = arith.constant 0 : index
    %c0_20 = arith.constant 0 : index
    %76 = vector.load %arg0[%75, %c0_19, %c0_20] : memref<2x8x1024xf32, #tpu.memory_space<vmem>>, vector<1x8x512xf32>
    %77 = vector.shape_cast %76 : vector<1x8x512xf32> to vector<8x512xf32>
    %78 = arith.truncf %40 : vector<8x128xf32> to vector<8x128xbf16>
    %cst_21 = arith.constant dense<0.000000e+00> : vector<8x512xf32>
    %79 = tpu.matmul %78, %0, %cst_21 {dimension_numbers = #tpu.dot_dimension_numbers<[1], [0], [0], [1], [0, 0, 1, 1], [], []>} : vector<8x128xbf16>, vector<128x512xbf16>, vector<8x512xf32> -> vector<8x512xf32>
    %80 = arith.addf %77, %79 : vector<8x512xf32>
    %81 = arith.index_cast %74 : i32 to index
    %c0_22 = arith.constant 0 : index
    %c512_23 = arith.constant 512 : index
    %82 = vector.load %arg0[%81, %c0_22, %c512_23] : memref<2x8x1024xf32, #tpu.memory_space<vmem>>, vector<1x8x512xf32>
    %83 = vector.shape_cast %82 : vector<1x8x512xf32> to vector<8x512xf32>
    %84 = arith.truncf %65 : vector<8x128xf32> to vector<8x128xbf16>
    %cst_24 = arith.constant dense<0.000000e+00> : vector<8x512xf32>
    %85 = tpu.matmul %84, %1, %cst_24 {dimension_numbers = #tpu.dot_dimension_numbers<[1], [0], [0], [1], [0, 0, 1, 1], [], []>} : vector<8x128xbf16>, vector<128x512xbf16>, vector<8x512xf32> -> vector<8x512xf32>
    %86 = arith.addf %83, %85 : vector<8x512xf32>
    %87 = vector.extract_strided_slice %80 {offsets = [0, 0], sizes = [8, 128], strides = [1, 1]} : vector<8x512xf32> to vector<8x128xf32>
    %88 = arith.negf %87 : vector<8x128xf32>
    %89 = math.exp %88 : vector<8x128xf32>
    %cst_25 = arith.constant 1.000000e+00 : f32
    %90 = vector.broadcast %cst_25 : f32 to vector<8x128xf32>
    %91 = arith.addf %90, %89 : vector<8x128xf32>
    %92 = arith.divf %90, %91 : vector<8x128xf32>
    %93 = vector.extract_strided_slice %80 {offsets = [0, 128], sizes = [8, 128], strides = [1, 1]} : vector<8x512xf32> to vector<8x128xf32>
    %94 = arith.negf %93 : vector<8x128xf32>
    %95 = math.exp %94 : vector<8x128xf32>
    %cst_26 = arith.constant 1.000000e+00 : f32
    %96 = vector.broadcast %cst_26 : f32 to vector<8x128xf32>
    %97 = arith.addf %96, %95 : vector<8x128xf32>
    %98 = arith.divf %96, %97 : vector<8x128xf32>
    %99 = vector.extract_strided_slice %80 {offsets = [0, 256], sizes = [8, 128], strides = [1, 1]} : vector<8x512xf32> to vector<8x128xf32>
    %100 = math.tanh %99 : vector<8x128xf32>
    %101 = vector.extract_strided_slice %80 {offsets = [0, 384], sizes = [8, 128], strides = [1, 1]} : vector<8x512xf32> to vector<8x128xf32>
    %102 = arith.negf %101 : vector<8x128xf32>
    %103 = math.exp %102 : vector<8x128xf32>
    %cst_27 = arith.constant 1.000000e+00 : f32
    %104 = vector.broadcast %cst_27 : f32 to vector<8x128xf32>
    %105 = arith.addf %104, %103 : vector<8x128xf32>
    %106 = arith.divf %104, %105 : vector<8x128xf32>
    %107 = arith.mulf %98, %38 : vector<8x128xf32>
    %108 = arith.mulf %92, %100 : vector<8x128xf32>
    %109 = arith.addf %107, %108 : vector<8x128xf32>
    %110 = math.tanh %109 : vector<8x128xf32>
    %111 = arith.mulf %106, %110 : vector<8x128xf32>
    %112 = vector.extract_strided_slice %86 {offsets = [0, 0], sizes = [8, 128], strides = [1, 1]} : vector<8x512xf32> to vector<8x128xf32>
    %113 = arith.negf %112 : vector<8x128xf32>
    %114 = math.exp %113 : vector<8x128xf32>
    %cst_28 = arith.constant 1.000000e+00 : f32
    %115 = vector.broadcast %cst_28 : f32 to vector<8x128xf32>
    %116 = arith.addf %115, %114 : vector<8x128xf32>
    %117 = arith.divf %115, %116 : vector<8x128xf32>
    %118 = vector.extract_strided_slice %86 {offsets = [0, 128], sizes = [8, 128], strides = [1, 1]} : vector<8x512xf32> to vector<8x128xf32>
    %119 = arith.negf %118 : vector<8x128xf32>
    %120 = math.exp %119 : vector<8x128xf32>
    %cst_29 = arith.constant 1.000000e+00 : f32
    %121 = vector.broadcast %cst_29 : f32 to vector<8x128xf32>
    %122 = arith.addf %121, %120 : vector<8x128xf32>
    %123 = arith.divf %121, %122 : vector<8x128xf32>
    %124 = vector.extract_strided_slice %86 {offsets = [0, 256], sizes = [8, 128], strides = [1, 1]} : vector<8x512xf32> to vector<8x128xf32>
    %125 = math.tanh %124 : vector<8x128xf32>
    %126 = vector.extract_strided_slice %86 {offsets = [0, 384], sizes = [8, 128], strides = [1, 1]} : vector<8x512xf32> to vector<8x128xf32>
    %127 = arith.negf %126 : vector<8x128xf32>
    %128 = math.exp %127 : vector<8x128xf32>
    %cst_30 = arith.constant 1.000000e+00 : f32
    %129 = vector.broadcast %cst_30 : f32 to vector<8x128xf32>
    %130 = arith.addf %129, %128 : vector<8x128xf32>
    %131 = arith.divf %129, %130 : vector<8x128xf32>
    %132 = arith.mulf %123, %63 : vector<8x128xf32>
    %133 = arith.mulf %117, %125 : vector<8x128xf32>
    %134 = arith.addf %132, %133 : vector<8x128xf32>
    %135 = math.tanh %134 : vector<8x128xf32>
    %136 = arith.mulf %131, %135 : vector<8x128xf32>
    %137 = arith.index_cast %c1_i32_17 : i32 to index
    %c0_31 = arith.constant 0 : index
    %c0_32 = arith.constant 0 : index
    %138 = vector.load %arg3[%137, %c0_31, %c0_32] : memref<2x8x256xf32, #tpu.memory_space<vmem>>, vector<1x8x128xf32>
    %139 = vector.shape_cast %138 : vector<1x8x128xf32> to vector<8x128xf32>
    %140 = vector.shape_cast %111 : vector<8x128xf32> to vector<1x8x128xf32>
    tpu.vector_store %arg3[%137, %c0_31, %c0_32], %140 {strides = array<i32>} : memref<2x8x256xf32, #tpu.memory_space<vmem>>, vector<1x8x128xf32>,
    %141 = arith.index_cast %74 : i32 to index
    %c0_33 = arith.constant 0 : index
    %c128_34 = arith.constant 128 : index
    %142 = vector.load %arg3[%141, %c0_33, %c128_34] : memref<2x8x256xf32, #tpu.memory_space<vmem>>, vector<1x8x128xf32>
    %143 = vector.shape_cast %142 : vector<1x8x128xf32> to vector<8x128xf32>
    %144 = vector.shape_cast %136 : vector<8x128xf32> to vector<1x8x128xf32>
    tpu.vector_store %arg3[%141, %c0_33, %c128_34], %144 {strides = array<i32>} : memref<2x8x256xf32, #tpu.memory_space<vmem>>, vector<1x8x128xf32>,
    %c2_i32 = arith.constant 2 : i32
    return
  }
}

module attributes {stable_mosaic.version = 11 : i64} {
  func.func @_sum_halves_linear_kernel(%arg0: i32, %arg1: memref<16x256xf32, #tpu.memory_space<vmem>>, %arg2: memref<128x1024xbf16, #tpu.memory_space<vmem>>, %arg3: memref<1x1024xf32, #tpu.memory_space<vmem>>, %arg4: memref<16x1024xf32, #tpu.memory_space<vmem>>) attributes {dimension_semantics = [#tpu.dimension_semantics<parallel>], iteration_bounds = array<i64: 1>, scalar_prefetch = 0 : i64, scratch_operands = 0 : i64, tpu.core_type = #tpu.core_type<tc>, window_params = [{transform_indices = @transform_0, window_bounds = array<i64: 16, 256>}, {pipeline_mode = #tpu.pipeline_mode<synchronous>, transform_indices = @transform_1, window_bounds = array<i64: 128, 1024>}, {pipeline_mode = #tpu.pipeline_mode<synchronous>, transform_indices = @transform_2, window_bounds = array<i64: 1, 1024>}, {transform_indices = @transform_3, window_bounds = array<i64: 16, 1024>}]} {
    %c0 = arith.constant 0 : index
    %c0_0 = arith.constant 0 : index
    %0 = vector.load %arg1[%c0, %c0_0] : memref<16x256xf32, #tpu.memory_space<vmem>>, vector<16x128xf32>
    %c0_1 = arith.constant 0 : index
    %c128 = arith.constant 128 : index
    %1 = vector.load %arg1[%c0_1, %c128] : memref<16x256xf32, #tpu.memory_space<vmem>>, vector<16x128xf32>
    %2 = arith.addf %0, %1 : vector<16x128xf32>
    %3 = arith.truncf %2 : vector<16x128xf32> to vector<16x128xbf16>
    %c0_2 = arith.constant 0 : index
    %c0_3 = arith.constant 0 : index
    %4 = vector.load %arg2[%c0_2, %c0_3] : memref<128x1024xbf16, #tpu.memory_space<vmem>>, vector<128x1024xbf16>
    %cst = arith.constant dense<0.000000e+00> : vector<16x1024xf32>
    %5 = tpu.matmul %3, %4, %cst {dimension_numbers = #tpu.dot_dimension_numbers<[1], [0], [0], [1], [0, 0, 1, 1], [], []>} : vector<16x128xbf16>, vector<128x1024xbf16>, vector<16x1024xf32> -> vector<16x1024xf32>
    %c0_4 = arith.constant 0 : index
    %c0_5 = arith.constant 0 : index
    %6 = vector.load %arg3[%c0_4, %c0_5] : memref<1x1024xf32, #tpu.memory_space<vmem>>, vector<1x1024xf32>
    %7 = vector.broadcast %6 : vector<1x1024xf32> to vector<16x1024xf32>
    %8 = arith.addf %5, %7 : vector<16x1024xf32>
    %c0_6 = arith.constant 0 : index
    %c0_7 = arith.constant 0 : index
    %9 = vector.load %arg4[%c0_6, %c0_7] : memref<16x1024xf32, #tpu.memory_space<vmem>>, vector<16x1024xf32>
    tpu.vector_store %arg4[%c0_6, %c0_7], %8 {strides = array<i32>} : memref<16x1024xf32, #tpu.memory_space<vmem>>, vector<16x1024xf32>,
    return
  }
  func.func @transform_0(%arg0: i32) -> (i32, i32) {
    %c0_i32 = arith.constant 0 : i32
    %c0_i32_0 = arith.constant 0 : i32
    return %arg0, %c0_i32 : i32, i32
  }
  func.func @transform_1(%arg0: i32) -> (i32, i32) {
    %c0_i32 = arith.constant 0 : i32
    %c0_i32_0 = arith.constant 0 : i32
    %c0_i32_1 = arith.constant 0 : i32
    return %c0_i32, %c0_i32_0 : i32, i32
  }
  func.func @transform_2(%arg0: i32) -> (i32, i32) {
    %c0_i32 = arith.constant 0 : i32
    %c0_i32_0 = arith.constant 0 : i32
    %c0_i32_1 = arith.constant 0 : i32
    return %c0_i32, %c0_i32_0 : i32, i32
  }
  func.func @transform_3(%arg0: i32) -> (i32, i32) {
    %c0_i32 = arith.constant 0 : i32
    %c0_i32_0 = arith.constant 0 : i32
    return %arg0, %c0_i32 : i32, i32
  }
}

module attributes {stable_mosaic.version = 11 : i64} {
  func.func @_linear_kernel(%arg0: i32, %arg1: memref<16x256xf32, #tpu.memory_space<vmem>>, %arg2: memref<256x128xbf16, #tpu.memory_space<vmem>>, %arg3: memref<1x128xf32, #tpu.memory_space<vmem>>, %arg4: memref<16x128xf32, #tpu.memory_space<vmem>>) attributes {dimension_semantics = [#tpu.dimension_semantics<parallel>], iteration_bounds = array<i64: 1>, scalar_prefetch = 0 : i64, scratch_operands = 0 : i64, tpu.core_type = #tpu.core_type<tc>, window_params = [{transform_indices = @transform_0, window_bounds = array<i64: 16, 256>}, {pipeline_mode = #tpu.pipeline_mode<synchronous>, transform_indices = @transform_1, window_bounds = array<i64: 256, 128>}, {pipeline_mode = #tpu.pipeline_mode<synchronous>, transform_indices = @transform_2, window_bounds = array<i64: 1, 128>}, {transform_indices = @transform_3, window_bounds = array<i64: 16, 128>}]} {
    %c0 = arith.constant 0 : index
    %c0_0 = arith.constant 0 : index
    %0 = vector.load %arg1[%c0, %c0_0] : memref<16x256xf32, #tpu.memory_space<vmem>>, vector<16x256xf32>
    %1 = arith.truncf %0 : vector<16x256xf32> to vector<16x256xbf16>
    %c0_1 = arith.constant 0 : index
    %c0_2 = arith.constant 0 : index
    %2 = vector.load %arg2[%c0_1, %c0_2] : memref<256x128xbf16, #tpu.memory_space<vmem>>, vector<256x128xbf16>
    %cst = arith.constant dense<0.000000e+00> : vector<16x128xf32>
    %3 = tpu.matmul %1, %2, %cst {dimension_numbers = #tpu.dot_dimension_numbers<[1], [0], [0], [1], [0, 0, 1, 1], [], []>} : vector<16x256xbf16>, vector<256x128xbf16>, vector<16x128xf32> -> vector<16x128xf32>
    %c0_3 = arith.constant 0 : index
    %c0_4 = arith.constant 0 : index
    %4 = vector.load %arg3[%c0_3, %c0_4] : memref<1x128xf32, #tpu.memory_space<vmem>>, vector<1x128xf32>
    %5 = vector.broadcast %4 : vector<1x128xf32> to vector<16x128xf32>
    %6 = arith.addf %3, %5 : vector<16x128xf32>
    %c0_5 = arith.constant 0 : index
    %c0_6 = arith.constant 0 : index
    %7 = vector.load %arg4[%c0_5, %c0_6] : memref<16x128xf32, #tpu.memory_space<vmem>>, vector<16x128xf32>
    tpu.vector_store %arg4[%c0_5, %c0_6], %6 {strides = array<i32>} : memref<16x128xf32, #tpu.memory_space<vmem>>, vector<16x128xf32>,
    return
  }
  func.func @transform_0(%arg0: i32) -> (i32, i32) {
    %c0_i32 = arith.constant 0 : i32
    %c0_i32_0 = arith.constant 0 : i32
    return %arg0, %c0_i32 : i32, i32
  }
  func.func @transform_1(%arg0: i32) -> (i32, i32) {
    %c0_i32 = arith.constant 0 : i32
    %c0_i32_0 = arith.constant 0 : i32
    %c0_i32_1 = arith.constant 0 : i32
    return %c0_i32, %c0_i32_0 : i32, i32
  }
  func.func @transform_2(%arg0: i32) -> (i32, i32) {
    %c0_i32 = arith.constant 0 : i32
    %c0_i32_0 = arith.constant 0 : i32
    %c0_i32_1 = arith.constant 0 : i32
    return %c0_i32, %c0_i32_0 : i32, i32
  }
  func.func @transform_3(%arg0: i32) -> (i32, i32) {
    %c0_i32 = arith.constant 0 : i32
    %c0_i32_0 = arith.constant 0 : i32
    return %arg0, %c0_i32 : i32, i32
  }
}

</mosaic_0001>

<llo_original>
// kernel: crnn_forward.8
$region0: #{crnn_forward.8}
  #allocation0 [shape = 'u32[]', space=smem, size = 0x4, offset = 0x4, fixed_abs, tag = 'smem constant byte address 0x4 - core index']
  #allocation1 [shape = 'u32[144,128]{1,0:T(1,128)}', space=vmem, size = 0x12000, scoped, tag = 'internal scratch']
  #allocation2 [shape = 'f32[16,256]{1,0:T(8,128)}', space=vmem, size = 0x4000, scoped, tag = 'scratch operand']
  %s0 = inlined_call_operand.vmem [shape: f32[2,64,128], index: 0, kind: input, shape index: {}]
  %s1 = inlined_call_operand.vmem [shape: f32[1,1,128], index: 1, kind: input, shape index: {}]
  %s2 = inlined_call_operand.vmem [shape: f32[1,1,128], index: 2, kind: input, shape index: {}]
  %s3 = inlined_call_operand.vmem [shape: bf16[8,128,256], index: 3, kind: input, shape index: {}]
  %s4 = inlined_call_operand.vmem [shape: f32[1,256], index: 4, kind: input, shape index: {}]
  %s5 = inlined_call_operand.vmem [shape: f32[2,8,256], index: 5, kind: output, shape index: {}]
  %s6 = sld [smem:[#allocation0]]
  $region99: #{crnn_forward.8} parent=0
    _
  %s8 = ssub.s32 1, %s6
  %s9 = scalar_select 0, %s8, %s6
  $region1: #{crnn_forward.8} parent=0
    #allocation3 [shape = 'u8[16384]{0}', space=vmem, size = 0x4000, scoped, tag = 'input window, operand 0']
    loop: start=0, step=1, limit=10
    $region2: #{crnn_forward.8} parent=1 // loop_pre_header
      _
    $region3: #{crnn_forward.8} parent=1 // loop_header
      %s11 = sphi 0, %s15
      %p12 = scmp.ge.s32.totalorder %s11, 10
      %s18 = sphi 0, %s30
      %s19 = sphi 0, %s26
      %s20 = sphi 0, %s18
      %s21 = sphi 0, %s19
      %s22 = sphi 0, %s20
      %s23 = sphi 0, %s21
      %s35 = sphi 0, %s37
      %s38 = sphi 0, %s35
      %s39 = sphi 0, %s38
      %s55 = sphi 0, %s39
      %s59 = sphi 0, %s59
      %s61 = sphi 0, %s59
      %s62 = sphi 0, %s61
      %s76 = sphi 0, %s62
      %s80 = sphi 0, %s80
      %s82 = sphi 0, %s80
      %s83 = sphi 0, %s82
      %s97 = sphi 0, %s83
      %s103 = sphi 0, %s105
      %s106 = sphi 0, %s103
      %s107 = sphi 0, %s106
      %s123 = sphi 0, %s107
      %s127 = sphi 0, %s127
      %s129 = sphi 0, %s127
      %s130 = sphi 0, %s129
      %s144 = sphi 0, %s130
      %s150 = sphi 0, %s152
      %s153 = sphi 0, %s150
      %s154 = sphi 0, %s153
      %s170 = sphi 0, %s154
    $region4: #{crnn_forward.8} parent=1 // loop_header_branch
      %14 = sbr.rel (%p12) target = $region8
    $region5: #{crnn_forward.8} parent=1 // loop_body
      %s16 = ssub.s32 %s11, 1
      %s17 = ssub.s32 %s11, 2
      %s24 = sadd.s32 1, %s19
      %p25 = scmp.ge.s32.totalorder %s24, 8
      %s26 = scalar_select %p25, 0, %s24
      %s27 = sadd.s32 1, %s18
      %s28 = scalar_select %p25, %s27, %s18
      %p29 = scmp.ge.s32.totalorder %s28, 1
      %s30 = scalar_select %p29, 0, %s28
      %s31 = ssub.s32 %s18, %s30
      %s32 = ssub.s32 %s19, %s26
      %s33 = sor.u32 %s31, %s32
      %p34 = scmp.eq.s32.totalorder %s33, 0
      %s36 = sadd.s32 %s35, 1
      %s37 = scalar_select %p34, %s35, %s36
      %p40 = pneg %p34
      %p41 = scmp.eq.s32.totalorder %s11, 7
      %p42 = por %p40, %p41
      %p43 = scmp.ne.s32.totalorder %s35, %s38
      %p44 = scmp.eq.s32.totalorder %s11, 0
      %p45 = por %p43, %p44
      %p46 = scmp.ne.s32.totalorder %s35, %s38
      %p47 = scmp.eq.s32.totalorder %s16, 7
      %p48 = por %p46, %p47
      %p49 = scmp.ne.s32.totalorder %s38, %s39
      %p50 = scmp.eq.s32.totalorder %s16, 0
      %p51 = por %p49, %p50
      %p52 = scmp.ne.s32.totalorder %s38, %s39
      %p53 = scmp.eq.s32.totalorder %s17, 7
      %p54 = por %p52, %p53
      %p56 = scmp.ne.s32.totalorder %s39, %s55
      %p57 = scmp.eq.s32.totalorder %s17, 0
      %p58 = por %p56, %p57
      %s60 = sadd.s32 %s59, 1
      %p63 = scmp.eq.s32.totalorder %s11, 7
      %p64 = scmp.ne.s32.totalorder %s59, %s61
      %p65 = scmp.eq.s32.totalorder %s11, 0
      %p66 = por %p64, %p65
      %p67 = scmp.ne.s32.totalorder %s59, %s61
      %p68 = scmp.eq.s32.totalorder %s16, 7
      %p69 = por %p67, %p68
      %p70 = scmp.ne.s32.totalorder %s61, %s62
      %p71 = scmp.eq.s32.totalorder %s16, 0
      %p72 = por %p70, %p71
      %p73 = scmp.ne.s32.totalorder %s61, %s62
      %p74 = scmp.eq.s32.totalorder %s17, 7
      %p75 = por %p73, %p74
      %p77 = scmp.ne.s32.totalorder %s62, %s76
      %p78 = scmp.eq.s32.totalorder %s17, 0
      %p79 = por %p77, %p78
      %s81 = sadd.s32 %s80, 1
      %p84 = scmp.eq.s32.totalorder %s11, 7
      %p85 = scmp.ne.s32.totalorder %s80, %s82
      %p86 = scmp.eq.s32.totalorder %s11, 0
      %p87 = por %p85, %p86
      %p88 = scmp.ne.s32.totalorder %s80, %s82
      %p89 = scmp.eq.s32.totalorder %s16, 7
      %p90 = por %p88, %p89
      %p91 = scmp.ne.s32.totalorder %s82, %s83
      %p92 = scmp.eq.s32.totalorder %s16, 0
      %p93 = por %p91, %p92
      %p94 = scmp.ne.s32.totalorder %s82, %s83
      %p95 = scmp.eq.s32.totalorder %s17, 7
      %p96 = por %p94, %p95
      %p98 = scmp.ne.s32.totalorder %s83, %s97
      %p99 = scmp.eq.s32.totalorder %s17, 0
      %p100 = por %p98, %p99
      %s101 = ssub.s32 %s19, %s26
      %p102 = scmp.eq.s32.totalorder %s101, 0
      %s104 = sadd.s32 %s103, 1
      %s105 = scalar_select %p102, %s103, %s104
      %p108 = pneg %p102
      %p109 = scmp.eq.s32.totalorder %s11, 7
      %p110 = por %p108, %p109
      %p111 = scmp.ne.s32.totalorder %s103, %s106
      %p112 = scmp.eq.s32.totalorder %s11, 0
      %p113 = por %p111, %p112
      %p114 = scmp.ne.s32.totalorder %s103, %s106
      %p115 = scmp.eq.s32.totalorder %s16, 7
      %p116 = por %p114, %p115
      %p117 = scmp.ne.s32.totalorder %s106, %s107
      %p118 = scmp.eq.s32.totalorder %s16, 0
      %p119 = por %p117, %p118
      %p120 = scmp.ne.s32.totalorder %s106, %s107
      %p121 = scmp.eq.s32.totalorder %s17, 7
      %p122 = por %p120, %p121
      %p124 = scmp.ne.s32.totalorder %s107, %s123
      %p125 = scmp.eq.s32.totalorder %s17, 0
      %p126 = por %p124, %p125
      %s128 = sadd.s32 %s127, 1
      %p131 = scmp.eq.s32.totalorder %s11, 7
      %p132 = scmp.ne.s32.totalorder %s127, %s129
      %p133 = scmp.eq.s32.totalorder %s11, 0
      %p134 = por %p132, %p133
      %p135 = scmp.ne.s32.totalorder %s127, %s129
      %p136 = scmp.eq.s32.totalorder %s16, 7
      %p137 = por %p135, %p136
      %p138 = scmp.ne.s32.totalorder %s129, %s130
      %p139 = scmp.eq.s32.totalorder %s16, 0
      %p140 = por %p138, %p139
      %p141 = scmp.ne.s32.totalorder %s129, %s130
      %p142 = scmp.eq.s32.totalorder %s17, 7
      %p143 = por %p141, %p142
      %p145 = scmp.ne.s32.totalorder %s130, %s144
      %p146 = scmp.eq.s32.totalorder %s17, 0
      %p147 = por %p145, %p146
      %s148 = ssub.s32 %s18, %s30
      %p149 = scmp.eq.s32.totalorder %s148, 0
      %s151 = sadd.s32 %s150, 1
      %s152 = scalar_select %p149, %s150, %s151
      %p155 = pneg %p149
      %p156 = scmp.eq.s32.totalorder %s11, 7
      %p157 = por %p155, %p156
      %p158 = scmp.ne.s32.totalorder %s150, %s153
      %p159 = scmp.eq.s32.totalorder %s11, 0
      %p160 = por %p158, %p159
      %p161 = scmp.ne.s32.totalorder %s150, %s153
      %p162 = scmp.eq.s32.totalorder %s16, 7
      %p163 = por %p161, %p162
      %p164 = scmp.ne.s32.totalorder %s153, %s154
      %p165 = scmp.eq.s32.totalorder %s16, 0
      %p166 = por %p164, %p165
      %p167 = scmp.ne.s32.totalorder %s153, %s154
      %p168 = scmp.eq.s32.totalorder %s17, 7
      %p169 = por %p167, %p168
      %p171 = scmp.ne.s32.totalorder %s154, %s170
      %p172 = scmp.eq.s32.totalorder %s17, 0
      %p173 = por %p171, %p172
      %p174 = scmp.le.s32.totalorder 1, %s11
      %p175 = scmp.lt.s32.totalorder %s11, 9
      %p176 = pnand %p174, %p175
      %p177 = pneg %p176
      // Predicated region
      $region9: #{crnn_forward.8} parent=5 // pred_check
        _
      $region10: #{crnn_forward.8} parent=5 // pred_check_branch
        %179 = sbr.rel (%p176) target = $region12
      $region11: #{crnn_forward.8} parent=5 // pred_region
        %s180 = ssub.s32 %s11, 1
        // Predicated region
        $region13: #{crnn_forward.8} parent=11 // pred_check
          %p181 = pneg %p72
        $region14: #{crnn_forward.8} parent=11 // pred_check_branch
          %183 = sbr.rel (%p181) target = $region16
        $region15: #{crnn_forward.8} parent=11 // pred_region
          _
        $region16: #{crnn_forward.8} parent=11 // pred_fallthru
          _
        // Predicated region
        $region17: #{crnn_forward.8} parent=11 // pred_check
          %p184 = pneg %p93
        $region18: #{crnn_forward.8} parent=11 // pred_check_branch
          %186 = sbr.rel (%p184) target = $region20
        $region19: #{crnn_forward.8} parent=11 // pred_region
          _
        $region20: #{crnn_forward.8} parent=11 // pred_fallthru
          _
        // Predicated region
        $region21: #{crnn_forward.8} parent=11 // pred_check
          %p187 = pneg %p140
        $region22: #{crnn_forward.8} parent=11 // pred_check_branch
          %189 = sbr.rel (%p187) target = $region24
        $region23: #{crnn_forward.8} parent=11 // pred_region
          _
        $region24: #{crnn_forward.8} parent=11 // pred_fallthru
          _
      $region12: #{crnn_forward.8} parent=5 // pred_fallthru
        _
      %p190 = scmp.lt.s32.totalorder %s11, 8
      // Predicated region
      $region25: #{crnn_forward.8} parent=5 // pred_check
        %p191 = pneg %p190
      $region26: #{crnn_forward.8} parent=5 // pred_check_branch
        %193 = sbr.rel (%p191) target = $region28
      $region27: #{crnn_forward.8} parent=5 // pred_region
        // Predicated region
        $region29: #{crnn_forward.8} parent=27 // pred_check
          %p194 = pneg %p45
        $region30: #{crnn_forward.8} parent=27 // pred_check_branch
          %196 = sbr.rel (%p194) target = $region32
        $region31: #{crnn_forward.8} parent=27 // pred_region
          %s197 = sand.u32 %s35, 1
          %s198 = sand.u32 %s35, 1
          %s199 = smul.addr %s198, 16
          %s200 = scalar_lea.vmem [#allocation3], %s199
          %s201 = smul.u32 2, %s18
          %s202 = smul.addr %s201, 8
          %s203 = sadd.s32 %s19, %s202
          %s204 = smul.addr %s203, 8
          %s205 = scalar_lea.vmem %s0, %s204
          // Predicated region
          $region33: #{crnn_forward.8} parent=31 // pred_check
            _
          $region34: #{crnn_forward.8} parent=31 // pred_check_branch
            %207 = sbr.rel (0) target = $region36
          $region35: #{crnn_forward.8} parent=31 // pred_region
            // Predicated region
            $region37: #{crnn_forward.8} parent=35 // pred_check
              _
            $region38: #{crnn_forward.8} parent=35 // pred_check_branch
              %209 = sbr.rel (0) target = $region40
            $region39: #{crnn_forward.8} parent=35 // pred_region
              // Predicated region
              $region52: #{crnn_forward.8} parent=39 // pred_check
                _
              $region53: #{crnn_forward.8} parent=39 // pred_check_branch
                %226 = sbr.rel (0) target = $region55
              $region54: #{crnn_forward.8} parent=39 // pred_region
                loop: start=0, step=1, limit=1
                $region56: #{crnn_forward.8} parent=54 // loop_pre_header
                  _
                $region57: #{crnn_forward.8} parent=54 // loop_header
                  %s228 = sphi 0, %s232
                  %p229 = scmp.ge.s32.totalorder %s228, 1
                  %s233 = sphi %s205, %s205
                  %s234 = sphi %s200, %s200
                $region58: #{crnn_forward.8} parent=54 // loop_header_branch
                  %231 = sbr.rel (%p229) target = $region62
                $region59: #{crnn_forward.8} parent=54 // loop_body
                  %v235 = vld [vmem:[%s233] sm:$0xff]
                  %236 = vst [vmem:[%s234] sm:$0xff] %v235
                  %v237 = vld [vmem:[%s233 + $0x40] sm:$0xff]
                  %238 = vst [vmem:[%s234 + $0x8] sm:$0xff] %v237
                $region60: #{crnn_forward.8} parent=54 // loop_footer
                  %s232 = sadd.s32 1, %s228
                $region61: #{crnn_forward.8} parent=54 // loop_footer_branch
                  %227 = sbr.rel target = $region57
                $region62: #{crnn_forward.8} parent=54 // loop_exit
                  _
              $region55: #{crnn_forward.8} parent=39 // pred_fallthru
                _
              // Predicated region
              $region63: #{crnn_forward.8} parent=39 // pred_check
                _
              $region64: #{crnn_forward.8} parent=39 // pred_check_branch
                %240 = sbr.rel target = $region66
              $region65: #{crnn_forward.8} parent=39 // pred_region
                _
              $region66: #{crnn_forward.8} parent=39 // pred_fallthru
                _
            $region40: #{crnn_forward.8} parent=35 // pred_fallthru
              _
            // Predicated region
            $region41: #{crnn_forward.8} parent=35 // pred_check
              _
            $region42: #{crnn_forward.8} parent=35 // pred_check_branch
              %211 = sbr.rel target = $region44
            $region43: #{crnn_forward.8} parent=35 // pred_region
              loop: start=0, step=1, limit=1
              $region45: #{crnn_forward.8} parent=43 // loop_pre_header
                _
              $region46: #{crnn_forward.8} parent=43 // loop_header
                %s214 = sphi 0, %s218
                %p215 = scmp.ge.s32.totalorder %s214, 1
                %s219 = sphi %s205, %s205
                %s220 = sphi %s200, %s200
              $region47: #{crnn_forward.8} parent=43 // loop_header_branch
                %217 = sbr.rel (%p215) target = $region51
              $region48: #{crnn_forward.8} parent=43 // loop_body
                %v221 = vld [vmem:[%s219] sm:$0xff]
                %222 = vst [vmem:[%s220] sm:$0xff] %v221
                %v223 = vld [vmem:[%s219 + $0x40] sm:$0xff]
                %224 = vst [vmem:[%s220 + $0x8] sm:$0xff] %v223
              $region49: #{crnn_forward.8} parent=43 // loop_footer
                %s218 = sadd.s32 1, %s214
              $region50: #{crnn_forward.8} parent=43 // loop_footer_branch
                %213 = sbr.rel target = $region46
              $region51: #{crnn_forward.8} parent=43 // loop_exit
                _
            $region44: #{crnn_forward.8} parent=35 // pred_fallthru
              _
          $region36: #{crnn_forward.8} parent=31 // pred_fallthru
            _
          %241 = vnop
        $region32: #{crnn_forward.8} parent=27 // pred_fallthru
          _
        // Predicated region
        $region67: #{crnn_forward.8} parent=27 // pred_check
          %p242 = pneg %p113
        $region68: #{crnn_forward.8} parent=27 // pred_check_branch
          %244 = sbr.rel (%p242) target = $region70
        $region69: #{crnn_forward.8} parent=27 // pred_region
          %p245 = scmp.lt.s32.totalorder %s19, 7
          %s246 = scalar_select %p245, %s19, 7
          %s247 = smul.addr %s246, 32
          %s248 = smul.addr %s247, 4
          %s249 = scalar_lea.vmem %s3, %s248
        $region70: #{crnn_forward.8} parent=27 // pred_fallthru
          _
      $region28: #{crnn_forward.8} parent=5 // pred_fallthru
        _
      %p250 = scmp.le.s32.totalorder 1, %s11
      %p251 = scmp.lt.s32.totalorder %s11, 9
      %p252 = pnand %p250, %p251
      %p253 = pneg %p252
      // Predicated region
      $region71: #{crnn_forward.8} parent=5 // pred_check
        _
      $region72: #{crnn_forward.8} parent=5 // pred_check_branch
        %255 = sbr.rel (%p252) target = $region74
      $region73: #{crnn_forward.8} parent=5 // pred_region
        %s256 = ssub.s32 %s11, 1
        %s257 = sand.u32 %s38, 1
        %s258 = sand.u32 %s38, 1
        %s259 = smul.addr %s258, 16
        %s260 = scalar_lea.vmem [#allocation3], %s259
        // Predicated region
        $region75: #{crnn_forward.8} parent=73 // pred_check
          %p261 = pneg %p51
        $region76: #{crnn_forward.8} parent=73 // pred_check_branch
          %263 = sbr.rel (%p261) target = $region78
        $region77: #{crnn_forward.8} parent=73 // pred_region
          _
        $region78: #{crnn_forward.8} parent=73 // pred_fallthru
          _
        %s264 = sand.u32 %s38, 1
        %s265 = sand.u32 %s38, 1
        %s266 = smul.addr %s265, 16
        %s267 = scalar_lea.vmem [#allocation3], %s266
        %p268 = pneg %p51
        %p269 = pneg %p48
        %p270 = pneg %p72
        %p271 = pneg %p69
        %p272 = pneg %p93
        %p273 = pneg %p90
        %p274 = scmp.lt.s32.totalorder %s21, 7
        %s275 = scalar_select %p274, %s21, 7
        %s276 = smul.addr %s275, 32
        %s277 = smul.addr %s276, 4
        %s278 = scalar_lea.vmem %s3, %s277
        %p279 = pneg %p119
        %p280 = pneg %p116
        %p281 = pneg %p140
        %p282 = pneg %p137
        %p283 = pneg %p166
        %p284 = pneg %p163
        %s285 = smul.u32 2, %s20
        %p286 = scmp.lt.s32.totalorder %s285, 1
        %s287 = scalar_select %p286, %s285, 1
        %s288 = smul.addr %s287, 2
        %s289 = smul.addr %s288, 8
        %s290 = scalar_lea.vmem %s5, %s289
        %s291 = smul.u32 2, %s20
        %p292 = scmp.lt.s32.totalorder %s21, 7
        %s293 = scalar_select %p292, %s21, 7
        %s294 = smul.addr %s293, 32
        %s295 = smul.addr %s294, 4
        %s296 = scalar_lea.vmem %s3, %s295
        %s297 = smul.u32 2, %s20
        %p298 = scmp.lt.s32.totalorder %s297, 1
        %s299 = scalar_select %p298, %s297, 1
        %s300 = smul.addr %s299, 2
        %s301 = smul.addr %s300, 8
        %s302 = scalar_lea.vmem %s5, %s301
        %s303 = smul.u32 2, %s20
        %v305 = vld [vmem:[%s260] sm:$0xff]
        %v306 = vld [vmem:[%s260 + $0x8] sm:$0xff]
        %v307 = vld [vmem:[%s1] sm:$0x1]
        %v309 = vlaneseq
        %v310 = vshrl.u32 %v309, 7
        %v311 = vsub.s32 0, %v310
        %v312 = vrot.slane %v307, %v311
        %v314 = vmul.f32 %v305, %v312
        %v315 = vmul.f32 %v306, %v312
        %v316 = vld [vmem:[%s2] sm:$0x1]
        %v318 = vlaneseq
        %v319 = vshrl.u32 %v318, 7
        %v320 = vsub.s32 0, %v319
        %v321 = vrot.slane %v316, %v320
        %v323 = vadd.f32 %v314, %v321
        %v324 = vadd.f32 %v315, %v321
        %v325 = vmax.f32 %v323, 0.0
        %v326 = vmax.f32 %v324, 0.0
        %v327 = vpack.c.bf16 %v326, %v325
        %p328 = scmp.eq.s32.totalorder %s21, 0
        // Predicated region
        $region79: #{crnn_forward.8} parent=73 // pred_check
          %p329 = pneg %p328
        $region80: #{crnn_forward.8} parent=73 // pred_check_branch
          %331 = sbr.rel (%p329) target = $region82
        $region81: #{crnn_forward.8} parent=73 // pred_region
          %332 = vst [vmem:[#allocation2] sm:$0xff] 0.0
          %333 = vst [vmem:[#allocation2 + $0x8] sm:$0xff] 0.0
          %334 = vst [vmem:[#allocation2 + $0x10] sm:$0xff] 0.0
          %335 = vst [vmem:[#allocation2 + $0x18] sm:$0xff] 0.0
        $region82: #{crnn_forward.8} parent=73 // pred_fallthru
          _
        %v336 = vld [vmem:[#allocation2] sm:$0xff]
        %v337 = vld [vmem:[#allocation2 + $0x8] sm:$0xff]
        %v338 = vld [vmem:[#allocation2 + $0x10] sm:$0xff]
        %v339 = vld [vmem:[#allocation2 + $0x18] sm:$0xff]
        %v340 = vld [vmem:[%s296] sm:$0xff]
        %v341 = vld [vmem:[%s296 + $0x8] sm:$0xff]
        %v342 = vld [vmem:[%s296 + $0x10] sm:$0xff]
        %v343 = vld [vmem:[%s296 + $0x18] sm:$0xff]
        %v344 = vld [vmem:[%s296 + $0x20] sm:$0xff]
        %v345 = vld [vmem:[%s296 + $0x28] sm:$0xff]
        %v346 = vld [vmem:[%s296 + $0x30] sm:$0xff]
        %v347 = vld [vmem:[%s296 + $0x38] sm:$0xff]
        %v348 = vld [vmem:[%s296 + $0x40] sm:$0xff]
        %v349 = vld [vmem:[%s296 + $0x48] sm:$0xff]
        %v350 = vld [vmem:[%s296 + $0x50] sm:$0xff]
        %v351 = vld [vmem:[%s296 + $0x58] sm:$0xff]
        %v352 = vld [vmem:[%s296 + $0x60] sm:$0xff]
        %v353 = vld [vmem:[%s296 + $0x68] sm:$0xff]
        %v354 = vld [vmem:[%s296 + $0x70] sm:$0xff]
        %v355 = vld [vmem:[%s296 + $0x78] sm:$0xff]
        %v372 = vunpack.c.l.b16 %v340
        %v373 = vunpack.c.h.b16 %v340
        %v374 = vunpack.c.l.b16 %v341
        %v375 = vunpack.c.h.b16 %v341
        %v376 = vunpack.c.l.b16 %v342
        %v377 = vunpack.c.h.b16 %v342
        %v378 = vunpack.c.l.b16 %v343
        %v379 = vunpack.c.h.b16 %v343
        %v380 = vunpack.c.l.b16 %v344
        %v381 = vunpack.c.h.b16 %v344
        %v382 = vunpack.c.l.b16 %v345
        %v383 = vunpack.c.h.b16 %v345
        %v384 = vunpack.c.l.b16 %v346
        %v385 = vunpack.c.h.b16 %v346
        %v386 = vunpack.c.l.b16 %v347
        %v387 = vunpack.c.h.b16 %v347
        %v388 = vunpack.c.l.b16 %v348
        %v389 = vunpack.c.h.b16 %v348
        %v390 = vunpack.c.l.b16 %v349
        %v391 = vunpack.c.h.b16 %v349
        %v392 = vunpack.c.l.b16 %v350
        %v393 = vunpack.c.h.b16 %v350
        %v394 = vunpack.c.l.b16 %v351
        %v395 = vunpack.c.h.b16 %v351
        %v396 = vunpack.c.l.b16 %v352
        %v397 = vunpack.c.h.b16 %v352
        %v398 = vunpack.c.l.b16 %v353
        %v399 = vunpack.c.h.b16 %v353
        %v400 = vunpack.c.l.b16 %v354
        %v401 = vunpack.c.h.b16 %v354
        %v402 = vunpack.c.l.b16 %v355
        %v403 = vunpack.c.h.b16 %v355
        %v404 = vpack.c.b16 %v374, %v372
        %v405 = vpack.c.b16 %v375, %v373
        %v406 = vpack.c.b16 %v378, %v376
        %v407 = vpack.c.b16 %v379, %v377
        %v408 = vpack.c.b16 %v382, %v380
        %v409 = vpack.c.b16 %v383, %v381
        %v410 = vpack.c.b16 %v386, %v384
        %v411 = vpack.c.b16 %v387, %v385
        %v412 = vpack.c.b16 %v390, %v388
        %v413 = vpack.c.b16 %v391, %v389
        %v414 = vpack.c.b16 %v394, %v392
        %v415 = vpack.c.b16 %v395, %v393
        %v416 = vpack.c.b16 %v398, %v396
        %v417 = vpack.c.b16 %v399, %v397
        %v418 = vpack.c.b16 %v402, %v400
        %v419 = vpack.c.b16 %v403, %v401
        %436 = vmatprep.subr.bf16.mxu0 %v405
        %437 = vmatpush1.bf16.msra.mxu0 %v404
        %438 = vmatprep.subr.bf16.mxu0 %v407
        %439 = vmatpush1.bf16.msra.mxu0 %v406
        %440 = vmatprep.subr.bf16.mxu0 %v409
        %441 = vmatpush1.bf16.msra.mxu0 %v408
        %442 = vmatprep.subr.bf16.mxu0 %v411
        %443 = vmatpush1.bf16.msra.mxu0 %v410
        %444 = vmatprep.subr.bf16.mxu0 %v413
        %445 = vmatpush1.bf16.msra.mxu0 %v412
        %446 = vmatprep.subr.bf16.mxu0 %v415
        %447 = vmatpush1.bf16.msra.mxu0 %v414
        %448 = vmatprep.subr.bf16.mxu0 %v417
        %449 = vmatpush1.bf16.msra.mxu0 %v416
        %450 = vmatprep.subr.bf16.mxu0 %v419
        %451 = vmatpush1.bf16.msra.mxu0 %v418
        %452 = vmatprep.subr.bf16.mxu0 0
        %453 = vmatpush1.bf16.msra.mxu0 0
        %454 = vmatprep.subr.bf16.mxu0 0
        %455 = vmatpush1.bf16.msra.mxu0 0
        %456 = vmatprep.subr.bf16.mxu0 0
        %457 = vmatpush1.bf16.msra.mxu0 0
        %458 = vmatprep.subr.bf16.mxu0 0
        %459 = vmatpush1.bf16.msra.mxu0 0
        %460 = vmatprep.subr.bf16.mxu0 0
        %461 = vmatpush1.bf16.msra.mxu0 0
        %462 = vmatprep.subr.bf16.mxu0 0
        %463 = vmatpush1.bf16.msra.mxu0 0
        %464 = vmatprep.subr.bf16.mxu0 0
        %465 = vmatpush1.bf16.msra.mxu0 0
        %466 = vmatprep.subr.bf16.mxu0 0
        %467 = vmatpush1.bf16.msra.mxu0 0
        %468 = vmatprep.mubr.bf16.mxu0 0
        %469 = vmatmul.mubr.bf16.gmra.mrb[0].mxu0 %v327
        %v470 = vpop.f32.mrb[0].mxu0
        %v471 = vadd.f32 0.0, %v470
        %v472 = vpop.f32.mrb[0].mxu0
        %v473 = vadd.f32 0.0, %v472
        %v474 = vpop.f32.mrb[0].mxu0
        %v475 = vadd.f32 0.0, %v474
        %v476 = vpop.f32.mrb[0].mxu0
        %v477 = vadd.f32 0.0, %v476
        %478 = vdwg.mxu0
        %v479 = vadd.f32 %v336, %v471
        %v480 = vadd.f32 %v337, %v473
        %v481 = vadd.f32 %v338, %v475
        %v482 = vadd.f32 %v339, %v477
        %483 = vst [vmem:[#allocation2] sm:$0xff] %v479
        %484 = vst [vmem:[#allocation2 + $0x8] sm:$0xff] %v480
        %485 = vst [vmem:[#allocation2 + $0x10] sm:$0xff] %v481
        %486 = vst [vmem:[#allocation2 + $0x18] sm:$0xff] %v482
        %p487 = scmp.eq.s32.totalorder %s21, 7
        // Predicated region
        $region83: #{crnn_forward.8} parent=73 // pred_check
          %p488 = pneg %p487
        $region84: #{crnn_forward.8} parent=73 // pred_check_branch
          %490 = sbr.rel (%p488) target = $region86
        $region85: #{crnn_forward.8} parent=73 // pred_region
          %v491 = vld [vmem:[#allocation2] sm:$0xff]
          %v492 = vld [vmem:[#allocation2 + $0x8] sm:$0xff]
          %v493 = vld [vmem:[#allocation2 + $0x10] sm:$0xff]
          %v494 = vld [vmem:[#allocation2 + $0x18] sm:$0xff]
          %v495 = vld [vmem:[%s4] sm:$0x3]
          %v497 = vlaneseq
          %v498 = vshrl.u32 %v497, 7
          %v499 = vsub.s32 0, %v498
          %v500 = vrot.slane %v495, %v499
          %v501 = vlaneseq
          %v502 = vshrl.u32 %v501, 7
          %v503 = vsub.s32 1, %v502
          %v504 = vrot.slane %v495, %v503
          %v507 = vadd.f32 %v491, %v500
          %v508 = vadd.f32 %v492, %v504
          %v509 = vadd.f32 %v493, %v500
          %v510 = vadd.f32 %v494, %v504
          %511 = vst [vmem:[%s302] sm:$0xff] %v507
          %512 = vst [vmem:[%s302 + $0x8] sm:$0xff] %v508
          %513 = vst [vmem:[%s302 + $0x10] sm:$0xff] %v509
          %514 = vst [vmem:[%s302 + $0x18] sm:$0xff] %v510
        $region86: #{crnn_forward.8} parent=73 // pred_fallthru
          _
        %s515 = smul.u32 2, %s20
        %p516 = scmp.lt.s32.totalorder %s515, 1
        %s517 = scalar_select %p516, %s515, 1
        %s518 = smul.addr %s517, 2
        %s519 = smul.addr %s518, 8
        %s520 = scalar_lea.vmem %s5, %s519
        // Predicated region
        $region87: #{crnn_forward.8} parent=73 // pred_check
          %p521 = pneg %p163
        $region88: #{crnn_forward.8} parent=73 // pred_check_branch
          %523 = sbr.rel (%p521) target = $region90
        $region89: #{crnn_forward.8} parent=73 // pred_region
          %s524 = smul.u32 2, %s20
        $region90: #{crnn_forward.8} parent=73 // pred_fallthru
          _
        // Predicated region
        $region91: #{crnn_forward.8} parent=73 // pred_check
          %p525 = pneg %p163
        $region92: #{crnn_forward.8} parent=73 // pred_check_branch
          %527 = sbr.rel (%p525) target = $region94
        $region93: #{crnn_forward.8} parent=73 // pred_region
          %s528 = smul.u32 2, %s20
          %p529 = scmp.lt.s32.totalorder %s528, 1
          %s530 = scalar_select %p529, %s528, 1
          %s531 = smul.addr %s530, 2
          %s532 = smul.addr %s531, 8
          %s533 = scalar_lea.vmem %s5, %s532
        $region94: #{crnn_forward.8} parent=73 // pred_fallthru
          _
      $region74: #{crnn_forward.8} parent=5 // pred_fallthru
        _
      %p534 = scmp.le.s32.totalorder 2, %s11
      // Predicated region
      $region95: #{crnn_forward.8} parent=5 // pred_check
        %p535 = pneg %p534
      $region96: #{crnn_forward.8} parent=5 // pred_check_branch
        %537 = sbr.rel (%p535) target = $region98
      $region97: #{crnn_forward.8} parent=5 // pred_region
        %s538 = ssub.s32 %s11, 2
      $region98: #{crnn_forward.8} parent=5 // pred_fallthru
        _
    $region6: #{crnn_forward.8} parent=1 // loop_footer
      %s15 = sadd.s32 1, %s11
    $region7: #{crnn_forward.8} parent=1 // loop_footer_branch
      %10 = sbr.rel target = $region3
    $region8: #{crnn_forward.8} parent=1 // loop_exit
      _

// kernel: crnn_forward.7
$region0: #{crnn_forward.7}
  #allocation0 [shape = 'u32[]', space=smem, size = 0x4, offset = 0x4, fixed_abs, tag = 'smem constant byte address 0x4 - core index']
  #allocation1 [shape = 'u32[144,128]{1,0:T(1,128)}', space=vmem, size = 0x12000, scoped, tag = 'internal scratch']
  %s0 = inlined_call_operand.vmem [shape: f32[2,10,10,32], index: 0, kind: input, shape index: {}]
  %s1 = inlined_call_operand.vmem [shape: bf16[9,32,128], index: 1, kind: input, shape index: {}]
  %s2 = inlined_call_operand.vmem [shape: f32[1,128], index: 2, kind: input, shape index: {}]
  %s3 = inlined_call_operand.vmem [shape: f32[2,64,128], index: 3, kind: output, shape index: {0}]
  %s4 = inlined_call_operand.vmem [shape: f32[1,8,128], index: 4, kind: output, shape index: {1}]
  %5 = xla_tuple %s3, %s4
  %s6 = sld [smem:[#allocation0]]
  $region30: #{crnn_forward.7} parent=0
    _
  %s8 = ssub.s32 1, %s6
  %s9 = scalar_select 0, %s8, %s6
  // Predicated region
  $region2: #{crnn_forward.7} parent=0 // pred_check
    _
  $region3: #{crnn_forward.7} parent=0 // pred_check_branch
    %11 = sbr.rel (0) target = $region5
  $region4: #{crnn_forward.7} parent=0 // pred_region
    _
  $region5: #{crnn_forward.7} parent=0 // pred_fallthru
    _
  // Predicated region
  $region6: #{crnn_forward.7} parent=0 // pred_check
    _
  $region7: #{crnn_forward.7} parent=0 // pred_check_branch
    %13 = sbr.rel (0) target = $region9
  $region8: #{crnn_forward.7} parent=0 // pred_region
    _
  $region9: #{crnn_forward.7} parent=0 // pred_fallthru
    _
  // Predicated region
  $region10: #{crnn_forward.7} parent=0 // pred_check
    _
  $region11: #{crnn_forward.7} parent=0 // pred_check_branch
    %15 = sbr.rel (0) target = $region13
  $region12: #{crnn_forward.7} parent=0 // pred_region
    _
  $region13: #{crnn_forward.7} parent=0 // pred_fallthru
    _
  %v17 = vld [vmem:[%s0] sm:$0xff]
  %v18 = vld [vmem:[%s0 + $0x10] sm:$0xff]
  %v19 = vld [vmem:[%s0 + $0x20] sm:$0xff]
  %v20 = vld [vmem:[%s0 + $0x30] sm:$0xff]
  %v21 = vld [vmem:[%s0 + $0x40] sm:$0xff]
  %v22 = vld [vmem:[%s0 + $0x50] sm:$0xff]
  %v23 = vld [vmem:[%s0 + $0x60] sm:$0xff]
  %v24 = vld [vmem:[%s0 + $0x70] sm:$0xff]
  %v25 = vld [vmem:[%s0 + $0xa0] sm:$0xff]
  %v26 = vld [vmem:[%s0 + $0xb0] sm:$0xff]
  %v27 = vld [vmem:[%s0 + $0xc0] sm:$0xff]
  %v28 = vld [vmem:[%s0 + $0xd0] sm:$0xff]
  %v29 = vld [vmem:[%s0 + $0xe0] sm:$0xff]
  %v30 = vld [vmem:[%s0 + $0xf0] sm:$0xff]
  %v31 = vld [vmem:[%s0 + $0x100] sm:$0xff]
  %v32 = vld [vmem:[%s0 + $0x110] sm:$0xff]
  %v33 = vpack.c.bf16 %v18, %v17
  %v34 = vpack.c.bf16 %v20, %v19
  %v35 = vpack.c.bf16 %v22, %v21
  %v36 = vpack.c.bf16 %v24, %v23
  %v37 = vpack.c.bf16 %v26, %v25
  %v38 = vpack.c.bf16 %v28, %v27
  %v39 = vpack.c.bf16 %v30, %v29
  %v40 = vpack.c.bf16 %v32, %v31
  %v41 = vld [vmem:[%s1] sm:$0xf]
  %v42 = vld [vmem:[%s1 + $0x4] sm:$0xf]
  %v43 = vld [vmem:[%s1 + $0x8] sm:$0xf]
  %v44 = vld [vmem:[%s1 + $0xc] sm:$0xf]
  %v45 = vld [vmem:[%s0 + $0x1] sm:$0xff]
  %v46 = vld [vmem:[%s0 + $0x11] sm:$0xff]
  %v47 = vld [vmem:[%s0 + $0x21] sm:$0xff]
  %v48 = vld [vmem:[%s0 + $0x31] sm:$0xff]
  %v49 = vld [vmem:[%s0 + $0x41] sm:$0xff]
  %v50 = vld [vmem:[%s0 + $0x51] sm:$0xff]
  %v51 = vld [vmem:[%s0 + $0x61] sm:$0xff]
  %v52 = vld [vmem:[%s0 + $0x71] sm:$0xff]
  %v53 = vld [vmem:[%s0 + $0xa1] sm:$0xff]
  %v54 = vld [vmem:[%s0 + $0xb1] sm:$0xff]
  %v55 = vld [vmem:[%s0 + $0xc1] sm:$0xff]
  %v56 = vld [vmem:[%s0 + $0xd1] sm:$0xff]
  %v57 = vld [vmem:[%s0 + $0xe1] sm:$0xff]
  %v58 = vld [vmem:[%s0 + $0xf1] sm:$0xff]
  %v59 = vld [vmem:[%s0 + $0x101] sm:$0xff]
  %v60 = vld [vmem:[%s0 + $0x111] sm:$0xff]
  %v61 = vpack.c.bf16 %v46, %v45
  %v62 = vpack.c.bf16 %v48, %v47
  %v63 = vpack.c.bf16 %v50, %v49
  %v64 = vpack.c.bf16 %v52, %v51
  %v65 = vpack.c.bf16 %v54, %v53
  %v66 = vpack.c.bf16 %v56, %v55
  %v67 = vpack.c.bf16 %v58, %v57
  %v68 = vpack.c.bf16 %v60, %v59
  %s69 = scalar_lea.vmem %s1, 16
  %v70 = vld [vmem:[%s69] sm:$0xf]
  %v71 = vld [vmem:[%s69 + $0x4] sm:$0xf]
  %v72 = vld [vmem:[%s69 + $0x8] sm:$0xf]
  %v73 = vld [vmem:[%s69 + $0xc] sm:$0xf]
  %v78 = vunpack.c.l.b16 %v70
  %v79 = vunpack.c.l.b16 %v71
  %v80 = vunpack.c.l.b16 %v72
  %v81 = vunpack.c.l.b16 %v73
  %v82 = vpack.c.b16 %v79, %v78
  %v83 = vpack.c.b16 %v81, %v80
  %vm86 = vcmask 261120
  %v88 = vsel %vm86, %v61, 0
  %v91 = vsel %vm86, %v62, 0
  %v94 = vsel %vm86, %v63, 0
  %v97 = vsel %vm86, %v64, 0
  %v100 = vsel %vm86, %v65, 0
  %v103 = vsel %vm86, %v66, 0
  %v106 = vsel %vm86, %v67, 0
  %v109 = vsel %vm86, %v68, 0
  %111 = vmatprep.subr.bf16.mxu0 0
  %112 = vmatpush1.bf16.msra.mxu0 %v82
  %113 = vmatprep.subr.bf16.mxu0 0
  %114 = vmatpush1.bf16.msra.mxu0 %v83
  %115 = vmatprep.subr.bf16.mxu0 0
  %116 = vmatpush1.bf16.msra.mxu0 0
  %117 = vmatprep.subr.bf16.mxu0 0
  %118 = vmatpush1.bf16.msra.mxu0 0
  %119 = vmatprep.subr.bf16.mxu0 0
  %120 = vmatpush1.bf16.msra.mxu0 0
  %121 = vmatprep.subr.bf16.mxu0 0
  %122 = vmatpush1.bf16.msra.mxu0 0
  %123 = vmatprep.subr.bf16.mxu0 0
  %124 = vmatpush1.bf16.msra.mxu0 0
  %125 = vmatprep.subr.bf16.mxu0 0
  %126 = vmatpush1.bf16.msra.mxu0 0
  %127 = vmatprep.subr.bf16.mxu0 0
  %128 = vmatpush1.bf16.msra.mxu0 0
  %129 = vmatprep.subr.bf16.mxu0 0
  %130 = vmatpush1.bf16.msra.mxu0 0
  %131 = vmatprep.subr.bf16.mxu0 0
  %132 = vmatpush1.bf16.msra.mxu0 0
  %133 = vmatprep.subr.bf16.mxu0 0
  %134 = vmatpush1.bf16.msra.mxu0 0
  %135 = vmatprep.subr.bf16.mxu0 0
  %136 = vmatpush1.bf16.msra.mxu0 0
  %137 = vmatprep.subr.bf16.mxu0 0
  %138 = vmatpush1.bf16.msra.mxu0 0
  %139 = vmatprep.subr.bf16.mxu0 0
  %140 = vmatpush1.bf16.msra.mxu0 0
  %141 = vmatprep.subr.bf16.mxu0 0
  %142 = vmatpush1.bf16.msra.mxu0 0
  %143 = vmatprep.mubr.bf16.mxu0 0
  %144 = vmatmul.mubr.bf16.gmra.mrb[0].mxu0 %v88
  %v145 = vpop.f32.mrb[0].mxu0
  %v146 = vadd.f32 0.0, %v145
  %v147 = vpop.f32.mrb[0].mxu0
  %v148 = vpop.f32.mrb[0].mxu0
  %v149 = vadd.f32 0.0, %v148
  %v150 = vpop.f32.mrb[0].mxu0
  %151 = vmatprep.mubr.bf16.mxu0 0
  %152 = vmatmul.mubr.bf16.gmra.mrb[0].mxu0 %v91
  %v153 = vpop.f32.mrb[0].mxu0
  %v154 = vadd.f32 0.0, %v153
  %v155 = vpop.f32.mrb[0].mxu0
  %v156 = vpop.f32.mrb[0].mxu0
  %v157 = vadd.f32 0.0, %v156
  %v158 = vpop.f32.mrb[0].mxu0
  %159 = vmatprep.mubr.bf16.mxu0 0
  %160 = vmatmul.mubr.bf16.gmra.mrb[0].mxu0 %v94
  %v161 = vpop.f32.mrb[0].mxu0
  %v162 = vadd.f32 0.0, %v161
  %v163 = vpop.f32.mrb[0].mxu0
  %v164 = vpop.f32.mrb[0].mxu0
  %v165 = vadd.f32 0.0, %v164
  %v166 = vpop.f32.mrb[0].mxu0
  %167 = vmatprep.mubr.bf16.mxu0 0
  %168 = vmatmul.mubr.bf16.gmra.mrb[0].mxu0 %v97
  %v169 = vpop.f32.mrb[0].mxu0
  %v170 = vadd.f32 0.0, %v169
  %v171 = vpop.f32.mrb[0].mxu0
  %v172 = vpop.f32.mrb[0].mxu0
  %v173 = vadd.f32 0.0, %v172
  %v174 = vpop.f32.mrb[0].mxu0
  %175 = vmatprep.mubr.bf16.mxu0 0
  %176 = vmatmul.mubr.bf16.gmra.mrb[0].mxu0 %v100
  %v177 = vpop.f32.mrb[0].mxu0
  %v178 = vadd.f32 0.0, %v177
  %v179 = vpop.f32.mrb[0].mxu0
  %v180 = vpop.f32.mrb[0].mxu0
  %v181 = vadd.f32 0.0, %v180
  %v182 = vpop.f32.mrb[0].mxu0
  %183 = vmatprep.mubr.bf16.mxu0 0
  %184 = vmatmul.mubr.bf16.gmra.mrb[0].mxu0 %v103
  %v185 = vpop.f32.mrb[0].mxu0
  %v186 = vadd.f32 0.0, %v185
  %v187 = vpop.f32.mrb[0].mxu0
  %v188 = vpop.f32.mrb[0].mxu0
  %v189 = vadd.f32 0.0, %v188
  %v190 = vpop.f32.mrb[0].mxu0
  %191 = vmatprep.mubr.bf16.mxu0 0
  %192 = vmatmul.mubr.bf16.gmra.mrb[0].mxu0 %v106
  %v193 = vpop.f32.mrb[0].mxu0
  %v194 = vadd.f32 0.0, %v193
  %v195 = vpop.f32.mrb[0].mxu0
  %v196 = vpop.f32.mrb[0].mxu0
  %v197 = vadd.f32 0.0, %v196
  %v198 = vpop.f32.mrb[0].mxu0
  %199 = vmatprep.mubr.bf16.mxu0 0
  %200 = vmatmul.mubr.bf16.gmra.mrb[0].mxu0 %v109
  %v201 = vpop.f32.mrb[0].mxu0
  %v202 = vadd.f32 0.0, %v201
  %v203 = vpop.f32.mrb[0].mxu0
  %v204 = vpop.f32.mrb[0].mxu0
  %v205 = vadd.f32 0.0, %v204
  %v206 = vpop.f32.mrb[0].mxu0
  %207 = vdwg.mxu0
  %v212 = vunpack.c.l.b16 %v41
  %v213 = vunpack.c.l.b16 %v42
  %v214 = vunpack.c.l.b16 %v43
  %v215 = vunpack.c.l.b16 %v44
  %v216 = vpack.c.b16 %v213, %v212
  %v217 = vpack.c.b16 %v215, %v214
  %v221 = vsel %vm86, %v33, 0
  %v224 = vsel %vm86, %v34, 0
  %v227 = vsel %vm86, %v35, 0
  %v230 = vsel %vm86, %v36, 0
  %v233 = vsel %vm86, %v37, 0
  %v236 = vsel %vm86, %v38, 0
  %v239 = vsel %vm86, %v39, 0
  %v242 = vsel %vm86, %v40, 0
  %244 = vmatprep.subr.bf16.mxu0 0
  %245 = vmatpush1.bf16.msra.mxu0 %v216
  %246 = vmatprep.subr.bf16.mxu0 0
  %247 = vmatpush1.bf16.msra.mxu0 %v217
  %248 = vmatprep.subr.bf16.mxu0 0
  %249 = vmatpush1.bf16.msra.mxu0 0
  %250 = vmatprep.subr.bf16.mxu0 0
  %251 = vmatpush1.bf16.msra.mxu0 0
  %252 = vmatprep.subr.bf16.mxu0 0
  %253 = vmatpush1.bf16.msra.mxu0 0
  %254 = vmatprep.subr.bf16.mxu0 0
  %255 = vmatpush1.bf16.msra.mxu0 0
  %256 = vmatprep.subr.bf16.mxu0 0
  %257 = vmatpush1.bf16.msra.mxu0 0
  %258 = vmatprep.subr.bf16.mxu0 0
  %259 = vmatpush1.bf16.msra.mxu0 0
  %260 = vmatprep.subr.bf16.mxu0 0
  %261 = vmatpush1.bf16.msra.mxu0 0
  %262 = vmatprep.subr.bf16.mxu0 0
  %263 = vmatpush1.bf16.msra.mxu0 0
  %264 = vmatprep.subr.bf16.mxu0 0
  %265 = vmatpush1.bf16.msra.mxu0 0
  %266 = vmatprep.subr.bf16.mxu0 0
  %267 = vmatpush1.bf16.msra.mxu0 0
  %268 = vmatprep.subr.bf16.mxu0 0
  %269 = vmatpush1.bf16.msra.mxu0 0
  %270 = vmatprep.subr.bf16.mxu0 0
  %271 = vmatpush1.bf16.msra.mxu0 0
  %272 = vmatprep.subr.bf16.mxu0 0
  %273 = vmatpush1.bf16.msra.mxu0 0
  %274 = vmatprep.subr.bf16.mxu0 0
  %275 = vmatpush1.bf16.msra.mxu0 0
  %276 = vmatprep.mubr.bf16.mxu0 0
  %277 = vmatmul.mubr.bf16.gmra.mrb[0].mxu0 %v221
  %v278 = vpop.f32.mrb[0].mxu0
  %v279 = vadd.f32 %v146, %v278
  %v280 = vpop.f32.mrb[0].mxu0
  %v281 = vpop.f32.mrb[0].mxu0
  %v282 = vadd.f32 %v149, %v281
  %v283 = vpop.f32.mrb[0].mxu0
  %284 = vmatprep.mubr.bf16.mxu0 0
  %285 = vmatmul.mubr.bf16.gmra.mrb[0].mxu0 %v224
  %v286 = vpop.f32.mrb[0].mxu0
  %v287 = vadd.f32 %v154, %v286
  %v288 = vpop.f32.mrb[0].mxu0
  %v289 = vpop.f32.mrb[0].mxu0
  %v290 = vadd.f32 %v157, %v289
  %v291 = vpop.f32.mrb[0].mxu0
  %292 = vmatprep.mubr.bf16.mxu0 0
  %293 = vmatmul.mubr.bf16.gmra.mrb[0].mxu0 %v227
  %v294 = vpop.f32.mrb[0].mxu0
  %v295 = vadd.f32 %v162, %v294
  %v296 = vpop.f32.mrb[0].mxu0
  %v297 = vpop.f32.mrb[0].mxu0
  %v298 = vadd.f32 %v165, %v297
  %v299 = vpop.f32.mrb[0].mxu0
  %300 = vmatprep.mubr.bf16.mxu0 0
  %301 = vmatmul.mubr.bf16.gmra.mrb[0].mxu0 %v230
  %v302 = vpop.f32.mrb[0].mxu0
  %v303 = vadd.f32 %v170, %v302
  %v304 = vpop.f32.mrb[0].mxu0
  %v305 = vpop.f32.mrb[0].mxu0
  %v306 = vadd.f32 %v173, %v305
  %v307 = vpop.f32.mrb[0].mxu0
  %308 = vmatprep.mubr.bf16.mxu0 0
  %309 = vmatmul.mubr.bf16.gmra.mrb[0].mxu0 %v233
  %v310 = vpop.f32.mrb[0].mxu0
  %v311 = vadd.f32 %v178, %v310
  %v312 = vpop.f32.mrb[0].mxu0
  %v313 = vpop.f32.mrb[0].mxu0
  %v314 = vadd.f32 %v181, %v313
  %v315 = vpop.f32.mrb[0].mxu0
  %316 = vmatprep.mubr.bf16.mxu0 0
  %317 = vmatmul.mubr.bf16.gmra.mrb[0].mxu0 %v236
  %v318 = vpop.f32.mrb[0].mxu0
  %v319 = vadd.f32 %v186, %v318
  %v320 = vpop.f32.mrb[0].mxu0
  %v321 = vpop.f32.mrb[0].mxu0
  %v322 = vadd.f32 %v189, %v321
  %v323 = vpop.f32.mrb[0].mxu0
  %324 = vmatprep.mubr.bf16.mxu0 0
  %325 = vmatmul.mubr.bf16.gmra.mrb[0].mxu0 %v239
  %v326 = vpop.f32.mrb[0].mxu0
  %v327 = vadd.f32 %v194, %v326
  %v328 = vpop.f32.mrb[0].mxu0
  %v329 = vpop.f32.mrb[0].mxu0
  %v330 = vadd.f32 %v197, %v329
  %v331 = vpop.f32.mrb[0].mxu0
  %332 = vmatprep.mubr.bf16.mxu0 0
  %333 = vmatmul.mubr.bf16.gmra.mrb[0].mxu0 %v242
  %v334 = vpop.f32.mrb[0].mxu0
  %v335 = vadd.f32 %v202, %v334
  %v336 = vpop.f32.mrb[0].mxu0
  %v337 = vpop.f32.mrb[0].mxu0
  %v338 = vadd.f32 %v205, %v337
  %v339 = vpop.f32.mrb[0].mxu0
  %340 = vdwg.mxu0
  %v341 = vld [vmem:[%s0 + $0x2] sm:$0xff]
  %v342 = vld [vmem:[%s0 + $0x12] sm:$0xff]
  %v343 = vld [vmem:[%s0 + $0x22] sm:$0xff]
  %v344 = vld [vmem:[%s0 + $0x32] sm:$0xff]
  %v345 = vld [vmem:[%s0 + $0x42] sm:$0xff]
  %v346 = vld [vmem:[%s0 + $0x52] sm:$0xff]
  %v347 = vld [vmem:[%s0 + $0x62] sm:$0xff]
  %v348 = vld [vmem:[%s0 + $0x72] sm:$0xff]
  %v349 = vld [vmem:[%s0 + $0xa2] sm:$0xff]
  %v350 = vld [vmem:[%s0 + $0xb2] sm:$0xff]
  %v351 = vld [vmem:[%s0 + $0xc2] sm:$0xff]
  %v352 = vld [vmem:[%s0 + $0xd2] sm:$0xff]
  %v353 = vld [vmem:[%s0 + $0xe2] sm:$0xff]
  %v354 = vld [vmem:[%s0 + $0xf2] sm:$0xff]
  %v355 = vld [vmem:[%s0 + $0x102] sm:$0xff]
  %v356 = vld [vmem:[%s0 + $0x112] sm:$0xff]
  %v357 = vpack.c.bf16 %v342, %v341
  %v358 = vpack.c.bf16 %v344, %v343
  %v359 = vpack.c.bf16 %v346, %v345
  %v360 = vpack.c.bf16 %v348, %v347
  %v361 = vpack.c.bf16 %v350, %v349
  %v362 = vpack.c.bf16 %v352, %v351
  %v363 = vpack.c.bf16 %v354, %v353
  %v364 = vpack.c.bf16 %v356, %v355
  %s365 = scalar_lea.vmem %s1, 32
  %v366 = vld [vmem:[%s365] sm:$0xf]
  %v367 = vld [vmem:[%s365 + $0x4] sm:$0xf]
  %v368 = vld [vmem:[%s365 + $0x8] sm:$0xf]
  %v369 = vld [vmem:[%s365 + $0xc] sm:$0xf]
  %v374 = vunpack.c.l.b16 %v366
  %v375 = vunpack.c.l.b16 %v367
  %v376 = vunpack.c.l.b16 %v368
  %v377 = vunpack.c.l.b16 %v369
  %v378 = vpack.c.b16 %v375, %v374
  %v379 = vpack.c.b16 %v377, %v376
  %v383 = vsel %vm86, %v357, 0
  %v386 = vsel %vm86, %v358, 0
  %v389 = vsel %vm86, %v359, 0
  %v392 = vsel %vm86, %v360, 0
  %v395 = vsel %vm86, %v361, 0
  %v398 = vsel %vm86, %v362, 0
  %v401 = vsel %vm86, %v363, 0
  %v404 = vsel %vm86, %v364, 0
  %406 = vmatprep.subr.bf16.mxu0 0
  %407 = vmatpush1.bf16.msra.mxu0 %v378
  %408 = vmatprep.subr.bf16.mxu0 0
  %409 = vmatpush1.bf16.msra.mxu0 %v379
  %410 = vmatprep.subr.bf16.mxu0 0
  %411 = vmatpush1.bf16.msra.mxu0 0
  %412 = vmatprep.subr.bf16.mxu0 0
  %413 = vmatpush1.bf16.msra.mxu0 0
  %414 = vmatprep.subr.bf16.mxu0 0
  %415 = vmatpush1.bf16.msra.mxu0 0
  %416 = vmatprep.subr.bf16.mxu0 0
  %417 = vmatpush1.bf16.msra.mxu0 0
  %418 = vmatprep.subr.bf16.mxu0 0
  %419 = vmatpush1.bf16.msra.mxu0 0
  %420 = vmatprep.subr.bf16.mxu0 0
  %421 = vmatpush1.bf16.msra.mxu0 0
  %422 = vmatprep.subr.bf16.mxu0 0
  %423 = vmatpush1.bf16.msra.mxu0 0
  %424 = vmatprep.subr.bf16.mxu0 0
  %425 = vmatpush1.bf16.msra.mxu0 0
  %426 = vmatprep.subr.bf16.mxu0 0
  %427 = vmatpush1.bf16.msra.mxu0 0
  %428 = vmatprep.subr.bf16.mxu0 0
  %429 = vmatpush1.bf16.msra.mxu0 0
  %430 = vmatprep.subr.bf16.mxu0 0
  %431 = vmatpush1.bf16.msra.mxu0 0
  %432 = vmatprep.subr.bf16.mxu0 0
  %433 = vmatpush1.bf16.msra.mxu0 0
  %434 = vmatprep.subr.bf16.mxu0 0
  %435 = vmatpush1.bf16.msra.mxu0 0
  %436 = vmatprep.subr.bf16.mxu0 0
  %437 = vmatpush1.bf16.msra.mxu0 0
  %438 = vmatprep.mubr.bf16.mxu0 0
  %439 = vmatmul.mubr.bf16.gmra.mrb[0].mxu0 %v383
  %v440 = vpop.f32.mrb[0].mxu0
  %v441 = vadd.f32 0.0, %v440
  %v442 = vpop.f32.mrb[0].mxu0
  %v443 = vpop.f32.mrb[0].mxu0
  %v444 = vadd.f32 0.0, %v443
  %v445 = vpop.f32.mrb[0].mxu0
  %446 = vmatprep.mubr.bf16.mxu0 0
  %447 = vmatmul.mubr.bf16.gmra.mrb[0].mxu0 %v386
  %v448 = vpop.f32.mrb[0].mxu0
  %v449 = vadd.f32 0.0, %v448
  %v450 = vpop.f32.mrb[0].mxu0
  %v451 = vpop.f32.mrb[0].mxu0
  %v452 = vadd.f32 0.0, %v451
  %v453 = vpop.f32.mrb[0].mxu0
  %454 = vmatprep.mubr.bf16.mxu0 0
  %455 = vmatmul.mubr.bf16.gmra.mrb[0].mxu0 %v389
  %v456 = vpop.f32.mrb[0].mxu0
  %v457 = vadd.f32 0.0, %v456
  %v458 = vpop.f32.mrb[0].mxu0
  %v459 = vpop.f32.mrb[0].mxu0
  %v460 = vadd.f32 0.0, %v459
  %v461 = vpop.f32.mrb[0].mxu0
  %462 = vmatprep.mubr.bf16.mxu0 0
  %463 = vmatmul.mubr.bf16.gmra.mrb[0].mxu0 %v392
  %v464 = vpop.f32.mrb[0].mxu0
  %v465 = vadd.f32 0.0, %v464
  %v466 = vpop.f32.mrb[0].mxu0
  %v467 = vpop.f32.mrb[0].mxu0
  %v468 = vadd.f32 0.0, %v467
  %v469 = vpop.f32.mrb[0].mxu0
  %470 = vmatprep.mubr.bf16.mxu0 0
  %471 = vmatmul.mubr.bf16.gmra.mrb[0].mxu0 %v395
  %v472 = vpop.f32.mrb[0].mxu0
  %v473 = vadd.f32 0.0, %v472
  %v474 = vpop.f32.mrb[0].mxu0
  %v475 = vpop.f32.mrb[0].mxu0
  %v476 = vadd.f32 0.0, %v475
  %v477 = vpop.f32.mrb[0].mxu0
  %478 = vmatprep.mubr.bf16.mxu0 0
  %479 = vmatmul.mubr.bf16.gmra.mrb[0].mxu0 %v398
  %v480 = vpop.f32.mrb[0].mxu0
  %v481 = vadd.f32 0.0, %v480
  %v482 = vpop.f32.mrb[0].mxu0
  %v483 = vpop.f32.mrb[0].mxu0
  %v484 = vadd.f32 0.0, %v483
  %v485 = vpop.f32.mrb[0].mxu0
  %486 = vmatprep.mubr.bf16.mxu0 0
  %487 = vmatmul.mubr.bf16.gmra.mrb[0].mxu0 %v401
  %v488 = vpop.f32.mrb[0].mxu0
  %v489 = vadd.f32 0.0, %v488
  %v490 = vpop.f32.mrb[0].mxu0
  %v491 = vpop.f32.mrb[0].mxu0
  %v492 = vadd.f32 0.0, %v491
  %v493 = vpop.f32.mrb[0].mxu0
  %494 = vmatprep.mubr.bf16.mxu0 0
  %495 = vmatmul.mubr.bf16.gmra.mrb[0].mxu0 %v404
  %v496 = vpop.f32.mrb[0].mxu0
  %v497 = vadd.f32 0.0, %v496
  %v498 = vpop.f32.mrb[0].mxu0
  %v499 = vpop.f32.mrb[0].mxu0
  %v500 = vadd.f32 0.0, %v499
  %v501 = vpop.f32.mrb[0].mxu0
  %502 = vdwg.mxu0
  %v503 = vadd.f32 %v279, %v441
  %v504 = vadd.f32 %v282, %v444
  %v505 = vadd.f32 %v287, %v449
  %v506 = vadd.f32 %v290, %v452
  %v507 = vadd.f32 %v295, %v457
  %v508 = vadd.f32 %v298, %v460
  %v509 = vadd.f32 %v303, %v465
  %v510 = vadd.f32 %v306, %v468
  %v511 = vadd.f32 %v311, %v473
  %v512 = vadd.f32 %v314, %v476
  %v513 = vadd.f32 %v319, %v481
  %v514 = vadd.f32 %v322, %v484
  %v515 = vadd.f32 %v327, %v489
  %v516 = vadd.f32 %v330, %v492
  %v517 = vadd.f32 %v335, %v497
  %v518 = vadd.f32 %v338, %v500
  %s519 = scalar_lea.vmem %s0, 16
  %v520 = vld [vmem:[%s519] sm:$0xff]
  %v521 = vld [vmem:[%s519 + $0x10] sm:$0xff]
  %v522 = vld [vmem:[%s519 + $0x20] sm:$0xff]
  %v523 = vld [vmem:[%s519 + $0x30] sm:$0xff]
  %v524 = vld [vmem:[%s519 + $0x40] sm:$0xff]
  %v525 = vld [vmem:[%s519 + $0x50] sm:$0xff]
  %v526 = vld [vmem:[%s519 + $0x60] sm:$0xff]
  %v527 = vld [vmem:[%s519 + $0x70] sm:$0xff]
  %v528 = vld [vmem:[%s519 + $0xa0] sm:$0xff]
  %v529 = vld [vmem:[%s519 + $0xb0] sm:$0xff]
  %v530 = vld [vmem:[%s519 + $0xc0] sm:$0xff]
  %v531 = vld [vmem:[%s519 + $0xd0] sm:$0xff]
  %v532 = vld [vmem:[%s519 + $0xe0] sm:$0xff]
  %v533 = vld [vmem:[%s519 + $0xf0] sm:$0xff]
  %v534 = vld [vmem:[%s519 + $0x100] sm:$0xff]
  %v535 = vld [vmem:[%s519 + $0x110] sm:$0xff]
  %v536 = vpack.c.bf16 %v521, %v520
  %v537 = vpack.c.bf16 %v523, %v522
  %v538 = vpack.c.bf16 %v525, %v524
  %v539 = vpack.c.bf16 %v527, %v526
  %v540 = vpack.c.bf16 %v529, %v528
  %v541 = vpack.c.bf16 %v531, %v530
  %v542 = vpack.c.bf16 %v533, %v532
  %v543 = vpack.c.bf16 %v535, %v534
  %s544 = scalar_lea.vmem %s1, 48
  %v545 = vld [vmem:[%s544] sm:$0xf]
  %v546 = vld [vmem:[%s544 + $0x4] sm:$0xf]
  %v547 = vld [vmem:[%s544 + $0x8] sm:$0xf]
  %v548 = vld [vmem:[%s544 + $0xc] sm:$0xf]
  %v553 = vunpack.c.l.b16 %v545
  %v554 = vunpack.c.l.b16 %v546
  %v555 = vunpack.c.l.b16 %v547
  %v556 = vunpack.c.l.b16 %v548
  %v557 = vpack.c.b16 %v554, %v553
  %v558 = vpack.c.b16 %v556, %v555
  %v562 = vsel %vm86, %v536, 0
  %v565 = vsel %vm86, %v537, 0
  %v568 = vsel %vm86, %v538, 0
  %v571 = vsel %vm86, %v539, 0
  %v574 = vsel %vm86, %v540, 0
  %v577 = vsel %vm86, %v541, 0
  %v580 = vsel %vm86, %v542, 0
  %v583 = vsel %vm86, %v543, 0
  %585 = vmatprep.subr.bf16.mxu0 0
  %586 = vmatpush1.bf16.msra.mxu0 %v557
  %587 = vmatprep.subr.bf16.mxu0 0
  %588 = vmatpush1.bf16.msra.mxu0 %v558
  %589 = vmatprep.subr.bf16.mxu0 0
  %590 = vmatpush1.bf16.msra.mxu0 0
  %591 = vmatprep.subr.bf16.mxu0 0
  %592 = vmatpush1.bf16.msra.mxu0 0
  %593 = vmatprep.subr.bf16.mxu0 0
  %594 = vmatpush1.bf16.msra.mxu0 0
  %595 = vmatprep.subr.bf16.mxu0 0
  %596 = vmatpush1.bf16.msra.mxu0 0
  %597 = vmatprep.subr.bf16.mxu0 0
  %598 = vmatpush1.bf16.msra.mxu0 0
  %599 = vmatprep.subr.bf16.mxu0 0
  %600 = vmatpush1.bf16.msra.mxu0 0
  %601 = vmatprep.subr.bf16.mxu0 0
  %602 = vmatpush1.bf16.msra.mxu0 0
  %603 = vmatprep.subr.bf16.mxu0 0
  %604 = vmatpush1.bf16.msra.mxu0 0
  %605 = vmatprep.subr.bf16.mxu0 0
  %606 = vmatpush1.bf16.msra.mxu0 0
  %607 = vmatprep.subr.bf16.mxu0 0
  %608 = vmatpush1.bf16.msra.mxu0 0
  %609 = vmatprep.subr.bf16.mxu0 0
  %610 = vmatpush1.bf16.msra.mxu0 0
  %611 = vmatprep.subr.bf16.mxu0 0
  %612 = vmatpush1.bf16.msra.mxu0 0
  %613 = vmatprep.subr.bf16.mxu0 0
  %614 = vmatpush1.bf16.msra.mxu0 0
  %615 = vmatprep.subr.bf16.mxu0 0
  %616 = vmatpush1.bf16.msra.mxu0 0
  %617 = vmatprep.mubr.bf16.mxu0 0
  %618 = vmatmul.mubr.bf16.gmra.mrb[0].mxu0 %v562
  %v619 = vpop.f32.mrb[0].mxu0
  %v620 = vadd.f32 0.0, %v619
  %v621 = vpop.f32.mrb[0].mxu0
  %v622 = vpop.f32.mrb[0].mxu0
  %v623 = vadd.f32 0.0, %v622
  %v624 = vpop.f32.mrb[0].mxu0
  %625 = vmatprep.mubr.bf16.mxu0 0
  %626 = vmatmul.mubr.bf16.gmra.mrb[0].mxu0 %v565
  %v627 = vpop.f32.mrb[0].mxu0
  %v628 = vadd.f32 0.0, %v627
  %v629 = vpop.f32.mrb[0].mxu0
  %v630 = vpop.f32.mrb[0].mxu0
  %v631 = vadd.f32 0.0, %v630
  %v632 = vpop.f32.mrb[0].mxu0
  %633 = vmatprep.mubr.bf16.mxu0 0
  %634 = vmatmul.mubr.bf16.gmra.mrb[0].mxu0 %v568
  %v635 = vpop.f32.mrb[0].mxu0
  %v636 = vadd.f32 0.0, %v635
  %v637 = vpop.f32.mrb[0].mxu0
  %v638 = vpop.f32.mrb[0].mxu0
  %v639 = vadd.f32 0.0, %v638
  %v640 = vpop.f32.mrb[0].mxu0
  %641 = vmatprep.mubr.bf16.mxu0 0
  %642 = vmatmul.mubr.bf16.gmra.mrb[0].mxu0 %v571
  %v643 = vpop.f32.mrb[0].mxu0
  %v644 = vadd.f32 0.0, %v643
  %v645 = vpop.f32.mrb[0].mxu0
  %v646 = vpop.f32.mrb[0].mxu0
  %v647 = vadd.f32 0.0, %v646
  %v648 = vpop.f32.mrb[0].mxu0
  %649 = vmatprep.mubr.bf16.mxu0 0
  %650 = vmatmul.mubr.bf16.gmra.mrb[0].mxu0 %v574
  %v651 = vpop.f32.mrb[0].mxu0
  %v652 = vadd.f32 0.0, %v651
  %v653 = vpop.f32.mrb[0].mxu0
  %v654 = vpop.f32.mrb[0].mxu0
  %v655 = vadd.f32 0.0, %v654
  %v656 = vpop.f32.mrb[0].mxu0
  %657 = vmatprep.mubr.bf16.mxu0 0
  %658 = vmatmul.mubr.bf16.gmra.mrb[0].mxu0 %v577
  %v659 = vpop.f32.mrb[0].mxu0
  %v660 = vadd.f32 0.0, %v659
  %v661 = vpop.f32.mrb[0].mxu0
  %v662 = vpop.f32.mrb[0].mxu0
  %v663 = vadd.f32 0.0, %v662
  %v664 = vpop.f32.mrb[0].mxu0
  %665 = vmatprep.mubr.bf16.mxu0 0
  %666 = vmatmul.mubr.bf16.gmra.mrb[0].mxu0 %v580
  %v667 = vpop.f32.mrb[0].mxu0
  %v668 = vadd.f32 0.0, %v667
  %v669 = vpop.f32.mrb[0].mxu0
  %v670 = vpop.f32.mrb[0].mxu0
  %v671 = vadd.f32 0.0, %v670
  %v672 = vpop.f32.mrb[0].mxu0
  %673 = vmatprep.mubr.bf16.mxu0 0
  %674 = vmatmul.mubr.bf16.gmra.mrb[0].mxu0 %v583
  %v675 = vpop.f32.mrb[0].mxu0
  %v676 = vadd.f32 0.0, %v675
  %v677 = vpop.f32.mrb[0].mxu0
  %v678 = vpop.f32.mrb[0].mxu0
  %v679 = vadd.f32 0.0, %v678
  %v680 = vpop.f32.mrb[0].mxu0
  %681 = vdwg.mxu0
  %v682 = vadd.f32 %v503, %v620
  %v683 = vadd.f32 %v504, %v623
  %v684 = vadd.f32 %v505, %v628
  %v685 = vadd.f32 %v506, %v631
  %v686 = vadd.f32 %v507, %v636
  %v687 = vadd.f32 %v508, %v639
  %v688 = vadd.f32 %v509, %v644
  %v689 = vadd.f32 %v510, %v647
  %v690 = vadd.f32 %v511, %v652
  %v691 = vadd.f32 %v512, %v655
  %v692 = vadd.f32 %v513, %v660
  %v693 = vadd.f32 %v514, %v663
  %v694 = vadd.f32 %v515, %v668
  %v695 = vadd.f32 %v516, %v671
  %v696 = vadd.f32 %v517, %v676
  %v697 = vadd.f32 %v518, %v679
  %v698 = vld [vmem:[%s519 + $0x1] sm:$0xff]
  %v699 = vld [vmem:[%s519 + $0x11] sm:$0xff]
  %v700 = vld [vmem:[%s519 + $0x21] sm:$0xff]
  %v701 = vld [vmem:[%s519 + $0x31] sm:$0xff]
  %v702 = vld [vmem:[%s519 + $0x41] sm:$0xff]
  %v703 = vld [vmem:[%s519 + $0x51] sm:$0xff]
  %v704 = vld [vmem:[%s519 + $0x61] sm:$0xff]
  %v705 = vld [vmem:[%s519 + $0x71] sm:$0xff]
  %v706 = vld [vmem:[%s519 + $0xa1] sm:$0xff]
  %v707 = vld [vmem:[%s519 + $0xb1] sm:$0xff]
  %v708 = vld [vmem:[%s519 + $0xc1] sm:$0xff]
  %v709 = vld [vmem:[%s519 + $0xd1] sm:$0xff]
  %v710 = vld [vmem:[%s519 + $0xe1] sm:$0xff]
  %v711 = vld [vmem:[%s519 + $0xf1] sm:$0xff]
  %v712 = vld [vmem:[%s519 + $0x101] sm:$0xff]
  %v713 = vld [vmem:[%s519 + $0x111] sm:$0xff]
  %v714 = vpack.c.bf16 %v699, %v698
  %v715 = vpack.c.bf16 %v701, %v700
  %v716 = vpack.c.bf16 %v703, %v702
  %v717 = vpack.c.bf16 %v705, %v704
  %v718 = vpack.c.bf16 %v707, %v706
  %v719 = vpack.c.bf16 %v709, %v708
  %v720 = vpack.c.bf16 %v711, %v710
  %v721 = vpack.c.bf16 %v713, %v712
  %s722 = scalar_lea.vmem %s1, 64
  %v723 = vld [vmem:[%s722] sm:$0xf]
  %v724 = vld [vmem:[%s722 + $0x4] sm:$0xf]
  %v725 = vld [vmem:[%s722 + $0x8] sm:$0xf]
  %v726 = vld [vmem:[%s722 + $0xc] sm:$0xf]
  %v731 = vunpack.c.l.b16 %v723
  %v732 = vunpack.c.l.b16 %v724
  %v733 = vunpack.c.l.b16 %v725
  %v734 = vunpack.c.l.b16 %v726
  %v735 = vpack.c.b16 %v732, %v731
  %v736 = vpack.c.b16 %v734, %v733
  %v740 = vsel %vm86, %v714, 0
  %v743 = vsel %vm86, %v715, 0
  %v746 = vsel %vm86, %v716, 0
  %v749 = vsel %vm86, %v717, 0
  %v752 = vsel %vm86, %v718, 0
  %v755 = vsel %vm86, %v719, 0
  %v758 = vsel %vm86, %v720, 0
  %v761 = vsel %vm86, %v721, 0
  %763 = vmatprep.subr.bf16.mxu0 0
  %764 = vmatpush1.bf16.msra.mxu0 %v735
  %765 = vmatprep.subr.bf16.mxu0 0
  %766 = vmatpush1.bf16.msra.mxu0 %v736
  %767 = vmatprep.subr.bf16.mxu0 0
  %768 = vmatpush1.bf16.msra.mxu0 0
  %769 = vmatprep.subr.bf16.mxu0 0
  %770 = vmatpush1.bf16.msra.mxu0 0
  %771 = vmatprep.subr.bf16.mxu0 0
  %772 = vmatpush1.bf16.msra.mxu0 0
  %773 = vmatprep.subr.bf16.mxu0 0
  %774 = vmatpush1.bf16.msra.mxu0 0
  %775 = vmatprep.subr.bf16.mxu0 0
  %776 = vmatpush1.bf16.msra.mxu0 0
  %777 = vmatprep.subr.bf16.mxu0 0
  %778 = vmatpush1.bf16.msra.mxu0 0
  %779 = vmatprep.subr.bf16.mxu0 0
  %780 = vmatpush1.bf16.msra.mxu0 0
  %781 = vmatprep.subr.bf16.mxu0 0
  %782 = vmatpush1.bf16.msra.mxu0 0
  %783 = vmatprep.subr.bf16.mxu0 0
  %784 = vmatpush1.bf16.msra.mxu0 0
  %785 = vmatprep.subr.bf16.mxu0 0
  %786 = vmatpush1.bf16.msra.mxu0 0
  %787 = vmatprep.subr.bf16.mxu0 0
  %788 = vmatpush1.bf16.msra.mxu0 0
  %789 = vmatprep.subr.bf16.mxu0 0
  %790 = vmatpush1.bf16.msra.mxu0 0
  %791 = vmatprep.subr.bf16.mxu0 0
  %792 = vmatpush1.bf16.msra.mxu0 0
  %793 = vmatprep.subr.bf16.mxu0 0
  %794 = vmatpush1.bf16.msra.mxu0 0
  %795 = vmatprep.mubr.bf16.mxu0 0
  %796 = vmatmul.mubr.bf16.gmra.mrb[0].mxu0 %v740
  %v797 = vpop.f32.mrb[0].mxu0
  %v798 = vadd.f32 0.0, %v797
  %v799 = vpop.f32.mrb[0].mxu0
  %v800 = vpop.f32.mrb[0].mxu0
  %v801 = vadd.f32 0.0, %v800
  %v802 = vpop.f32.mrb[0].mxu0
  %803 = vmatprep.mubr.bf16.mxu0 0
  %804 = vmatmul.mubr.bf16.gmra.mrb[0].mxu0 %v743
  %v805 = vpop.f32.mrb[0].mxu0
  %v806 = vadd.f32 0.0, %v805
  %v807 = vpop.f32.mrb[0].mxu0
  %v808 = vpop.f32.mrb[0].mxu0
  %v809 = vadd.f32 0.0, %v808
  %v810 = vpop.f32.mrb[0].mxu0
  %811 = vmatprep.mubr.bf16.mxu0 0
  %812 = vmatmul.mubr.bf16.gmra.mrb[0].mxu0 %v746
  %v813 = vpop.f32.mrb[0].mxu0
  %v814 = vadd.f32 0.0, %v813
  %v815 = vpop.f32.mrb[0].mxu0
  %v816 = vpop.f32.mrb[0].mxu0
  %v817 = vadd.f32 0.0, %v816
  %v818 = vpop.f32.mrb[0].mxu0
  %819 = vmatprep.mubr.bf16.mxu0 0
  %820 = vmatmul.mubr.bf16.gmra.mrb[0].mxu0 %v749
  %v821 = vpop.f32.mrb[0].mxu0
  %v822 = vadd.f32 0.0, %v821
  %v823 = vpop.f32.mrb[0].mxu0
  %v824 = vpop.f32.mrb[0].mxu0
  %v825 = vadd.f32 0.0, %v824
  %v826 = vpop.f32.mrb[0].mxu0
  %827 = vmatprep.mubr.bf16.mxu0 0
  %828 = vmatmul.mubr.bf16.gmra.mrb[0].mxu0 %v752
  %v829 = vpop.f32.mrb[0].mxu0
  %v830 = vadd.f32 0.0, %v829
  %v831 = vpop.f32.mrb[0].mxu0
  %v832 = vpop.f32.mrb[0].mxu0
  %v833 = vadd.f32 0.0, %v832
  %v834 = vpop.f32.mrb[0].mxu0
  %835 = vmatprep.mubr.bf16.mxu0 0
  %836 = vmatmul.mubr.bf16.gmra.mrb[0].mxu0 %v755
  %v837 = vpop.f32.mrb[0].mxu0
  %v838 = vadd.f32 0.0, %v837
  %v839 = vpop.f32.mrb[0].mxu0
  %v840 = vpop.f32.mrb[0].mxu0
  %v841 = vadd.f32 0.0, %v840
  %v842 = vpop.f32.mrb[0].mxu0
  %843 = vmatprep.mubr.bf16.mxu0 0
  %844 = vmatmul.mubr.bf16.gmra.mrb[0].mxu0 %v758
  %v845 = vpop.f32.mrb[0].mxu0
  %v846 = vadd.f32 0.0, %v845
  %v847 = vpop.f32.mrb[0].mxu0
  %v848 = vpop.f32.mrb[0].mxu0
  %v849 = vadd.f32 0.0, %v848
  %v850 = vpop.f32.mrb[0].mxu0
  %851 = vmatprep.mubr.bf16.mxu0 0
  %852 = vmatmul.mubr.bf16.gmra.mrb[0].mxu0 %v761
  %v853 = vpop.f32.mrb[0].mxu0
  %v854 = vadd.f32 0.0, %v853
  %v855 = vpop.f32.mrb[0].mxu0
  %v856 = vpop.f32.mrb[0].mxu0
  %v857 = vadd.f32 0.0, %v856
  %v858 = vpop.f32.mrb[0].mxu0
  %859 = vdwg.mxu0
  %v860 = vadd.f32 %v682, %v798
  %v861 = vadd.f32 %v683, %v801
  %v862 = vadd.f32 %v684, %v806
  %v863 = vadd.f32 %v685, %v809
  %v864 = vadd.f32 %v686, %v814
  %v865 = vadd.f32 %v687, %v817
  %v866 = vadd.f32 %v688, %v822
  %v867 = vadd.f32 %v689, %v825
  %v868 = vadd.f32 %v690, %v830
  %v869 = vadd.f32 %v691, %v833
  %v870 = vadd.f32 %v692, %v838
  %v871 = vadd.f32 %v693, %v841
  %v872 = vadd.f32 %v694, %v846
  %v873 = vadd.f32 %v695, %v849
  %v874 = vadd.f32 %v696, %v854
  %v875 = vadd.f32 %v697, %v857
  %v876 = vld [vmem:[%s519 + $0x2] sm:$0xff]
  %v877 = vld [vmem:[%s519 + $0x12] sm:$0xff]
  %v878 = vld [vmem:[%s519 + $0x22] sm:$0xff]
  %v879 = vld [vmem:[%s519 + $0x32] sm:$0xff]
  %v880 = vld [vmem:[%s519 + $0x42] sm:$0xff]
  %v881 = vld [vmem:[%s519 + $0x52] sm:$0xff]
  %v882 = vld [vmem:[%s519 + $0x62] sm:$0xff]
  %v883 = vld [vmem:[%s519 + $0x72] sm:$0xff]
  %v884 = vld [vmem:[%s519 + $0xa2] sm:$0xff]
  %v885 = vld [vmem:[%s519 + $0xb2] sm:$0xff]
  %v886 = vld [vmem:[%s519 + $0xc2] sm:$0xff]
  %v887 = vld [vmem:[%s519 + $0xd2] sm:$0xff]
  %v888 = vld [vmem:[%s519 + $0xe2] sm:$0xff]
  %v889 = vld [vmem:[%s519 + $0xf2] sm:$0xff]
  %v890 = vld [vmem:[%s519 + $0x102] sm:$0xff]
  %v891 = vld [vmem:[%s519 + $0x112] sm:$0xff]
  %v892 = vpack.c.bf16 %v877, %v876
  %v893 = vpack.c.bf16 %v879, %v878
  %v894 = vpack.c.bf16 %v881, %v880
  %v895 = vpack.c.bf16 %v883, %v882
  %v896 = vpack.c.bf16 %v885, %v884
  %v897 = vpack.c.bf16 %v887, %v886
  %v898 = vpack.c.bf16 %v889, %v888
  %v899 = vpack.c.bf16 %v891, %v890
  %s900 = scalar_lea.vmem %s1, 80
  %v901 = vld [vmem:[%s900] sm:$0xf]
  %v902 = vld [vmem:[%s900 + $0x4] sm:$0xf]
  %v903 = vld [vmem:[%s900 + $0x8] sm:$0xf]
  %v904 = vld [vmem:[%s900 + $0xc] sm:$0xf]
  %v909 = vunpack.c.l.b16 %v901
  %v910 = vunpack.c.l.b16 %v902
  %v911 = vunpack.c.l.b16 %v903
  %v912 = vunpack.c.l.b16 %v904
  %v913 = vpack.c.b16 %v910, %v909
  %v914 = vpack.c.b16 %v912, %v911
  %v918 = vsel %vm86, %v892, 0
  %v921 = vsel %vm86, %v893, 0
  %v924 = vsel %vm86, %v894, 0
  %v927 = vsel %vm86, %v895, 0
  %v930 = vsel %vm86, %v896, 0
  %v933 = vsel %vm86, %v897, 0
  %v936 = vsel %vm86, %v898, 0
  %v939 = vsel %vm86, %v899, 0
  %941 = vmatprep.subr.bf16.mxu0 0
  %942 = vmatpush1.bf16.msra.mxu0 %v913
  %943 = vmatprep.subr.bf16.mxu0 0
  %944 = vmatpush1.bf16.msra.mxu0 %v914
  %945 = vmatprep.subr.bf16.mxu0 0
  %946 = vmatpush1.bf16.msra.mxu0 0
  %947 = vmatprep.subr.bf16.mxu0 0
  %948 = vmatpush1.bf16.msra.mxu0 0
  %949 = vmatprep.subr.bf16.mxu0 0
  %950 = vmatpush1.bf16.msra.mxu0 0
  %951 = vmatprep.subr.bf16.mxu0 0
  %952 = vmatpush1.bf16.msra.mxu0 0
  %953 = vmatprep.subr.bf16.mxu0 0
  %954 = vmatpush1.bf16.msra.mxu0 0
  %955 = vmatprep.subr.bf16.mxu0 0
  %956 = vmatpush1.bf16.msra.mxu0 0
  %957 = vmatprep.subr.bf16.mxu0 0
  %958 = vmatpush1.bf16.msra.mxu0 0
  %959 = vmatprep.subr.bf16.mxu0 0
  %960 = vmatpush1.bf16.msra.mxu0 0
  %961 = vmatprep.subr.bf16.mxu0 0
  %962 = vmatpush1.bf16.msra.mxu0 0
  %963 = vmatprep.subr.bf16.mxu0 0
  %964 = vmatpush1.bf16.msra.mxu0 0
  %965 = vmatprep.subr.bf16.mxu0 0
  %966 = vmatpush1.bf16.msra.mxu0 0
  %967 = vmatprep.subr.bf16.mxu0 0
  %968 = vmatpush1.bf16.msra.mxu0 0
  %969 = vmatprep.subr.bf16.mxu0 0
  %970 = vmatpush1.bf16.msra.mxu0 0
  %971 = vmatprep.subr.bf16.mxu0 0
  %972 = vmatpush1.bf16.msra.mxu0 0
  %973 = vmatprep.mubr.bf16.mxu0 0
  %974 = vmatmul.mubr.bf16.gmra.mrb[0].mxu0 %v918
  %v975 = vpop.f32.mrb[0].mxu0
  %v976 = vadd.f32 0.0, %v975
  %v977 = vpop.f32.mrb[0].mxu0
  %v978 = vpop.f32.mrb[0].mxu0
  %v979 = vadd.f32 0.0, %v978
  %v980 = vpop.f32.mrb[0].mxu0
  %981 = vmatprep.mubr.bf16.mxu0 0
  %982 = vmatmul.mubr.bf16.gmra.mrb[0].mxu0 %v921
  %v983 = vpop.f32.mrb[0].mxu0
  %v984 = vadd.f32 0.0, %v983
  %v985 = vpop.f32.mrb[0].mxu0
  %v986 = vpop.f32.mrb[0].mxu0
  %v987 = vadd.f32 0.0, %v986
  %v988 = vpop.f32.mrb[0].mxu0
  %989 = vmatprep.mubr.bf16.mxu0 0
  %990 = vmatmul.mubr.bf16.gmra.mrb[0].mxu0 %v924
  %v991 = vpop.f32.mrb[0].mxu0
  %v992 = vadd.f32 0.0, %v991
  %v993 = vpop.f32.mrb[0].mxu0
  %v994 = vpop.f32.mrb[0].mxu0
  %v995 = vadd.f32 0.0, %v994
  %v996 = vpop.f32.mrb[0].mxu0
  %997 = vmatprep.mubr.bf16.mxu0 0
  %998 = vmatmul.mubr.bf16.gmra.mrb[0].mxu0 %v927
  %v999 = vpop.f32.mrb[0].mxu0
  %v1000 = vadd.f32 0.0, %v999
  %v1001 = vpop.f32.mrb[0].mxu0
  %v1002 = vpop.f32.mrb[0].mxu0
  %v1003 = vadd.f32 0.0, %v1002
  %v1004 = vpop.f32.mrb[0].mxu0
  %1005 = vmatprep.mubr.bf16.mxu0 0
  %1006 = vmatmul.mubr.bf16.gmra.mrb[0].mxu0 %v930
  %v1007 = vpop.f32.mrb[0].mxu0
  %v1008 = vadd.f32 0.0, %v1007
  %v1009 = vpop.f32.mrb[0].mxu0
  %v1010 = vpop.f32.mrb[0].mxu0
  %v1011 = vadd.f32 0.0, %v1010
  %v1012 = vpop.f32.mrb[0].mxu0
  %1013 = vmatprep.mubr.bf16.mxu0 0
  %1014 = vmatmul.mubr.bf16.gmra.mrb[0].mxu0 %v933
  %v1015 = vpop.f32.mrb[0].mxu0
  %v1016 = vadd.f32 0.0, %v1015
  %v1017 = vpop.f32.mrb[0].mxu0
  %v1018 = vpop.f32.mrb[0].mxu0
  %v1019 = vadd.f32 0.0, %v1018
  %v1020 = vpop.f32.mrb[0].mxu0
  %1021 = vmatprep.mubr.bf16.mxu0 0
  %1022 = vmatmul.mubr.bf16.gmra.mrb[0].mxu0 %v936
  %v1023 = vpop.f32.mrb[0].mxu0
  %v1024 = vadd.f32 0.0, %v1023
  %v1025 = vpop.f32.mrb[0].mxu0
  %v1026 = vpop.f32.mrb[0].mxu0
  %v1027 = vadd.f32 0.0, %v1026
  %v1028 = vpop.f32.mrb[0].mxu0
  %1029 = vmatprep.mubr.bf16.mxu0 0
  %1030 = vmatmul.mubr.bf16.gmra.mrb[0].mxu0 %v939
  %v1031 = vpop.f32.mrb[0].mxu0
  %v1032 = vadd.f32 0.0, %v1031
  %v1033 = vpop.f32.mrb[0].mxu0
  %v1034 = vpop.f32.mrb[0].mxu0
  %v1035 = vadd.f32 0.0, %v1034
  %v1036 = vpop.f32.mrb[0].mxu0
  %1037 = vdwg.mxu0
  %v1038 = vadd.f32 %v860, %v976
  %v1039 = vadd.f32 %v861, %v979
  %v1040 = vadd.f32 %v862, %v984
  %v1041 = vadd.f32 %v863, %v987
  %v1042 = vadd.f32 %v864, %v992
  %v1043 = vadd.f32 %v865, %v995
  %v1044 = vadd.f32 %v866, %v1000
  %v1045 = vadd.f32 %v867, %v1003
  %v1046 = vadd.f32 %v868, %v1008
  %v1047 = vadd.f32 %v869, %v1011
  %v1048 = vadd.f32 %v870, %v1016
  %v1049 = vadd.f32 %v871, %v1019
  %v1050 = vadd.f32 %v872, %v1024
  %v1051 = vadd.f32 %v873, %v1027
  %v1052 = vadd.f32 %v874, %v1032
  %v1053 = vadd.f32 %v875, %v1035
  %s1054 = scalar_lea.vmem %s0, 32
  %v1055 = vld [vmem:[%s1054] sm:$0xff]
  %v1056 = vld [vmem:[%s1054 + $0x10] sm:$0xff]
  %v1057 = vld [vmem:[%s1054 + $0x20] sm:$0xff]
  %v1058 = vld [vmem:[%s1054 + $0x30] sm:$0xff]
  %v1059 = vld [vmem:[%s1054 + $0x40] sm:$0xff]
  %v1060 = vld [vmem:[%s1054 + $0x50] sm:$0xff]
  %v1061 = vld [vmem:[%s1054 + $0x60] sm:$0xff]
  %v1062 = vld [vmem:[%s1054 + $0x70] sm:$0xff]
  %v1063 = vld [vmem:[%s1054 + $0xa0] sm:$0xff]
  %v1064 = vld [vmem:[%s1054 + $0xb0] sm:$0xff]
  %v1065 = vld [vmem:[%s1054 + $0xc0] sm:$0xff]
  %v1066 = vld [vmem:[%s1054 + $0xd0] sm:$0xff]
  %v1067 = vld [vmem:[%s1054 + $0xe0] sm:$0xff]
  %v1068 = vld [vmem:[%s1054 + $0xf0] sm:$0xff]
  %v1069 = vld [vmem:[%s1054 + $0x100] sm:$0xff]
  %v1070 = vld [vmem:[%s1054 + $0x110] sm:$0xff]
  %v1071 = vpack.c.bf16 %v1056, %v1055
  %v1072 = vpack.c.bf16 %v1058, %v1057
  %v1073 = vpack.c.bf16 %v1060, %v1059
  %v1074 = vpack.c.bf16 %v1062, %v1061
  %v1075 = vpack.c.bf16 %v1064, %v1063
  %v1076 = vpack.c.bf16 %v1066, %v1065
  %v1077 = vpack.c.bf16 %v1068, %v1067
  %v1078 = vpack.c.bf16 %v1070, %v1069
  %s1079 = scalar_lea.vmem %s1, 96
  %v1080 = vld [vmem:[%s1079] sm:$0xf]
  %v1081 = vld [vmem:[%s1079 + $0x4] sm:$0xf]
  %v1082 = vld [vmem:[%s1079 + $0x8] sm:$0xf]
  %v1083 = vld [vmem:[%s1079 + $0xc] sm:$0xf]
  %v1088 = vunpack.c.l.b16 %v1080
  %v1089 = vunpack.c.l.b16 %v1081
  %v1090 = vunpack.c.l.b16 %v1082
  %v1091 = vunpack.c.l.b16 %v1083
  %v1092 = vpack.c.b16 %v1089, %v1088
  %v1093 = vpack.c.b16 %v1091, %v1090
  %v1097 = vsel %vm86, %v1071, 0
  %v1100 = vsel %vm86, %v1072, 0
  %v1103 = vsel %vm86, %v1073, 0
  %v1106 = vsel %vm86, %v1074, 0
  %v1109 = vsel %vm86, %v1075, 0
  %v1112 = vsel %vm86, %v1076, 0
  %v1115 = vsel %vm86, %v1077, 0
  %v1118 = vsel %vm86, %v1078, 0
  %1120 = vmatprep.subr.bf16.mxu0 0
  %1121 = vmatpush1.bf16.msra.mxu0 %v1092
  %1122 = vmatprep.subr.bf16.mxu0 0
  %1123 = vmatpush1.bf16.msra.mxu0 %v1093
  %1124 = vmatprep.subr.bf16.mxu0 0
  %1125 = vmatpush1.bf16.msra.mxu0 0
  %1126 = vmatprep.subr.bf16.mxu0 0
  %1127 = vmatpush1.bf16.msra.mxu0 0
  %1128 = vmatprep.subr.bf16.mxu0 0
  %1129 = vmatpush1.bf16.msra.mxu0 0
  %1130 = vmatprep.subr.bf16.mxu0 0
  %1131 = vmatpush1.bf16.msra.mxu0 0
  %1132 = vmatprep.subr.bf16.mxu0 0
  %1133 = vmatpush1.bf16.msra.mxu0 0
  %1134 = vmatprep.subr.bf16.mxu0 0
  %1135 = vmatpush1.bf16.msra.mxu0 0
  %1136 = vmatprep.subr.bf16.mxu0 0
  %1137 = vmatpush1.bf16.msra.mxu0 0
  %1138 = vmatprep.subr.bf16.mxu0 0
  %1139 = vmatpush1.bf16.msra.mxu0 0
  %1140 = vmatprep.subr.bf16.mxu0 0
  %1141 = vmatpush1.bf16.msra.mxu0 0
  %1142 = vmatprep.subr.bf16.mxu0 0
  %1143 = vmatpush1.bf16.msra.mxu0 0
  %1144 = vmatprep.subr.bf16.mxu0 0
  %1145 = vmatpush1.bf16.msra.mxu0 0
  %1146 = vmatprep.subr.bf16.mxu0 0
  %1147 = vmatpush1.bf16.msra.mxu0 0
  %1148 = vmatprep.subr.bf16.mxu0 0
  %1149 = vmatpush1.bf16.msra.mxu0 0
  %1150 = vmatprep.subr.bf16.mxu0 0
  %1151 = vmatpush1.bf16.msra.mxu0 0
  %1152 = vmatprep.mubr.bf16.mxu0 0
  %1153 = vmatmul.mubr.bf16.gmra.mrb[0].mxu0 %v1097
  %v1154 = vpop.f32.mrb[0].mxu0
  %v1155 = vadd.f32 0.0, %v1154
  %v1156 = vpop.f32.mrb[0].mxu0
  %v1157 = vpop.f32.mrb[0].mxu0
  %v1158 = vadd.f32 0.0, %v1157
  %v1159 = vpop.f32.mrb[0].mxu0
  %1160 = vmatprep.mubr.bf16.mxu0 0
  %1161 = vmatmul.mubr.bf16.gmra.mrb[0].mxu0 %v1100
  %v1162 = vpop.f32.mrb[0].mxu0
  %v1163 = vadd.f32 0.0, %v1162
  %v1164 = vpop.f32.mrb[0].mxu0
  %v1165 = vpop.f32.mrb[0].mxu0
  %v1166 = vadd.f32 0.0, %v1165
  %v1167 = vpop.f32.mrb[0].mxu0
  %1168 = vmatprep.mubr.bf16.mxu0 0
  %1169 = vmatmul.mubr.bf16.gmra.mrb[0].mxu0 %v1103
  %v1170 = vpop.f32.mrb[0].mxu0
  %v1171 = vadd.f32 0.0, %v1170
  %v1172 = vpop.f32.mrb[0].mxu0
  %v1173 = vpop.f32.mrb[0].mxu0
  %v1174 = vadd.f32 0.0, %v1173
  %v1175 = vpop.f32.mrb[0].mxu0
  %1176 = vmatprep.mubr.bf16.mxu0 0
  %1177 = vmatmul.mubr.bf16.gmra.mrb[0].mxu0 %v1106
  %v1178 = vpop.f32.mrb[0].mxu0
  %v1179 = vadd.f32 0.0, %v1178
  %v1180 = vpop.f32.mrb[0].mxu0
  %v1181 = vpop.f32.mrb[0].mxu0
  %v1182 = vadd.f32 0.0, %v1181
  %v1183 = vpop.f32.mrb[0].mxu0
  %1184 = vmatprep.mubr.bf16.mxu0 0
  %1185 = vmatmul.mubr.bf16.gmra.mrb[0].mxu0 %v1109
  %v1186 = vpop.f32.mrb[0].mxu0
  %v1187 = vadd.f32 0.0, %v1186
  %v1188 = vpop.f32.mrb[0].mxu0
  %v1189 = vpop.f32.mrb[0].mxu0
  %v1190 = vadd.f32 0.0, %v1189
  %v1191 = vpop.f32.mrb[0].mxu0
  %1192 = vmatprep.mubr.bf16.mxu0 0
  %1193 = vmatmul.mubr.bf16.gmra.mrb[0].mxu0 %v1112
  %v1194 = vpop.f32.mrb[0].mxu0
  %v1195 = vadd.f32 0.0, %v1194
  %v1196 = vpop.f32.mrb[0].mxu0
  %v1197 = vpop.f32.mrb[0].mxu0
  %v1198 = vadd.f32 0.0, %v1197
  %v1199 = vpop.f32.mrb[0].mxu0
  %1200 = vmatprep.mubr.bf16.mxu0 0
  %1201 = vmatmul.mubr.bf16.gmra.mrb[0].mxu0 %v1115
  %v1202 = vpop.f32.mrb[0].mxu0
  %v1203 = vadd.f32 0.0, %v1202
  %v1204 = vpop.f32.mrb[0].mxu0
  %v1205 = vpop.f32.mrb[0].mxu0
  %v1206 = vadd.f32 0.0, %v1205
  %v1207 = vpop.f32.mrb[0].mxu0
  %1208 = vmatprep.mubr.bf16.mxu0 0
  %1209 = vmatmul.mubr.bf16.gmra.mrb[0].mxu0 %v1118
  %v1210 = vpop.f32.mrb[0].mxu0
  %v1211 = vadd.f32 0.0, %v1210
  %v1212 = vpop.f32.mrb[0].mxu0
  %v1213 = vpop.f32.mrb[0].mxu0
  %v1214 = vadd.f32 0.0, %v1213
  %v1215 = vpop.f32.mrb[0].mxu0
  %1216 = vdwg.mxu0
  %v1217 = vadd.f32 %v1038, %v1155
  %v1218 = vadd.f32 %v1039, %v1158
  %v1219 = vadd.f32 %v1040, %v1163
  %v1220 = vadd.f32 %v1041, %v1166
  %v1221 = vadd.f32 %v1042, %v1171
  %v1222 = vadd.f32 %v1043, %v1174
  %v1223 = vadd.f32 %v1044, %v1179
  %v1224 = vadd.f32 %v1045, %v1182
  %v1225 = vadd.f32 %v1046, %v1187
  %v1226 = vadd.f32 %v1047, %v1190
  %v1227 = vadd.f32 %v1048, %v1195
  %v1228 = vadd.f32 %v1049, %v1198
  %v1229 = vadd.f32 %v1050, %v1203
  %v1230 = vadd.f32 %v1051, %v1206
  %v1231 = vadd.f32 %v1052, %v1211
  %v1232 = vadd.f32 %v1053, %v1214
  %v1233 = vld [vmem:[%s1054 + $0x1] sm:$0xff]
  %v1234 = vld [vmem:[%s1054 + $0x11] sm:$0xff]
  %v1235 = vld [vmem:[%s1054 + $0x21] sm:$0xff]
  %v1236 = vld [vmem:[%s1054 + $0x31] sm:$0xff]
  %v1237 = vld [vmem:[%s1054 + $0x41] sm:$0xff]
  %v1238 = vld [vmem:[%s1054 + $0x51] sm:$0xff]
  %v1239 = vld [vmem:[%s1054 + $0x61] sm:$0xff]
  %v1240 = vld [vmem:[%s1054 + $0x71] sm:$0xff]
  %v1241 = vld [vmem:[%s1054 + $0xa1] sm:$0xff]
  %v1242 = vld [vmem:[%s1054 + $0xb1] sm:$0xff]
  %v1243 = vld [vmem:[%s1054 + $0xc1] sm:$0xff]
  %v1244 = vld [vmem:[%s1054 + $0xd1] sm:$0xff]
  %v1245 = vld [vmem:[%s1054 + $0xe1] sm:$0xff]
  %v1246 = vld [vmem:[%s1054 + $0xf1] sm:$0xff]
  %v1247 = vld [vmem:[%s1054 + $0x101] sm:$0xff]
  %v1248 = vld [vmem:[%s1054 + $0x111] sm:$0xff]
  %v1249 = vpack.c.bf16 %v1234, %v1233
  %v1250 = vpack.c.bf16 %v1236, %v1235
  %v1251 = vpack.c.bf16 %v1238, %v1237
  %v1252 = vpack.c.bf16 %v1240, %v1239
  %v1253 = vpack.c.bf16 %v1242, %v1241
  %v1254 = vpack.c.bf16 %v1244, %v1243
  %v1255 = vpack.c.bf16 %v1246, %v1245
  %v1256 = vpack.c.bf16 %v1248, %v1247
  %s1257 = scalar_lea.vmem %s1, 112
  %v1258 = vld [vmem:[%s1257] sm:$0xf]
  %v1259 = vld [vmem:[%s1257 + $0x4] sm:$0xf]
  %v1260 = vld [vmem:[%s1257 + $0x8] sm:$0xf]
  %v1261 = vld [vmem:[%s1257 + $0xc] sm:$0xf]
  %v1266 = vunpack.c.l.b16 %v1258
  %v1267 = vunpack.c.l.b16 %v1259
  %v1268 = vunpack.c.l.b16 %v1260
  %v1269 = vunpack.c.l.b16 %v1261
  %v1270 = vpack.c.b16 %v1267, %v1266
  %v1271 = vpack.c.b16 %v1269, %v1268
  %v1275 = vsel %vm86, %v1249, 0
  %v1278 = vsel %vm86, %v1250, 0
  %v1281 = vsel %vm86, %v1251, 0
  %v1284 = vsel %vm86, %v1252, 0
  %v1287 = vsel %vm86, %v1253, 0
  %v1290 = vsel %vm86, %v1254, 0
  %v1293 = vsel %vm86, %v1255, 0
  %v1296 = vsel %vm86, %v1256, 0
  %1298 = vmatprep.subr.bf16.mxu0 0
  %1299 = vmatpush1.bf16.msra.mxu0 %v1270
  %1300 = vmatprep.subr.bf16.mxu0 0
  %1301 = vmatpush1.bf16.msra.mxu0 %v1271
  %1302 = vmatprep.subr.bf16.mxu0 0
  %1303 = vmatpush1.bf16.msra.mxu0 0
  %1304 = vmatprep.subr.bf16.mxu0 0
  %1305 = vmatpush1.bf16.msra.mxu0 0
  %1306 = vmatprep.subr.bf16.mxu0 0
  %1307 = vmatpush1.bf16.msra.mxu0 0
  %1308 = vmatprep.subr.bf16.mxu0 0
  %1309 = vmatpush1.bf16.msra.mxu0 0
  %1310 = vmatprep.subr.bf16.mxu0 0
  %1311 = vmatpush1.bf16.msra.mxu0 0
  %1312 = vmatprep.subr.bf16.mxu0 0
  %1313 = vmatpush1.bf16.msra.mxu0 0
  %1314 = vmatprep.subr.bf16.mxu0 0
  %1315 = vmatpush1.bf16.msra.mxu0 0
  %1316 = vmatprep.subr.bf16.mxu0 0
  %1317 = vmatpush1.bf16.msra.mxu0 0
  %1318 = vmatprep.subr.bf16.mxu0 0
  %1319 = vmatpush1.bf16.msra.mxu0 0
  %1320 = vmatprep.subr.bf16.mxu0 0
  %1321 = vmatpush1.bf16.msra.mxu0 0
  %1322 = vmatprep.subr.bf16.mxu0 0
  %1323 = vmatpush1.bf16.msra.mxu0 0
  %1324 = vmatprep.subr.bf16.mxu0 0
  %1325 = vmatpush1.bf16.msra.mxu0 0
  %1326 = vmatprep.subr.bf16.mxu0 0
  %1327 = vmatpush1.bf16.msra.mxu0 0
  %1328 = vmatprep.subr.bf16.mxu0 0
  %1329 = vmatpush1.bf16.msra.mxu0 0
  %1330 = vmatprep.mubr.bf16.mxu0 0
  %1331 = vmatmul.mubr.bf16.gmra.mrb[0].mxu0 %v1275
  %v1332 = vpop.f32.mrb[0].mxu0
  %v1333 = vadd.f32 0.0, %v1332
  %v1334 = vpop.f32.mrb[0].mxu0
  %v1335 = vpop.f32.mrb[0].mxu0
  %v1336 = vadd.f32 0.0, %v1335
  %v1337 = vpop.f32.mrb[0].mxu0
  %1338 = vmatprep.mubr.bf16.mxu0 0
  %1339 = vmatmul.mubr.bf16.gmra.mrb[0].mxu0 %v1278
  %v1340 = vpop.f32.mrb[0].mxu0
  %v1341 = vadd.f32 0.0, %v1340
  %v1342 = vpop.f32.mrb[0].mxu0
  %v1343 = vpop.f32.mrb[0].mxu0
  %v1344 = vadd.f32 0.0, %v1343
  %v1345 = vpop.f32.mrb[0].mxu0
  %1346 = vmatprep.mubr.bf16.mxu0 0
  %1347 = vmatmul.mubr.bf16.gmra.mrb[0].mxu0 %v1281
  %v1348 = vpop.f32.mrb[0].mxu0
  %v1349 = vadd.f32 0.0, %v1348
  %v1350 = vpop.f32.mrb[0].mxu0
  %v1351 = vpop.f32.mrb[0].mxu0
  %v1352 = vadd.f32 0.0, %v1351
  %v1353 = vpop.f32.mrb[0].mxu0
  %1354 = vmatprep.mubr.bf16.mxu0 0
  %1355 = vmatmul.mubr.bf16.gmra.mrb[0].mxu0 %v1284
  %v1356 = vpop.f32.mrb[0].mxu0
  %v1357 = vadd.f32 0.0, %v1356
  %v1358 = vpop.f32.mrb[0].mxu0
  %v1359 = vpop.f32.mrb[0].mxu0
  %v1360 = vadd.f32 0.0, %v1359
  %v1361 = vpop.f32.mrb[0].mxu0
  %1362 = vmatprep.mubr.bf16.mxu0 0
  %1363 = vmatmul.mubr.bf16.gmra.mrb[0].mxu0 %v1287
  %v1364 = vpop.f32.mrb[0].mxu0
  %v1365 = vadd.f32 0.0, %v1364
  %v1366 = vpop.f32.mrb[0].mxu0
  %v1367 = vpop.f32.mrb[0].mxu0
  %v1368 = vadd.f32 0.0, %v1367
  %v1369 = vpop.f32.mrb[0].mxu0
  %1370 = vmatprep.mubr.bf16.mxu0 0
  %1371 = vmatmul.mubr.bf16.gmra.mrb[0].mxu0 %v1290
  %v1372 = vpop.f32.mrb[0].mxu0
  %v1373 = vadd.f32 0.0, %v1372
  %v1374 = vpop.f32.mrb[0].mxu0
  %v1375 = vpop.f32.mrb[0].mxu0
  %v1376 = vadd.f32 0.0, %v1375
  %v1377 = vpop.f32.mrb[0].mxu0
  %1378 = vmatprep.mubr.bf16.mxu0 0
  %1379 = vmatmul.mubr.bf16.gmra.mrb[0].mxu0 %v1293
  %v1380 = vpop.f32.mrb[0].mxu0
  %v1381 = vadd.f32 0.0, %v1380
  %v1382 = vpop.f32.mrb[0].mxu0
  %v1383 = vpop.f32.mrb[0].mxu0
  %v1384 = vadd.f32 0.0, %v1383
  %v1385 = vpop.f32.mrb[0].mxu0
  %1386 = vmatprep.mubr.bf16.mxu0 0
  %1387 = vmatmul.mubr.bf16.gmra.mrb[0].mxu0 %v1296
  %v1388 = vpop.f32.mrb[0].mxu0
  %v1389 = vadd.f32 0.0, %v1388
  %v1390 = vpop.f32.mrb[0].mxu0
  %v1391 = vpop.f32.mrb[0].mxu0
  %v1392 = vadd.f32 0.0, %v1391
  %v1393 = vpop.f32.mrb[0].mxu0
  %1394 = vdwg.mxu0
  %v1395 = vadd.f32 %v1217, %v1333
  %v1396 = vadd.f32 %v1218, %v1336
  %v1397 = vadd.f32 %v1219, %v1341
  %v1398 = vadd.f32 %v1220, %v1344
  %v1399 = vadd.f32 %v1221, %v1349
  %v1400 = vadd.f32 %v1222, %v1352
  %v1401 = vadd.f32 %v1223, %v1357
  %v1402 = vadd.f32 %v1224, %v1360
  %v1403 = vadd.f32 %v1225, %v1365
  %v1404 = vadd.f32 %v1226, %v1368
  %v1405 = vadd.f32 %v1227, %v1373
  %v1406 = vadd.f32 %v1228, %v1376
  %v1407 = vadd.f32 %v1229, %v1381
  %v1408 = vadd.f32 %v1230, %v1384
  %v1409 = vadd.f32 %v1231, %v1389
  %v1410 = vadd.f32 %v1232, %v1392
  %v1411 = vld [vmem:[%s1054 + $0x2] sm:$0xff]
  %v1412 = vld [vmem:[%s1054 + $0x12] sm:$0xff]
  %v1413 = vld [vmem:[%s1054 + $0x22] sm:$0xff]
  %v1414 = vld [vmem:[%s1054 + $0x32] sm:$0xff]
  %v1415 = vld [vmem:[%s1054 + $0x42] sm:$0xff]
  %v1416 = vld [vmem:[%s1054 + $0x52] sm:$0xff]
  %v1417 = vld [vmem:[%s1054 + $0x62] sm:$0xff]
  %v1418 = vld [vmem:[%s1054 + $0x72] sm:$0xff]
  %v1419 = vld [vmem:[%s1054 + $0xa2] sm:$0xff]
  %v1420 = vld [vmem:[%s1054 + $0xb2] sm:$0xff]
  %v1421 = vld [vmem:[%s1054 + $0xc2] sm:$0xff]
  %v1422 = vld [vmem:[%s1054 + $0xd2] sm:$0xff]
  %v1423 = vld [vmem:[%s1054 + $0xe2] sm:$0xff]
  %v1424 = vld [vmem:[%s1054 + $0xf2] sm:$0xff]
  %v1425 = vld [vmem:[%s1054 + $0x102] sm:$0xff]
  %v1426 = vld [vmem:[%s1054 + $0x112] sm:$0xff]
  %v1427 = vpack.c.bf16 %v1412, %v1411
  %v1428 = vpack.c.bf16 %v1414, %v1413
  %v1429 = vpack.c.bf16 %v1416, %v1415
  %v1430 = vpack.c.bf16 %v1418, %v1417
  %v1431 = vpack.c.bf16 %v1420, %v1419
  %v1432 = vpack.c.bf16 %v1422, %v1421
  %v1433 = vpack.c.bf16 %v1424, %v1423
  %v1434 = vpack.c.bf16 %v1426, %v1425
  %s1435 = scalar_lea.vmem %s1, 128
  %v1436 = vld [vmem:[%s1435] sm:$0xf]
  %v1437 = vld [vmem:[%s1435 + $0x4] sm:$0xf]
  %v1438 = vld [vmem:[%s1435 + $0x8] sm:$0xf]
  %v1439 = vld [vmem:[%s1435 + $0xc] sm:$0xf]
  %v1444 = vunpack.c.l.b16 %v1436
  %v1445 = vunpack.c.l.b16 %v1437
  %v1446 = vunpack.c.l.b16 %v1438
  %v1447 = vunpack.c.l.b16 %v1439
  %v1448 = vpack.c.b16 %v1445, %v1444
  %v1449 = vpack.c.b16 %v1447, %v1446
  %v1453 = vsel %vm86, %v1427, 0
  %v1456 = vsel %vm86, %v1428, 0
  %v1459 = vsel %vm86, %v1429, 0
  %v1462 = vsel %vm86, %v1430, 0
  %v1465 = vsel %vm86, %v1431, 0
  %v1468 = vsel %vm86, %v1432, 0
  %v1471 = vsel %vm86, %v1433, 0
  %v1474 = vsel %vm86, %v1434, 0
  %1476 = vmatprep.subr.bf16.mxu0 0
  %1477 = vmatpush1.bf16.msra.mxu0 %v1448
  %1478 = vmatprep.subr.bf16.mxu0 0
  %1479 = vmatpush1.bf16.msra.mxu0 %v1449
  %1480 = vmatprep.subr.bf16.mxu0 0
  %1481 = vmatpush1.bf16.msra.mxu0 0
  %1482 = vmatprep.subr.bf16.mxu0 0
  %1483 = vmatpush1.bf16.msra.mxu0 0
  %1484 = vmatprep.subr.bf16.mxu0 0
  %1485 = vmatpush1.bf16.msra.mxu0 0
  %1486 = vmatprep.subr.bf16.mxu0 0
  %1487 = vmatpush1.bf16.msra.mxu0 0
  %1488 = vmatprep.subr.bf16.mxu0 0
  %1489 = vmatpush1.bf16.msra.mxu0 0
  %1490 = vmatprep.subr.bf16.mxu0 0
  %1491 = vmatpush1.bf16.msra.mxu0 0
  %1492 = vmatprep.subr.bf16.mxu0 0
  %1493 = vmatpush1.bf16.msra.mxu0 0
  %1494 = vmatprep.subr.bf16.mxu0 0
  %1495 = vmatpush1.bf16.msra.mxu0 0
  %1496 = vmatprep.subr.bf16.mxu0 0
  %1497 = vmatpush1.bf16.msra.mxu0 0
  %1498 = vmatprep.subr.bf16.mxu0 0
  %1499 = vmatpush1.bf16.msra.mxu0 0
  %1500 = vmatprep.subr.bf16.mxu0 0
  %1501 = vmatpush1.bf16.msra.mxu0 0
  %1502 = vmatprep.subr.bf16.mxu0 0
  %1503 = vmatpush1.bf16.msra.mxu0 0
  %1504 = vmatprep.subr.bf16.mxu0 0
  %1505 = vmatpush1.bf16.msra.mxu0 0
  %1506 = vmatprep.subr.bf16.mxu0 0
  %1507 = vmatpush1.bf16.msra.mxu0 0
  %1508 = vmatprep.mubr.bf16.mxu0 0
  %1509 = vmatmul.mubr.bf16.gmra.mrb[0].mxu0 %v1453
  %v1510 = vpop.f32.mrb[0].mxu0
  %v1511 = vadd.f32 0.0, %v1510
  %v1512 = vpop.f32.mrb[0].mxu0
  %v1513 = vpop.f32.mrb[0].mxu0
  %v1514 = vadd.f32 0.0, %v1513
  %v1515 = vpop.f32.mrb[0].mxu0
  %1516 = vmatprep.mubr.bf16.mxu0 0
  %1517 = vmatmul.mubr.bf16.gmra.mrb[0].mxu0 %v1456
  %v1518 = vpop.f32.mrb[0].mxu0
  %v1519 = vadd.f32 0.0, %v1518
  %v1520 = vpop.f32.mrb[0].mxu0
  %v1521 = vpop.f32.mrb[0].mxu0
  %v1522 = vadd.f32 0.0, %v1521
  %v1523 = vpop.f32.mrb[0].mxu0
  %1524 = vmatprep.mubr.bf16.mxu0 0
  %1525 = vmatmul.mubr.bf16.gmra.mrb[0].mxu0 %v1459
  %v1526 = vpop.f32.mrb[0].mxu0
  %v1527 = vadd.f32 0.0, %v1526
  %v1528 = vpop.f32.mrb[0].mxu0
  %v1529 = vpop.f32.mrb[0].mxu0
  %v1530 = vadd.f32 0.0, %v1529
  %v1531 = vpop.f32.mrb[0].mxu0
  %1532 = vmatprep.mubr.bf16.mxu0 0
  %1533 = vmatmul.mubr.bf16.gmra.mrb[0].mxu0 %v1462
  %v1534 = vpop.f32.mrb[0].mxu0
  %v1535 = vadd.f32 0.0, %v1534
  %v1536 = vpop.f32.mrb[0].mxu0
  %v1537 = vpop.f32.mrb[0].mxu0
  %v1538 = vadd.f32 0.0, %v1537
  %v1539 = vpop.f32.mrb[0].mxu0
  %1540 = vmatprep.mubr.bf16.mxu0 0
  %1541 = vmatmul.mubr.bf16.gmra.mrb[0].mxu0 %v1465
  %v1542 = vpop.f32.mrb[0].mxu0
  %v1543 = vadd.f32 0.0, %v1542
  %v1544 = vpop.f32.mrb[0].mxu0
  %v1545 = vpop.f32.mrb[0].mxu0
  %v1546 = vadd.f32 0.0, %v1545
  %v1547 = vpop.f32.mrb[0].mxu0
  %1548 = vmatprep.mubr.bf16.mxu0 0
  %1549 = vmatmul.mubr.bf16.gmra.mrb[0].mxu0 %v1468
  %v1550 = vpop.f32.mrb[0].mxu0
  %v1551 = vadd.f32 0.0, %v1550
  %v1552 = vpop.f32.mrb[0].mxu0
  %v1553 = vpop.f32.mrb[0].mxu0
  %v1554 = vadd.f32 0.0, %v1553
  %v1555 = vpop.f32.mrb[0].mxu0
  %1556 = vmatprep.mubr.bf16.mxu0 0
  %1557 = vmatmul.mubr.bf16.gmra.mrb[0].mxu0 %v1471
  %v1558 = vpop.f32.mrb[0].mxu0
  %v1559 = vadd.f32 0.0, %v1558
  %v1560 = vpop.f32.mrb[0].mxu0
  %v1561 = vpop.f32.mrb[0].mxu0
  %v1562 = vadd.f32 0.0, %v1561
  %v1563 = vpop.f32.mrb[0].mxu0
  %1564 = vmatprep.mubr.bf16.mxu0 0
  %1565 = vmatmul.mubr.bf16.gmra.mrb[0].mxu0 %v1474
  %v1566 = vpop.f32.mrb[0].mxu0
  %v1567 = vadd.f32 0.0, %v1566
  %v1568 = vpop.f32.mrb[0].mxu0
  %v1569 = vpop.f32.mrb[0].mxu0
  %v1570 = vadd.f32 0.0, %v1569
  %v1571 = vpop.f32.mrb[0].mxu0
  %1572 = vdwg.mxu0
  %v1573 = vadd.f32 %v1395, %v1511
  %v1574 = vadd.f32 %v1396, %v1514
  %v1575 = vadd.f32 %v1397, %v1519
  %v1576 = vadd.f32 %v1398, %v1522
  %v1577 = vadd.f32 %v1399, %v1527
  %v1578 = vadd.f32 %v1400, %v1530
  %v1579 = vadd.f32 %v1401, %v1535
  %v1580 = vadd.f32 %v1402, %v1538
  %v1581 = vadd.f32 %v1403, %v1543
  %v1582 = vadd.f32 %v1404, %v1546
  %v1583 = vadd.f32 %v1405, %v1551
  %v1584 = vadd.f32 %v1406, %v1554
  %v1585 = vadd.f32 %v1407, %v1559
  %v1586 = vadd.f32 %v1408, %v1562
  %v1587 = vadd.f32 %v1409, %v1567
  %v1588 = vadd.f32 %v1410, %v1570
  %v1589 = vld [vmem:[%s2] sm:$0x1]
  %v1591 = vlaneseq
  %v1592 = vshrl.u32 %v1591, 7
  %v1593 = vsub.s32 0, %v1592
  %v1594 = vrot.slane %v1589, %v1593
  %v1596 = vadd.f32 %v1573, %v1594
  %v1597 = vadd.f32 %v1574, %v1594
  %v1598 = vadd.f32 %v1575, %v1594
  %v1599 = vadd.f32 %v1576, %v1594
  %v1600 = vadd.f32 %v1577, %v1594
  %v1601 = vadd.f32 %v1578, %v1594
  %v1602 = vadd.f32 %v1579, %v1594
  %v1603 = vadd.f32 %v1580, %v1594
  %v1604 = vadd.f32 %v1581, %v1594
  %v1605 = vadd.f32 %v1582, %v1594
  %v1606 = vadd.f32 %v1583, %v1594
  %v1607 = vadd.f32 %v1584, %v1594
  %v1608 = vadd.f32 %v1585, %v1594
  %v1609 = vadd.f32 %v1586, %v1594
  %v1610 = vadd.f32 %v1587, %v1594
  %v1611 = vadd.f32 %v1588, %v1594
  %1612 = vst [vmem:[%s3] sm:$0xff] %v1596
  %1613 = vst [vmem:[%s3 + $0x8] sm:$0xff] %v1597
  %1614 = vst [vmem:[%s3 + $0x10] sm:$0xff] %v1598
  %1615 = vst [vmem:[%s3 + $0x18] sm:$0xff] %v1599
  %1616 = vst [vmem:[%s3 + $0x20] sm:$0xff] %v1600
  %1617 = vst [vmem:[%s3 + $0x28] sm:$0xff] %v1601
  %1618 = vst [vmem:[%s3 + $0x30] sm:$0xff] %v1602
  %1619 = vst [vmem:[%s3 + $0x38] sm:$0xff] %v1603
  %1620 = vst [vmem:[%s3 + $0x40] sm:$0xff] %v1604
  %1621 = vst [vmem:[%s3 + $0x48] sm:$0xff] %v1605
  %1622 = vst [vmem:[%s3 + $0x50] sm:$0xff] %v1606
  %1623 = vst [vmem:[%s3 + $0x58] sm:$0xff] %v1607
  %1624 = vst [vmem:[%s3 + $0x60] sm:$0xff] %v1608
  %1625 = vst [vmem:[%s3 + $0x68] sm:$0xff] %v1609
  %1626 = vst [vmem:[%s3 + $0x70] sm:$0xff] %v1610
  %1627 = vst [vmem:[%s3 + $0x78] sm:$0xff] %v1611
  %v1628 = vlaneseq
  %v1629 = vshrl.u32 %v1628, 7
  %v1630 = vadd.f32 %v1596, %v1597
  %v1631 = vadd.f32 %v1630, %v1598
  %v1632 = vadd.f32 %v1631, %v1599
  %v1633 = vadd.f32 %v1632, %v1600
  %v1634 = vadd.f32 %v1633, %v1601
  %v1635 = vadd.f32 %v1634, %v1602
  %v1636 = vadd.f32 %v1635, %v1603
  %v1637 = vadd.f32 %v1636, %v1604
  %v1638 = vadd.f32 %v1637, %v1605
  %v1639 = vadd.f32 %v1638, %v1606
  %v1640 = vadd.f32 %v1639, %v1607
  %v1641 = vadd.f32 %v1640, %v1608
  %v1642 = vadd.f32 %v1641, %v1609
  %v1643 = vadd.f32 %v1642, %v1610
  %v1644 = vadd.f32 %v1643, %v1611
  %v1645 = vrot.slane %v1644, 4
  %v1646 = vadd.f32 %v1644, %v1645
  %v1647 = vrot.slane %v1646, 2
  %v1648 = vadd.f32 %v1646, %v1647
  %v1649 = vrot.slane %v1648, 1
  %v1650 = vadd.f32 %v1648, %v1649
  %v1651 = vmul.f32 %v1596, %v1596
  %v1652 = vmul.f32 %v1597, %v1597
  %v1653 = vmul.f32 %v1598, %v1598
  %v1654 = vmul.f32 %v1599, %v1599
  %v1655 = vmul.f32 %v1600, %v1600
  %v1656 = vmul.f32 %v1601, %v1601
  %v1657 = vmul.f32 %v1602, %v1602
  %v1658 = vmul.f32 %v1603, %v1603
  %v1659 = vmul.f32 %v1604, %v1604
  %v1660 = vmul.f32 %v1605, %v1605
  %v1661 = vmul.f32 %v1606, %v1606
  %v1662 = vmul.f32 %v1607, %v1607
  %v1663 = vmul.f32 %v1608, %v1608
  %v1664 = vmul.f32 %v1609, %v1609
  %v1665 = vmul.f32 %v1610, %v1610
  %v1666 = vmul.f32 %v1611, %v1611
  %v1667 = vadd.f32 %v1651, %v1652
  %v1668 = vadd.f32 %v1667, %v1653
  %v1669 = vadd.f32 %v1668, %v1654
  %v1670 = vadd.f32 %v1669, %v1655
  %v1671 = vadd.f32 %v1670, %v1656
  %v1672 = vadd.f32 %v1671, %v1657
  %v1673 = vadd.f32 %v1672, %v1658
  %v1674 = vadd.f32 %v1673, %v1659
  %v1675 = vadd.f32 %v1674, %v1660
  %v1676 = vadd.f32 %v1675, %v1661
  %v1677 = vadd.f32 %v1676, %v1662
  %v1678 = vadd.f32 %v1677, %v1663
  %v1679 = vadd.f32 %v1678, %v1664
  %v1680 = vadd.f32 %v1679, %v1665
  %v1681 = vadd.f32 %v1680, %v1666
  %v1682 = vrot.slane %v1681, 4
  %v1683 = vadd.f32 %v1681, %v1682
  %v1684 = vrot.slane %v1683, 2
  %v1685 = vadd.f32 %v1683, %v1684
  %v1686 = vrot.slane %v1685, 1
  %v1687 = vadd.f32 %v1685, %v1686
  %vm1688 = vcmp.eq.s32.totalorder %v1629, 0
  %vm1689 = vcmp.eq.s32.totalorder %v1629, 1
  %v1690 = vsel %vm1689, %v1687, 0.0
  %v1691 = vsel %vm1688, %v1650, %v1690
  %1692 = vst [vmem:[%s4] sm:$0xff] %v1691
  // Predicated region
  $region14: #{crnn_forward.7} parent=0 // pred_check
    _
  $region15: #{crnn_forward.7} parent=0 // pred_check_branch
    %1694 = sbr.rel (0) target = $region17
  $region16: #{crnn_forward.7} parent=0 // pred_region
    _
  $region17: #{crnn_forward.7} parent=0 // pred_fallthru
    _
  // Predicated region
  $region18: #{crnn_forward.7} parent=0 // pred_check
    _
  $region19: #{crnn_forward.7} parent=0 // pred_check_branch
    %1696 = sbr.rel (0) target = $region21
  $region20: #{crnn_forward.7} parent=0 // pred_region
    _
  $region21: #{crnn_forward.7} parent=0 // pred_fallthru
    _
  // Predicated region
  $region22: #{crnn_forward.7} parent=0 // pred_check
    _
  $region23: #{crnn_forward.7} parent=0 // pred_check_branch
    %1698 = sbr.rel (0) target = $region25
  $region24: #{crnn_forward.7} parent=0 // pred_region
    _
  $region25: #{crnn_forward.7} parent=0 // pred_fallthru
    _
  // Predicated region
  $region26: #{crnn_forward.7} parent=0 // pred_check
    _
  $region27: #{crnn_forward.7} parent=0 // pred_check_branch
    %1700 = sbr.rel (0) target = $region29
  $region28: #{crnn_forward.7} parent=0 // pred_region
    _
  $region29: #{crnn_forward.7} parent=0 // pred_fallthru
    _

// kernel: crnn_forward.10
$region0: #{crnn_forward.10}
  #allocation0 [shape = 'u32[]', space=smem, size = 0x4, offset = 0x4, fixed_abs, tag = 'smem constant byte address 0x4 - core index']
  #allocation1 [shape = 'u32[144,128]{1,0:T(1,128)}', space=vmem, size = 0x12000, scoped, tag = 'internal scratch']
  %s0 = inlined_call_operand.vmem [shape: f32[2,8,1024], index: 0, kind: input, shape index: {}]
  %s1 = inlined_call_operand.vmem [shape: bf16[128,512], index: 1, kind: input, shape index: {}]
  %s2 = inlined_call_operand.vmem [shape: bf16[128,512], index: 2, kind: input, shape index: {}]
  %s3 = inlined_call_operand.vmem [shape: f32[2,8,256], index: 3, kind: output, shape index: {}]
  %s4 = sld [smem:[#allocation0]]
  $region22: #{crnn_forward.10} parent=0
    _
  %s6 = ssub.s32 1, %s4
  %s7 = scalar_select 0, %s6, %s4
  // Predicated region
  $region2: #{crnn_forward.10} parent=0 // pred_check
    _
  $region3: #{crnn_forward.10} parent=0 // pred_check_branch
    %9 = sbr.rel (0) target = $region5
  $region4: #{crnn_forward.10} parent=0 // pred_region
    _
  $region5: #{crnn_forward.10} parent=0 // pred_fallthru
    _
  // Predicated region
  $region6: #{crnn_forward.10} parent=0 // pred_check
    _
  $region7: #{crnn_forward.10} parent=0 // pred_check_branch
    %11 = sbr.rel (0) target = $region9
  $region8: #{crnn_forward.10} parent=0 // pred_region
    _
  $region9: #{crnn_forward.10} parent=0 // pred_fallthru
    _
  // Predicated region
  $region10: #{crnn_forward.10} parent=0 // pred_check
    _
  $region11: #{crnn_forward.10} parent=0 // pred_check_branch
    %13 = sbr.rel (0) target = $region13
  $region12: #{crnn_forward.10} parent=0 // pred_region
    _
  $region13: #{crnn_forward.10} parent=0 // pred_fallthru
    _
  %v15 = vld [vmem:[%s1] sm:$0xff]
  %v16 = vld [vmem:[%s1 + $0x8] sm:$0xff]
  %v17 = vld [vmem:[%s1 + $0x10] sm:$0xff]
  %v18 = vld [vmem:[%s1 + $0x18] sm:$0xff]
  %v19 = vld [vmem:[%s1 + $0x20] sm:$0xff]
  %v20 = vld [vmem:[%s1 + $0x28] sm:$0xff]
  %v21 = vld [vmem:[%s1 + $0x30] sm:$0xff]
  %v22 = vld [vmem:[%s1 + $0x38] sm:$0xff]
  %v23 = vld [vmem:[%s1 + $0x40] sm:$0xff]
  %v24 = vld [vmem:[%s1 + $0x48] sm:$0xff]
  %v25 = vld [vmem:[%s1 + $0x50] sm:$0xff]
  %v26 = vld [vmem:[%s1 + $0x58] sm:$0xff]
  %v27 = vld [vmem:[%s1 + $0x60] sm:$0xff]
  %v28 = vld [vmem:[%s1 + $0x68] sm:$0xff]
  %v29 = vld [vmem:[%s1 + $0x70] sm:$0xff]
  %v30 = vld [vmem:[%s1 + $0x78] sm:$0xff]
  %v31 = vld [vmem:[%s1 + $0x80] sm:$0xff]
  %v32 = vld [vmem:[%s1 + $0x88] sm:$0xff]
  %v33 = vld [vmem:[%s1 + $0x90] sm:$0xff]
  %v34 = vld [vmem:[%s1 + $0x98] sm:$0xff]
  %v35 = vld [vmem:[%s1 + $0xa0] sm:$0xff]
  %v36 = vld [vmem:[%s1 + $0xa8] sm:$0xff]
  %v37 = vld [vmem:[%s1 + $0xb0] sm:$0xff]
  %v38 = vld [vmem:[%s1 + $0xb8] sm:$0xff]
  %v39 = vld [vmem:[%s1 + $0xc0] sm:$0xff]
  %v40 = vld [vmem:[%s1 + $0xc8] sm:$0xff]
  %v41 = vld [vmem:[%s1 + $0xd0] sm:$0xff]
  %v42 = vld [vmem:[%s1 + $0xd8] sm:$0xff]
  %v43 = vld [vmem:[%s1 + $0xe0] sm:$0xff]
  %v44 = vld [vmem:[%s1 + $0xe8] sm:$0xff]
  %v45 = vld [vmem:[%s1 + $0xf0] sm:$0xff]
  %v46 = vld [vmem:[%s1 + $0xf8] sm:$0xff]
  %v47 = vld [vmem:[%s2] sm:$0xff]
  %v48 = vld [vmem:[%s2 + $0x8] sm:$0xff]
  %v49 = vld [vmem:[%s2 + $0x10] sm:$0xff]
  %v50 = vld [vmem:[%s2 + $0x18] sm:$0xff]
  %v51 = vld [vmem:[%s2 + $0x20] sm:$0xff]
  %v52 = vld [vmem:[%s2 + $0x28] sm:$0xff]
  %v53 = vld [vmem:[%s2 + $0x30] sm:$0xff]
  %v54 = vld [vmem:[%s2 + $0x38] sm:$0xff]
  %v55 = vld [vmem:[%s2 + $0x40] sm:$0xff]
  %v56 = vld [vmem:[%s2 + $0x48] sm:$0xff]
  %v57 = vld [vmem:[%s2 + $0x50] sm:$0xff]
  %v58 = vld [vmem:[%s2 + $0x58] sm:$0xff]
  %v59 = vld [vmem:[%s2 + $0x60] sm:$0xff]
  %v60 = vld [vmem:[%s2 + $0x68] sm:$0xff]
  %v61 = vld [vmem:[%s2 + $0x70] sm:$0xff]
  %v62 = vld [vmem:[%s2 + $0x78] sm:$0xff]
  %v63 = vld [vmem:[%s2 + $0x80] sm:$0xff]
  %v64 = vld [vmem:[%s2 + $0x88] sm:$0xff]
  %v65 = vld [vmem:[%s2 + $0x90] sm:$0xff]
  %v66 = vld [vmem:[%s2 + $0x98] sm:$0xff]
  %v67 = vld [vmem:[%s2 + $0xa0] sm:$0xff]
  %v68 = vld [vmem:[%s2 + $0xa8] sm:$0xff]
  %v69 = vld [vmem:[%s2 + $0xb0] sm:$0xff]
  %v70 = vld [vmem:[%s2 + $0xb8] sm:$0xff]
  %v71 = vld [vmem:[%s2 + $0xc0] sm:$0xff]
  %v72 = vld [vmem:[%s2 + $0xc8] sm:$0xff]
  %v73 = vld [vmem:[%s2 + $0xd0] sm:$0xff]
  %v74 = vld [vmem:[%s2 + $0xd8] sm:$0xff]
  %v75 = vld [vmem:[%s2 + $0xe0] sm:$0xff]
  %v76 = vld [vmem:[%s2 + $0xe8] sm:$0xff]
  %v77 = vld [vmem:[%s2 + $0xf0] sm:$0xff]
  %v78 = vld [vmem:[%s2 + $0xf8] sm:$0xff]
  %v79 = vld [vmem:[%s0] sm:$0xff]
  %v80 = vld [vmem:[%s0 + $0x8] sm:$0xff]
  %v81 = vld [vmem:[%s0 + $0x10] sm:$0xff]
  %v82 = vld [vmem:[%s0 + $0x18] sm:$0xff]
  %v115 = vunpack.c.l.b16 %v15
  %v116 = vunpack.c.h.b16 %v15
  %v117 = vunpack.c.l.b16 %v16
  %v118 = vunpack.c.h.b16 %v16
  %v119 = vunpack.c.l.b16 %v17
  %v120 = vunpack.c.h.b16 %v17
  %v121 = vunpack.c.l.b16 %v18
  %v122 = vunpack.c.h.b16 %v18
  %v123 = vunpack.c.l.b16 %v19
  %v124 = vunpack.c.h.b16 %v19
  %v125 = vunpack.c.l.b16 %v20
  %v126 = vunpack.c.h.b16 %v20
  %v127 = vunpack.c.l.b16 %v21
  %v128 = vunpack.c.h.b16 %v21
  %v129 = vunpack.c.l.b16 %v22
  %v130 = vunpack.c.h.b16 %v22
  %v131 = vunpack.c.l.b16 %v23
  %v132 = vunpack.c.h.b16 %v23
  %v133 = vunpack.c.l.b16 %v24
  %v134 = vunpack.c.h.b16 %v24
  %v135 = vunpack.c.l.b16 %v25
  %v136 = vunpack.c.h.b16 %v25
  %v137 = vunpack.c.l.b16 %v26
  %v138 = vunpack.c.h.b16 %v26
  %v139 = vunpack.c.l.b16 %v27
  %v140 = vunpack.c.h.b16 %v27
  %v141 = vunpack.c.l.b16 %v28
  %v142 = vunpack.c.h.b16 %v28
  %v143 = vunpack.c.l.b16 %v29
  %v144 = vunpack.c.h.b16 %v29
  %v145 = vunpack.c.l.b16 %v30
  %v146 = vunpack.c.h.b16 %v30
  %v147 = vunpack.c.l.b16 %v31
  %v148 = vunpack.c.h.b16 %v31
  %v149 = vunpack.c.l.b16 %v32
  %v150 = vunpack.c.h.b16 %v32
  %v151 = vunpack.c.l.b16 %v33
  %v152 = vunpack.c.h.b16 %v33
  %v153 = vunpack.c.l.b16 %v34
  %v154 = vunpack.c.h.b16 %v34
  %v155 = vunpack.c.l.b16 %v35
  %v156 = vunpack.c.h.b16 %v35
  %v157 = vunpack.c.l.b16 %v36
  %v158 = vunpack.c.h.b16 %v36
  %v159 = vunpack.c.l.b16 %v37
  %v160 = vunpack.c.h.b16 %v37
  %v161 = vunpack.c.l.b16 %v38
  %v162 = vunpack.c.h.b16 %v38
  %v163 = vunpack.c.l.b16 %v39
  %v164 = vunpack.c.h.b16 %v39
  %v165 = vunpack.c.l.b16 %v40
  %v166 = vunpack.c.h.b16 %v40
  %v167 = vunpack.c.l.b16 %v41
  %v168 = vunpack.c.h.b16 %v41
  %v169 = vunpack.c.l.b16 %v42
  %v170 = vunpack.c.h.b16 %v42
  %v171 = vunpack.c.l.b16 %v43
  %v172 = vunpack.c.h.b16 %v43
  %v173 = vunpack.c.l.b16 %v44
  %v174 = vunpack.c.h.b16 %v44
  %v175 = vunpack.c.l.b16 %v45
  %v176 = vunpack.c.h.b16 %v45
  %v177 = vunpack.c.l.b16 %v46
  %v178 = vunpack.c.h.b16 %v46
  %v179 = vpack.c.b16 %v119, %v115
  %v180 = vpack.c.b16 %v120, %v116
  %v181 = vpack.c.b16 %v121, %v117
  %v182 = vpack.c.b16 %v122, %v118
  %v183 = vpack.c.b16 %v127, %v123
  %v184 = vpack.c.b16 %v128, %v124
  %v185 = vpack.c.b16 %v129, %v125
  %v186 = vpack.c.b16 %v130, %v126
  %v187 = vpack.c.b16 %v135, %v131
  %v188 = vpack.c.b16 %v136, %v132
  %v189 = vpack.c.b16 %v137, %v133
  %v190 = vpack.c.b16 %v138, %v134
  %v191 = vpack.c.b16 %v143, %v139
  %v192 = vpack.c.b16 %v144, %v140
  %v193 = vpack.c.b16 %v145, %v141
  %v194 = vpack.c.b16 %v146, %v142
  %v195 = vpack.c.b16 %v151, %v147
  %v196 = vpack.c.b16 %v152, %v148
  %v197 = vpack.c.b16 %v153, %v149
  %v198 = vpack.c.b16 %v154, %v150
  %v199 = vpack.c.b16 %v159, %v155
  %v200 = vpack.c.b16 %v160, %v156
  %v201 = vpack.c.b16 %v161, %v157
  %v202 = vpack.c.b16 %v162, %v158
  %v203 = vpack.c.b16 %v167, %v163
  %v204 = vpack.c.b16 %v168, %v164
  %v205 = vpack.c.b16 %v169, %v165
  %v206 = vpack.c.b16 %v170, %v166
  %v207 = vpack.c.b16 %v175, %v171
  %v208 = vpack.c.b16 %v176, %v172
  %v209 = vpack.c.b16 %v177, %v173
  %v210 = vpack.c.b16 %v178, %v174
  %243 = vmatprep.subr.bf16.mxu0 %v180
  %244 = vmatpush1.bf16.msra.mxu0 %v179
  %245 = vmatprep.subr.bf16.mxu0 %v184
  %246 = vmatpush1.bf16.msra.mxu0 %v183
  %247 = vmatprep.subr.bf16.mxu0 %v188
  %248 = vmatpush1.bf16.msra.mxu0 %v187
  %249 = vmatprep.subr.bf16.mxu0 %v192
  %250 = vmatpush1.bf16.msra.mxu0 %v191
  %251 = vmatprep.subr.bf16.mxu0 %v196
  %252 = vmatpush1.bf16.msra.mxu0 %v195
  %253 = vmatprep.subr.bf16.mxu0 %v200
  %254 = vmatpush1.bf16.msra.mxu0 %v199
  %255 = vmatprep.subr.bf16.mxu0 %v204
  %256 = vmatpush1.bf16.msra.mxu0 %v203
  %257 = vmatprep.subr.bf16.mxu0 %v208
  %258 = vmatpush1.bf16.msra.mxu0 %v207
  %259 = vmatprep.subr.bf16.mxu0 0
  %260 = vmatpush1.bf16.msra.mxu0 0
  %261 = vmatprep.subr.bf16.mxu0 0
  %262 = vmatpush1.bf16.msra.mxu0 0
  %263 = vmatprep.subr.bf16.mxu0 0
  %264 = vmatpush1.bf16.msra.mxu0 0
  %265 = vmatprep.subr.bf16.mxu0 0
  %266 = vmatpush1.bf16.msra.mxu0 0
  %267 = vmatprep.subr.bf16.mxu0 0
  %268 = vmatpush1.bf16.msra.mxu0 0
  %269 = vmatprep.subr.bf16.mxu0 0
  %270 = vmatpush1.bf16.msra.mxu0 0
  %271 = vmatprep.subr.bf16.mxu0 0
  %272 = vmatpush1.bf16.msra.mxu0 0
  %273 = vmatprep.subr.bf16.mxu0 0
  %274 = vmatpush1.bf16.msra.mxu0 0
  %275 = vmatprep.mubr.bf16.mxu0 0
  %276 = vmatmul.mubr.bf16.gmra.mrb[0].mxu0 0
  %v277 = vpop.f32.mrb[0].mxu0
  %v278 = vadd.f32 0.0, %v277
  %v279 = vpop.f32.mrb[0].mxu0
  %v280 = vadd.f32 0.0, %v279
  %v281 = vpop.f32.mrb[0].mxu0
  %v282 = vpop.f32.mrb[0].mxu0
  %283 = vdwg.mxu0
  %284 = vmatprep.subr.bf16.mxu0 %v182
  %285 = vmatpush1.bf16.msra.mxu0 %v181
  %286 = vmatprep.subr.bf16.mxu0 %v186
  %287 = vmatpush1.bf16.msra.mxu0 %v185
  %288 = vmatprep.subr.bf16.mxu0 %v190
  %289 = vmatpush1.bf16.msra.mxu0 %v189
  %290 = vmatprep.subr.bf16.mxu0 %v194
  %291 = vmatpush1.bf16.msra.mxu0 %v193
  %292 = vmatprep.subr.bf16.mxu0 %v198
  %293 = vmatpush1.bf16.msra.mxu0 %v197
  %294 = vmatprep.subr.bf16.mxu0 %v202
  %295 = vmatpush1.bf16.msra.mxu0 %v201
  %296 = vmatprep.subr.bf16.mxu0 %v206
  %297 = vmatpush1.bf16.msra.mxu0 %v205
  %298 = vmatprep.subr.bf16.mxu0 %v210
  %299 = vmatpush1.bf16.msra.mxu0 %v209
  %300 = vmatprep.subr.bf16.mxu0 0
  %301 = vmatpush1.bf16.msra.mxu0 0
  %302 = vmatprep.subr.bf16.mxu0 0
  %303 = vmatpush1.bf16.msra.mxu0 0
  %304 = vmatprep.subr.bf16.mxu0 0
  %305 = vmatpush1.bf16.msra.mxu0 0
  %306 = vmatprep.subr.bf16.mxu0 0
  %307 = vmatpush1.bf16.msra.mxu0 0
  %308 = vmatprep.subr.bf16.mxu0 0
  %309 = vmatpush1.bf16.msra.mxu0 0
  %310 = vmatprep.subr.bf16.mxu0 0
  %311 = vmatpush1.bf16.msra.mxu0 0
  %312 = vmatprep.subr.bf16.mxu0 0
  %313 = vmatpush1.bf16.msra.mxu0 0
  %314 = vmatprep.subr.bf16.mxu0 0
  %315 = vmatpush1.bf16.msra.mxu0 0
  %316 = vmatprep.mubr.bf16.mxu0 0
  %317 = vmatmul.mubr.bf16.gmra.mrb[0].mxu0 0
  %v318 = vpop.f32.mrb[0].mxu0
  %v319 = vadd.f32 0.0, %v318
  %v320 = vpop.f32.mrb[0].mxu0
  %v321 = vadd.f32 0.0, %v320
  %v322 = vpop.f32.mrb[0].mxu0
  %v323 = vpop.f32.mrb[0].mxu0
  %324 = vdwg.mxu0
  %v325 = vadd.f32 %v79, %v278
  %v326 = vadd.f32 %v80, %v280
  %v327 = vadd.f32 %v81, %v319
  %v328 = vadd.f32 %v82, %v321
  %s329 = scalar_lea.vmem %s0, 64
  %v330 = vld [vmem:[%s329 + $0x20] sm:$0xff]
  %v331 = vld [vmem:[%s329 + $0x28] sm:$0xff]
  %v332 = vld [vmem:[%s329 + $0x30] sm:$0xff]
  %v333 = vld [vmem:[%s329 + $0x38] sm:$0xff]
  %v366 = vunpack.c.l.b16 %v47
  %v367 = vunpack.c.h.b16 %v47
  %v368 = vunpack.c.l.b16 %v48
  %v369 = vunpack.c.h.b16 %v48
  %v370 = vunpack.c.l.b16 %v49
  %v371 = vunpack.c.h.b16 %v49
  %v372 = vunpack.c.l.b16 %v50
  %v373 = vunpack.c.h.b16 %v50
  %v374 = vunpack.c.l.b16 %v51
  %v375 = vunpack.c.h.b16 %v51
  %v376 = vunpack.c.l.b16 %v52
  %v377 = vunpack.c.h.b16 %v52
  %v378 = vunpack.c.l.b16 %v53
  %v379 = vunpack.c.h.b16 %v53
  %v380 = vunpack.c.l.b16 %v54
  %v381 = vunpack.c.h.b16 %v54
  %v382 = vunpack.c.l.b16 %v55
  %v383 = vunpack.c.h.b16 %v55
  %v384 = vunpack.c.l.b16 %v56
  %v385 = vunpack.c.h.b16 %v56
  %v386 = vunpack.c.l.b16 %v57
  %v387 = vunpack.c.h.b16 %v57
  %v388 = vunpack.c.l.b16 %v58
  %v389 = vunpack.c.h.b16 %v58
  %v390 = vunpack.c.l.b16 %v59
  %v391 = vunpack.c.h.b16 %v59
  %v392 = vunpack.c.l.b16 %v60
  %v393 = vunpack.c.h.b16 %v60
  %v394 = vunpack.c.l.b16 %v61
  %v395 = vunpack.c.h.b16 %v61
  %v396 = vunpack.c.l.b16 %v62
  %v397 = vunpack.c.h.b16 %v62
  %v398 = vunpack.c.l.b16 %v63
  %v399 = vunpack.c.h.b16 %v63
  %v400 = vunpack.c.l.b16 %v64
  %v401 = vunpack.c.h.b16 %v64
  %v402 = vunpack.c.l.b16 %v65
  %v403 = vunpack.c.h.b16 %v65
  %v404 = vunpack.c.l.b16 %v66
  %v405 = vunpack.c.h.b16 %v66
  %v406 = vunpack.c.l.b16 %v67
  %v407 = vunpack.c.h.b16 %v67
  %v408 = vunpack.c.l.b16 %v68
  %v409 = vunpack.c.h.b16 %v68
  %v410 = vunpack.c.l.b16 %v69
  %v411 = vunpack.c.h.b16 %v69
  %v412 = vunpack.c.l.b16 %v70
  %v413 = vunpack.c.h.b16 %v70
  %v414 = vunpack.c.l.b16 %v71
  %v415 = vunpack.c.h.b16 %v71
  %v416 = vunpack.c.l.b16 %v72
  %v417 = vunpack.c.h.b16 %v72
  %v418 = vunpack.c.l.b16 %v73
  %v419 = vunpack.c.h.b16 %v73
  %v420 = vunpack.c.l.b16 %v74
  %v421 = vunpack.c.h.b16 %v74
  %v422 = vunpack.c.l.b16 %v75
  %v423 = vunpack.c.h.b16 %v75
  %v424 = vunpack.c.l.b16 %v76
  %v425 = vunpack.c.h.b16 %v76
  %v426 = vunpack.c.l.b16 %v77
  %v427 = vunpack.c.h.b16 %v77
  %v428 = vunpack.c.l.b16 %v78
  %v429 = vunpack.c.h.b16 %v78
  %v430 = vpack.c.b16 %v370, %v366
  %v431 = vpack.c.b16 %v371, %v367
  %v432 = vpack.c.b16 %v372, %v368
  %v433 = vpack.c.b16 %v373, %v369
  %v434 = vpack.c.b16 %v378, %v374
  %v435 = vpack.c.b16 %v379, %v375
  %v436 = vpack.c.b16 %v380, %v376
  %v437 = vpack.c.b16 %v381, %v377
  %v438 = vpack.c.b16 %v386, %v382
  %v439 = vpack.c.b16 %v387, %v383
  %v440 = vpack.c.b16 %v388, %v384
  %v441 = vpack.c.b16 %v389, %v385
  %v442 = vpack.c.b16 %v394, %v390
  %v443 = vpack.c.b16 %v395, %v391
  %v444 = vpack.c.b16 %v396, %v392
  %v445 = vpack.c.b16 %v397, %v393
  %v446 = vpack.c.b16 %v402, %v398
  %v447 = vpack.c.b16 %v403, %v399
  %v448 = vpack.c.b16 %v404, %v400
  %v449 = vpack.c.b16 %v405, %v401
  %v450 = vpack.c.b16 %v410, %v406
  %v451 = vpack.c.b16 %v411, %v407
  %v452 = vpack.c.b16 %v412, %v408
  %v453 = vpack.c.b16 %v413, %v409
  %v454 = vpack.c.b16 %v418, %v414
  %v455 = vpack.c.b16 %v419, %v415
  %v456 = vpack.c.b16 %v420, %v416
  %v457 = vpack.c.b16 %v421, %v417
  %v458 = vpack.c.b16 %v426, %v422
  %v459 = vpack.c.b16 %v427, %v423
  %v460 = vpack.c.b16 %v428, %v424
  %v461 = vpack.c.b16 %v429, %v425
  %494 = vmatprep.subr.bf16.mxu0 %v431
  %495 = vmatpush1.bf16.msra.mxu0 %v430
  %496 = vmatprep.subr.bf16.mxu0 %v435
  %497 = vmatpush1.bf16.msra.mxu0 %v434
  %498 = vmatprep.subr.bf16.mxu0 %v439
  %499 = vmatpush1.bf16.msra.mxu0 %v438
  %500 = vmatprep.subr.bf16.mxu0 %v443
  %501 = vmatpush1.bf16.msra.mxu0 %v442
  %502 = vmatprep.subr.bf16.mxu0 %v447
  %503 = vmatpush1.bf16.msra.mxu0 %v446
  %504 = vmatprep.subr.bf16.mxu0 %v451
  %505 = vmatpush1.bf16.msra.mxu0 %v450
  %506 = vmatprep.subr.bf16.mxu0 %v455
  %507 = vmatpush1.bf16.msra.mxu0 %v454
  %508 = vmatprep.subr.bf16.mxu0 %v459
  %509 = vmatpush1.bf16.msra.mxu0 %v458
  %510 = vmatprep.subr.bf16.mxu0 0
  %511 = vmatpush1.bf16.msra.mxu0 0
  %512 = vmatprep.subr.bf16.mxu0 0
  %513 = vmatpush1.bf16.msra.mxu0 0
  %514 = vmatprep.subr.bf16.mxu0 0
  %515 = vmatpush1.bf16.msra.mxu0 0
  %516 = vmatprep.subr.bf16.mxu0 0
  %517 = vmatpush1.bf16.msra.mxu0 0
  %518 = vmatprep.subr.bf16.mxu0 0
  %519 = vmatpush1.bf16.msra.mxu0 0
  %520 = vmatprep.subr.bf16.mxu0 0
  %521 = vmatpush1.bf16.msra.mxu0 0
  %522 = vmatprep.subr.bf16.mxu0 0
  %523 = vmatpush1.bf16.msra.mxu0 0
  %524 = vmatprep.subr.bf16.mxu0 0
  %525 = vmatpush1.bf16.msra.mxu0 0
  %526 = vmatprep.mubr.bf16.mxu0 0
  %527 = vmatmul.mubr.bf16.gmra.mrb[0].mxu0 0
  %v528 = vpop.f32.mrb[0].mxu0
  %v529 = vadd.f32 0.0, %v528
  %v530 = vpop.f32.mrb[0].mxu0
  %v531 = vadd.f32 0.0, %v530
  %v532 = vpop.f32.mrb[0].mxu0
  %v533 = vpop.f32.mrb[0].mxu0
  %534 = vdwg.mxu0
  %535 = vmatprep.subr.bf16.mxu0 %v433
  %536 = vmatpush1.bf16.msra.mxu0 %v432
  %537 = vmatprep.subr.bf16.mxu0 %v437
  %538 = vmatpush1.bf16.msra.mxu0 %v436
  %539 = vmatprep.subr.bf16.mxu0 %v441
  %540 = vmatpush1.bf16.msra.mxu0 %v440
  %541 = vmatprep.subr.bf16.mxu0 %v445
  %542 = vmatpush1.bf16.msra.mxu0 %v444
  %543 = vmatprep.subr.bf16.mxu0 %v449
  %544 = vmatpush1.bf16.msra.mxu0 %v448
  %545 = vmatprep.subr.bf16.mxu0 %v453
  %546 = vmatpush1.bf16.msra.mxu0 %v452
  %547 = vmatprep.subr.bf16.mxu0 %v457
  %548 = vmatpush1.bf16.msra.mxu0 %v456
  %549 = vmatprep.subr.bf16.mxu0 %v461
  %550 = vmatpush1.bf16.msra.mxu0 %v460
  %551 = vmatprep.subr.bf16.mxu0 0
  %552 = vmatpush1.bf16.msra.mxu0 0
  %553 = vmatprep.subr.bf16.mxu0 0
  %554 = vmatpush1.bf16.msra.mxu0 0
  %555 = vmatprep.subr.bf16.mxu0 0
  %556 = vmatpush1.bf16.msra.mxu0 0
  %557 = vmatprep.subr.bf16.mxu0 0
  %558 = vmatpush1.bf16.msra.mxu0 0
  %559 = vmatprep.subr.bf16.mxu0 0
  %560 = vmatpush1.bf16.msra.mxu0 0
  %561 = vmatprep.subr.bf16.mxu0 0
  %562 = vmatpush1.bf16.msra.mxu0 0
  %563 = vmatprep.subr.bf16.mxu0 0
  %564 = vmatpush1.bf16.msra.mxu0 0
  %565 = vmatprep.subr.bf16.mxu0 0
  %566 = vmatpush1.bf16.msra.mxu0 0
  %567 = vmatprep.mubr.bf16.mxu0 0
  %568 = vmatmul.mubr.bf16.gmra.mrb[0].mxu0 0
  %v569 = vpop.f32.mrb[0].mxu0
  %v570 = vadd.f32 0.0, %v569
  %v571 = vpop.f32.mrb[0].mxu0
  %v572 = vadd.f32 0.0, %v571
  %v573 = vpop.f32.mrb[0].mxu0
  %v574 = vpop.f32.mrb[0].mxu0
  %575 = vdwg.mxu0
  %v576 = vadd.f32 %v330, %v529
  %v577 = vadd.f32 %v331, %v531
  %v578 = vadd.f32 %v332, %v570
  %v579 = vadd.f32 %v333, %v572
  %v580 = vxor.u32 %v325, 2147483648
  %v581 = vmul.f32 %v580, 1.442695
  %v582 = vpow.pop %v581
  %v583 = vadd.f32 %v582, 1.0
  %v584 = vrcp.pop %v583
  %v585 = vmul.f32 1.0, %v584
  %v586 = vxor.u32 %v326, 2147483648
  %v587 = vmul.f32 %v586, 1.442695
  %v588 = vpow.pop %v587
  %v589 = vadd.f32 %v588, 1.0
  %v590 = vrcp.pop %v589
  %v591 = vmul.f32 1.0, %v590
  %v592 = vtanh.pop %v327
  %v593 = vxor.u32 %v328, 2147483648
  %v594 = vmul.f32 %v593, 1.442695
  %v595 = vpow.pop %v594
  %v596 = vadd.f32 %v595, 1.0
  %v597 = vrcp.pop %v596
  %v598 = vmul.f32 1.0, %v597
  %v599 = vmul.f32 %v591, 0.0
  %v600 = vmul.f32 %v585, %v592
  %v601 = vadd.f32 %v599, %v600
  %v602 = vtanh.pop %v601
  %v603 = vmul.f32 %v598, %v602
  %v604 = vxor.u32 %v576, 2147483648
  %v605 = vmul.f32 %v604, 1.442695
  %v606 = vpow.pop %v605
  %v607 = vadd.f32 %v606, 1.0
  %v608 = vrcp.pop %v607
  %v609 = vmul.f32 1.0, %v608
  %v610 = vxor.u32 %v577, 2147483648
  %v611 = vmul.f32 %v610, 1.442695
  %v612 = vpow.pop %v611
  %v613 = vadd.f32 %v612, 1.0
  %v614 = vrcp.pop %v613
  %v615 = vmul.f32 1.0, %v614
  %v616 = vtanh.pop %v578
  %v617 = vxor.u32 %v579, 2147483648
  %v618 = vmul.f32 %v617, 1.442695
  %v619 = vpow.pop %v618
  %v620 = vadd.f32 %v619, 1.0
  %v621 = vrcp.pop %v620
  %v622 = vmul.f32 1.0, %v621
  %v623 = vmul.f32 %v615, 0.0
  %v624 = vmul.f32 %v609, %v616
  %v625 = vadd.f32 %v623, %v624
  %v626 = vtanh.pop %v625
  %v627 = vmul.f32 %v622, %v626
  %628 = vst [vmem:[%s3] sm:$0xff] %v603
  %s629 = scalar_lea.vmem %s3, 16
  %630 = vst [vmem:[%s629 + $0x8] sm:$0xff] %v627
  %v631 = vld [vmem:[%s329] sm:$0xff]
  %v632 = vld [vmem:[%s329 + $0x8] sm:$0xff]
  %v633 = vld [vmem:[%s329 + $0x10] sm:$0xff]
  %v634 = vld [vmem:[%s329 + $0x18] sm:$0xff]
  %v635 = vpack.c.bf16 %v603, %v603
  %636 = vmatprep.subr.bf16.mxu0 %v180
  %637 = vmatpush1.bf16.msra.mxu0 %v179
  %638 = vmatprep.subr.bf16.mxu0 %v184
  %639 = vmatpush1.bf16.msra.mxu0 %v183
  %640 = vmatprep.subr.bf16.mxu0 %v188
  %641 = vmatpush1.bf16.msra.mxu0 %v187
  %642 = vmatprep.subr.bf16.mxu0 %v192
  %643 = vmatpush1.bf16.msra.mxu0 %v191
  %644 = vmatprep.subr.bf16.mxu0 %v196
  %645 = vmatpush1.bf16.msra.mxu0 %v195
  %646 = vmatprep.subr.bf16.mxu0 %v200
  %647 = vmatpush1.bf16.msra.mxu0 %v199
  %648 = vmatprep.subr.bf16.mxu0 %v204
  %649 = vmatpush1.bf16.msra.mxu0 %v203
  %650 = vmatprep.subr.bf16.mxu0 %v208
  %651 = vmatpush1.bf16.msra.mxu0 %v207
  %652 = vmatprep.subr.bf16.mxu0 0
  %653 = vmatpush1.bf16.msra.mxu0 0
  %654 = vmatprep.subr.bf16.mxu0 0
  %655 = vmatpush1.bf16.msra.mxu0 0
  %656 = vmatprep.subr.bf16.mxu0 0
  %657 = vmatpush1.bf16.msra.mxu0 0
  %658 = vmatprep.subr.bf16.mxu0 0
  %659 = vmatpush1.bf16.msra.mxu0 0
  %660 = vmatprep.subr.bf16.mxu0 0
  %661 = vmatpush1.bf16.msra.mxu0 0
  %662 = vmatprep.subr.bf16.mxu0 0
  %663 = vmatpush1.bf16.msra.mxu0 0
  %664 = vmatprep.subr.bf16.mxu0 0
  %665 = vmatpush1.bf16.msra.mxu0 0
  %666 = vmatprep.subr.bf16.mxu0 0
  %667 = vmatpush1.bf16.msra.mxu0 0
  %668 = vmatprep.mubr.bf16.mxu0 0
  %669 = vmatmul.mubr.bf16.gmra.mrb[0].mxu0 %v635
  %v670 = vpop.f32.mrb[0].mxu0
  %v671 = vadd.f32 0.0, %v670
  %v672 = vpop.f32.mrb[0].mxu0
  %v673 = vadd.f32 0.0, %v672
  %v674 = vpop.f32.mrb[0].mxu0
  %v675 = vpop.f32.mrb[0].mxu0
  %676 = vdwg.mxu0
  %677 = vmatprep.subr.bf16.mxu0 %v182
  %678 = vmatpush1.bf16.msra.mxu0 %v181
  %679 = vmatprep.subr.bf16.mxu0 %v186
  %680 = vmatpush1.bf16.msra.mxu0 %v185
  %681 = vmatprep.subr.bf16.mxu0 %v190
  %682 = vmatpush1.bf16.msra.mxu0 %v189
  %683 = vmatprep.subr.bf16.mxu0 %v194
  %684 = vmatpush1.bf16.msra.mxu0 %v193
  %685 = vmatprep.subr.bf16.mxu0 %v198
  %686 = vmatpush1.bf16.msra.mxu0 %v197
  %687 = vmatprep.subr.bf16.mxu0 %v202
  %688 = vmatpush1.bf16.msra.mxu0 %v201
  %689 = vmatprep.subr.bf16.mxu0 %v206
  %690 = vmatpush1.bf16.msra.mxu0 %v205
  %691 = vmatprep.subr.bf16.mxu0 %v210
  %692 = vmatpush1.bf16.msra.mxu0 %v209
  %693 = vmatprep.subr.bf16.mxu0 0
  %694 = vmatpush1.bf16.msra.mxu0 0
  %695 = vmatprep.subr.bf16.mxu0 0
  %696 = vmatpush1.bf16.msra.mxu0 0
  %697 = vmatprep.subr.bf16.mxu0 0
  %698 = vmatpush1.bf16.msra.mxu0 0
  %699 = vmatprep.subr.bf16.mxu0 0
  %700 = vmatpush1.bf16.msra.mxu0 0
  %701 = vmatprep.subr.bf16.mxu0 0
  %702 = vmatpush1.bf16.msra.mxu0 0
  %703 = vmatprep.subr.bf16.mxu0 0
  %704 = vmatpush1.bf16.msra.mxu0 0
  %705 = vmatprep.subr.bf16.mxu0 0
  %706 = vmatpush1.bf16.msra.mxu0 0
  %707 = vmatprep.subr.bf16.mxu0 0
  %708 = vmatpush1.bf16.msra.mxu0 0
  %709 = vmatprep.mubr.bf16.mxu0 0
  %710 = vmatmul.mubr.bf16.gmra.mrb[0].mxu0 %v635
  %v711 = vpop.f32.mrb[0].mxu0
  %v712 = vadd.f32 0.0, %v711
  %v713 = vpop.f32.mrb[0].mxu0
  %v714 = vadd.f32 0.0, %v713
  %v715 = vpop.f32.mrb[0].mxu0
  %v716 = vpop.f32.mrb[0].mxu0
  %717 = vdwg.mxu0
  %v718 = vadd.f32 %v631, %v671
  %v719 = vadd.f32 %v632, %v673
  %v720 = vadd.f32 %v633, %v712
  %v721 = vadd.f32 %v634, %v714
  %v722 = vld [vmem:[%s0 + $0x20] sm:$0xff]
  %v723 = vld [vmem:[%s0 + $0x28] sm:$0xff]
  %v724 = vld [vmem:[%s0 + $0x30] sm:$0xff]
  %v725 = vld [vmem:[%s0 + $0x38] sm:$0xff]
  %v726 = vpack.c.bf16 %v627, %v627
  %727 = vmatprep.subr.bf16.mxu0 %v431
  %728 = vmatpush1.bf16.msra.mxu0 %v430
  %729 = vmatprep.subr.bf16.mxu0 %v435
  %730 = vmatpush1.bf16.msra.mxu0 %v434
  %731 = vmatprep.subr.bf16.mxu0 %v439
  %732 = vmatpush1.bf16.msra.mxu0 %v438
  %733 = vmatprep.subr.bf16.mxu0 %v443
  %734 = vmatpush1.bf16.msra.mxu0 %v442
  %735 = vmatprep.subr.bf16.mxu0 %v447
  %736 = vmatpush1.bf16.msra.mxu0 %v446
  %737 = vmatprep.subr.bf16.mxu0 %v451
  %738 = vmatpush1.bf16.msra.mxu0 %v450
  %739 = vmatprep.subr.bf16.mxu0 %v455
  %740 = vmatpush1.bf16.msra.mxu0 %v454
  %741 = vmatprep.subr.bf16.mxu0 %v459
  %742 = vmatpush1.bf16.msra.mxu0 %v458
  %743 = vmatprep.subr.bf16.mxu0 0
  %744 = vmatpush1.bf16.msra.mxu0 0
  %745 = vmatprep.subr.bf16.mxu0 0
  %746 = vmatpush1.bf16.msra.mxu0 0
  %747 = vmatprep.subr.bf16.mxu0 0
  %748 = vmatpush1.bf16.msra.mxu0 0
  %749 = vmatprep.subr.bf16.mxu0 0
  %750 = vmatpush1.bf16.msra.mxu0 0
  %751 = vmatprep.subr.bf16.mxu0 0
  %752 = vmatpush1.bf16.msra.mxu0 0
  %753 = vmatprep.subr.bf16.mxu0 0
  %754 = vmatpush1.bf16.msra.mxu0 0
  %755 = vmatprep.subr.bf16.mxu0 0
  %756 = vmatpush1.bf16.msra.mxu0 0
  %757 = vmatprep.subr.bf16.mxu0 0
  %758 = vmatpush1.bf16.msra.mxu0 0
  %759 = vmatprep.mubr.bf16.mxu0 0
  %760 = vmatmul.mubr.bf16.gmra.mrb[0].mxu0 %v726
  %v761 = vpop.f32.mrb[0].mxu0
  %v762 = vadd.f32 0.0, %v761
  %v763 = vpop.f32.mrb[0].mxu0
  %v764 = vadd.f32 0.0, %v763
  %v765 = vpop.f32.mrb[0].mxu0
  %v766 = vpop.f32.mrb[0].mxu0
  %767 = vdwg.mxu0
  %768 = vmatprep.subr.bf16.mxu0 %v433
  %769 = vmatpush1.bf16.msra.mxu0 %v432
  %770 = vmatprep.subr.bf16.mxu0 %v437
  %771 = vmatpush1.bf16.msra.mxu0 %v436
  %772 = vmatprep.subr.bf16.mxu0 %v441
  %773 = vmatpush1.bf16.msra.mxu0 %v440
  %774 = vmatprep.subr.bf16.mxu0 %v445
  %775 = vmatpush1.bf16.msra.mxu0 %v444
  %776 = vmatprep.subr.bf16.mxu0 %v449
  %777 = vmatpush1.bf16.msra.mxu0 %v448
  %778 = vmatprep.subr.bf16.mxu0 %v453
  %779 = vmatpush1.bf16.msra.mxu0 %v452
  %780 = vmatprep.subr.bf16.mxu0 %v457
  %781 = vmatpush1.bf16.msra.mxu0 %v456
  %782 = vmatprep.subr.bf16.mxu0 %v461
  %783 = vmatpush1.bf16.msra.mxu0 %v460
  %784 = vmatprep.subr.bf16.mxu0 0
  %785 = vmatpush1.bf16.msra.mxu0 0
  %786 = vmatprep.subr.bf16.mxu0 0
  %787 = vmatpush1.bf16.msra.mxu0 0
  %788 = vmatprep.subr.bf16.mxu0 0
  %789 = vmatpush1.bf16.msra.mxu0 0
  %790 = vmatprep.subr.bf16.mxu0 0
  %791 = vmatpush1.bf16.msra.mxu0 0
  %792 = vmatprep.subr.bf16.mxu0 0
  %793 = vmatpush1.bf16.msra.mxu0 0
  %794 = vmatprep.subr.bf16.mxu0 0
  %795 = vmatpush1.bf16.msra.mxu0 0
  %796 = vmatprep.subr.bf16.mxu0 0
  %797 = vmatpush1.bf16.msra.mxu0 0
  %798 = vmatprep.subr.bf16.mxu0 0
  %799 = vmatpush1.bf16.msra.mxu0 0
  %800 = vmatprep.mubr.bf16.mxu0 0
  %801 = vmatmul.mubr.bf16.gmra.mrb[0].mxu0 %v726
  %v802 = vpop.f32.mrb[0].mxu0
  %v803 = vadd.f32 0.0, %v802
  %v804 = vpop.f32.mrb[0].mxu0
  %v805 = vadd.f32 0.0, %v804
  %v806 = vpop.f32.mrb[0].mxu0
  %v807 = vpop.f32.mrb[0].mxu0
  %808 = vdwg.mxu0
  %v809 = vadd.f32 %v722, %v762
  %v810 = vadd.f32 %v723, %v764
  %v811 = vadd.f32 %v724, %v803
  %v812 = vadd.f32 %v725, %v805
  %v813 = vxor.u32 %v718, 2147483648
  %v814 = vmul.f32 %v813, 1.442695
  %v815 = vpow.pop %v814
  %v816 = vadd.f32 %v815, 1.0
  %v817 = vrcp.pop %v816
  %v818 = vmul.f32 1.0, %v817
  %v819 = vxor.u32 %v719, 2147483648
  %v820 = vmul.f32 %v819, 1.442695
  %v821 = vpow.pop %v820
  %v822 = vadd.f32 %v821, 1.0
  %v823 = vrcp.pop %v822
  %v824 = vmul.f32 1.0, %v823
  %v825 = vtanh.pop %v720
  %v826 = vxor.u32 %v721, 2147483648
  %v827 = vmul.f32 %v826, 1.442695
  %v828 = vpow.pop %v827
  %v829 = vadd.f32 %v828, 1.0
  %v830 = vrcp.pop %v829
  %v831 = vmul.f32 1.0, %v830
  %v832 = vmul.f32 %v824, %v601
  %v833 = vmul.f32 %v818, %v825
  %v834 = vadd.f32 %v832, %v833
  %v835 = vtanh.pop %v834
  %v836 = vmul.f32 %v831, %v835
  %v837 = vxor.u32 %v809, 2147483648
  %v838 = vmul.f32 %v837, 1.442695
  %v839 = vpow.pop %v838
  %v840 = vadd.f32 %v839, 1.0
  %v841 = vrcp.pop %v840
  %v842 = vmul.f32 1.0, %v841
  %v843 = vxor.u32 %v810, 2147483648
  %v844 = vmul.f32 %v843, 1.442695
  %v845 = vpow.pop %v844
  %v846 = vadd.f32 %v845, 1.0
  %v847 = vrcp.pop %v846
  %v848 = vmul.f32 1.0, %v847
  %v849 = vtanh.pop %v811
  %v850 = vxor.u32 %v812, 2147483648
  %v851 = vmul.f32 %v850, 1.442695
  %v852 = vpow.pop %v851
  %v853 = vadd.f32 %v852, 1.0
  %v854 = vrcp.pop %v853
  %v855 = vmul.f32 1.0, %v854
  %v856 = vmul.f32 %v848, %v625
  %v857 = vmul.f32 %v842, %v849
  %v858 = vadd.f32 %v856, %v857
  %v859 = vtanh.pop %v858
  %v860 = vmul.f32 %v855, %v859
  %861 = vst [vmem:[%s629] sm:$0xff] %v836
  %862 = vst [vmem:[%s3 + $0x8] sm:$0xff] %v860
  // Predicated region
  $region14: #{crnn_forward.10} parent=0 // pred_check
    _
  $region15: #{crnn_forward.10} parent=0 // pred_check_branch
    %864 = sbr.rel (0) target = $region17
  $region16: #{crnn_forward.10} parent=0 // pred_region
    _
  $region17: #{crnn_forward.10} parent=0 // pred_fallthru
    _
  // Predicated region
  $region18: #{crnn_forward.10} parent=0 // pred_check
    _
  $region19: #{crnn_forward.10} parent=0 // pred_check_branch
    %866 = sbr.rel (0) target = $region21
  $region20: #{crnn_forward.10} parent=0 // pred_region
    _
  $region21: #{crnn_forward.10} parent=0 // pred_fallthru
    _

// kernel: crnn_forward.9
$region0: #{crnn_forward.9}
  #allocation0 [shape = 'u32[]', space=smem, size = 0x4, offset = 0x4, fixed_abs, tag = 'smem constant byte address 0x4 - core index']
  #allocation1 [shape = 'u32[144,128]{1,0:T(1,128)}', space=vmem, size = 0x12000, scoped, tag = 'internal scratch']
  %s0 = inlined_call_operand.vmem [shape: f32[16,256], index: 0, kind: input, shape index: {}]
  %s1 = inlined_call_operand.vmem [shape: bf16[256,1024], index: 1, kind: input, shape index: {}]
  %s2 = inlined_call_operand.vmem [shape: f32[1,1024], index: 2, kind: input, shape index: {}]
  %s3 = inlined_call_operand.vmem [shape: f32[16,1024], index: 3, kind: output, shape index: {}]
  %s4 = sld [smem:[#allocation0]]
  $region22: #{crnn_forward.9} parent=0
    _
  %s6 = ssub.s32 1, %s4
  %s7 = scalar_select 0, %s6, %s4
  // Predicated region
  $region2: #{crnn_forward.9} parent=0 // pred_check
    _
  $region3: #{crnn_forward.9} parent=0 // pred_check_branch
    %9 = sbr.rel (0) target = $region5
  $region4: #{crnn_forward.9} parent=0 // pred_region
    _
  $region5: #{crnn_forward.9} parent=0 // pred_fallthru
    _
  // Predicated region
  $region6: #{crnn_forward.9} parent=0 // pred_check
    _
  $region7: #{crnn_forward.9} parent=0 // pred_check_branch
    %11 = sbr.rel (0) target = $region9
  $region8: #{crnn_forward.9} parent=0 // pred_region
    _
  $region9: #{crnn_forward.9} parent=0 // pred_fallthru
    _
  // Predicated region
  $region10: #{crnn_forward.9} parent=0 // pred_check
    _
  $region11: #{crnn_forward.9} parent=0 // pred_check_branch
    %13 = sbr.rel (0) target = $region13
  $region12: #{crnn_forward.9} parent=0 // pred_region
    _
  $region13: #{crnn_forward.9} parent=0 // pred_fallthru
    _
  %v14 = vld [vmem:[%s0] sm:$0xff]
  %v15 = vld [vmem:[%s0 + $0x8] sm:$0xff]
  %v16 = vld [vmem:[%s0 + $0x10] sm:$0xff]
  %v17 = vld [vmem:[%s0 + $0x18] sm:$0xff]
  %v18 = vpack.c.bf16 %v16, %v14
  %v19 = vpack.c.bf16 %v17, %v15
  %v20 = vld [vmem:[%s1] sm:$0xff]
  %v21 = vld [vmem:[%s1 + $0x8] sm:$0xff]
  %v22 = vld [vmem:[%s1 + $0x10] sm:$0xff]
  %v23 = vld [vmem:[%s1 + $0x18] sm:$0xff]
  %v24 = vld [vmem:[%s1 + $0x20] sm:$0xff]
  %v25 = vld [vmem:[%s1 + $0x28] sm:$0xff]
  %v26 = vld [vmem:[%s1 + $0x30] sm:$0xff]
  %v27 = vld [vmem:[%s1 + $0x38] sm:$0xff]
  %v28 = vld [vmem:[%s1 + $0x40] sm:$0xff]
  %v29 = vld [vmem:[%s1 + $0x48] sm:$0xff]
  %v30 = vld [vmem:[%s1 + $0x50] sm:$0xff]
  %v31 = vld [vmem:[%s1 + $0x58] sm:$0xff]
  %v32 = vld [vmem:[%s1 + $0x60] sm:$0xff]
  %v33 = vld [vmem:[%s1 + $0x68] sm:$0xff]
  %v34 = vld [vmem:[%s1 + $0x70] sm:$0xff]
  %v35 = vld [vmem:[%s1 + $0x78] sm:$0xff]
  %v36 = vld [vmem:[%s1 + $0x80] sm:$0xff]
  %v37 = vld [vmem:[%s1 + $0x88] sm:$0xff]
  %v38 = vld [vmem:[%s1 + $0x90] sm:$0xff]
  %v39 = vld [vmem:[%s1 + $0x98] sm:$0xff]
  %v40 = vld [vmem:[%s1 + $0xa0] sm:$0xff]
  %v41 = vld [vmem:[%s1 + $0xa8] sm:$0xff]
  %v42 = vld [vmem:[%s1 + $0xb0] sm:$0xff]
  %v43 = vld [vmem:[%s1 + $0xb8] sm:$0xff]
  %v44 = vld [vmem:[%s1 + $0xc0] sm:$0xff]
  %v45 = vld [vmem:[%s1 + $0xc8] sm:$0xff]
  %v46 = vld [vmem:[%s1 + $0xd0] sm:$0xff]
  %v47 = vld [vmem:[%s1 + $0xd8] sm:$0xff]
  %v48 = vld [vmem:[%s1 + $0xe0] sm:$0xff]
  %v49 = vld [vmem:[%s1 + $0xe8] sm:$0xff]
  %v50 = vld [vmem:[%s1 + $0xf0] sm:$0xff]
  %v51 = vld [vmem:[%s1 + $0xf8] sm:$0xff]
  %v52 = vld [vmem:[%s1 + $0x100] sm:$0xff]
  %v53 = vld [vmem:[%s1 + $0x108] sm:$0xff]
  %v54 = vld [vmem:[%s1 + $0x110] sm:$0xff]
  %v55 = vld [vmem:[%s1 + $0x118] sm:$0xff]
  %v56 = vld [vmem:[%s1 + $0x120] sm:$0xff]
  %v57 = vld [vmem:[%s1 + $0x128] sm:$0xff]
  %v58 = vld [vmem:[%s1 + $0x130] sm:$0xff]
  %v59 = vld [vmem:[%s1 + $0x138] sm:$0xff]
  %v60 = vld [vmem:[%s1 + $0x140] sm:$0xff]
  %v61 = vld [vmem:[%s1 + $0x148] sm:$0xff]
  %v62 = vld [vmem:[%s1 + $0x150] sm:$0xff]
  %v63 = vld [vmem:[%s1 + $0x158] sm:$0xff]
  %v64 = vld [vmem:[%s1 + $0x160] sm:$0xff]
  %v65 = vld [vmem:[%s1 + $0x168] sm:$0xff]
  %v66 = vld [vmem:[%s1 + $0x170] sm:$0xff]
  %v67 = vld [vmem:[%s1 + $0x178] sm:$0xff]
  %v68 = vld [vmem:[%s1 + $0x180] sm:$0xff]
  %v69 = vld [vmem:[%s1 + $0x188] sm:$0xff]
  %v70 = vld [vmem:[%s1 + $0x190] sm:$0xff]
  %v71 = vld [vmem:[%s1 + $0x198] sm:$0xff]
  %v72 = vld [vmem:[%s1 + $0x1a0] sm:$0xff]
  %v73 = vld [vmem:[%s1 + $0x1a8] sm:$0xff]
  %v74 = vld [vmem:[%s1 + $0x1b0] sm:$0xff]
  %v75 = vld [vmem:[%s1 + $0x1b8] sm:$0xff]
  %v76 = vld [vmem:[%s1 + $0x1c0] sm:$0xff]
  %v77 = vld [vmem:[%s1 + $0x1c8] sm:$0xff]
  %v78 = vld [vmem:[%s1 + $0x1d0] sm:$0xff]
  %v79 = vld [vmem:[%s1 + $0x1d8] sm:$0xff]
  %v80 = vld [vmem:[%s1 + $0x1e0] sm:$0xff]
  %v81 = vld [vmem:[%s1 + $0x1e8] sm:$0xff]
  %v82 = vld [vmem:[%s1 + $0x1f0] sm:$0xff]
  %v83 = vld [vmem:[%s1 + $0x1f8] sm:$0xff]
  %v84 = vld [vmem:[%s1 + $0x200] sm:$0xff]
  %v85 = vld [vmem:[%s1 + $0x208] sm:$0xff]
  %v86 = vld [vmem:[%s1 + $0x210] sm:$0xff]
  %v87 = vld [vmem:[%s1 + $0x218] sm:$0xff]
  %v88 = vld [vmem:[%s1 + $0x220] sm:$0xff]
  %v89 = vld [vmem:[%s1 + $0x228] sm:$0xff]
  %v90 = vld [vmem:[%s1 + $0x230] sm:$0xff]
  %v91 = vld [vmem:[%s1 + $0x238] sm:$0xff]
  %v92 = vld [vmem:[%s1 + $0x240] sm:$0xff]
  %v93 = vld [vmem:[%s1 + $0x248] sm:$0xff]
  %v94 = vld [vmem:[%s1 + $0x250] sm:$0xff]
  %v95 = vld [vmem:[%s1 + $0x258] sm:$0xff]
  %v96 = vld [vmem:[%s1 + $0x260] sm:$0xff]
  %v97 = vld [vmem:[%s1 + $0x268] sm:$0xff]
  %v98 = vld [vmem:[%s1 + $0x270] sm:$0xff]
  %v99 = vld [vmem:[%s1 + $0x278] sm:$0xff]
  %v100 = vld [vmem:[%s1 + $0x280] sm:$0xff]
  %v101 = vld [vmem:[%s1 + $0x288] sm:$0xff]
  %v102 = vld [vmem:[%s1 + $0x290] sm:$0xff]
  %v103 = vld [vmem:[%s1 + $0x298] sm:$0xff]
  %v104 = vld [vmem:[%s1 + $0x2a0] sm:$0xff]
  %v105 = vld [vmem:[%s1 + $0x2a8] sm:$0xff]
  %v106 = vld [vmem:[%s1 + $0x2b0] sm:$0xff]
  %v107 = vld [vmem:[%s1 + $0x2b8] sm:$0xff]
  %v108 = vld [vmem:[%s1 + $0x2c0] sm:$0xff]
  %v109 = vld [vmem:[%s1 + $0x2c8] sm:$0xff]
  %v110 = vld [vmem:[%s1 + $0x2d0] sm:$0xff]
  %v111 = vld [vmem:[%s1 + $0x2d8] sm:$0xff]
  %v112 = vld [vmem:[%s1 + $0x2e0] sm:$0xff]
  %v113 = vld [vmem:[%s1 + $0x2e8] sm:$0xff]
  %v114 = vld [vmem:[%s1 + $0x2f0] sm:$0xff]
  %v115 = vld [vmem:[%s1 + $0x2f8] sm:$0xff]
  %v116 = vld [vmem:[%s1 + $0x300] sm:$0xff]
  %v117 = vld [vmem:[%s1 + $0x308] sm:$0xff]
  %v118 = vld [vmem:[%s1 + $0x310] sm:$0xff]
  %v119 = vld [vmem:[%s1 + $0x318] sm:$0xff]
  %v120 = vld [vmem:[%s1 + $0x320] sm:$0xff]
  %v121 = vld [vmem:[%s1 + $0x328] sm:$0xff]
  %v122 = vld [vmem:[%s1 + $0x330] sm:$0xff]
  %v123 = vld [vmem:[%s1 + $0x338] sm:$0xff]
  %v124 = vld [vmem:[%s1 + $0x340] sm:$0xff]
  %v125 = vld [vmem:[%s1 + $0x348] sm:$0xff]
  %v126 = vld [vmem:[%s1 + $0x350] sm:$0xff]
  %v127 = vld [vmem:[%s1 + $0x358] sm:$0xff]
  %v128 = vld [vmem:[%s1 + $0x360] sm:$0xff]
  %v129 = vld [vmem:[%s1 + $0x368] sm:$0xff]
  %v130 = vld [vmem:[%s1 + $0x370] sm:$0xff]
  %v131 = vld [vmem:[%s1 + $0x378] sm:$0xff]
  %v132 = vld [vmem:[%s1 + $0x380] sm:$0xff]
  %v133 = vld [vmem:[%s1 + $0x388] sm:$0xff]
  %v134 = vld [vmem:[%s1 + $0x390] sm:$0xff]
  %v135 = vld [vmem:[%s1 + $0x398] sm:$0xff]
  %v136 = vld [vmem:[%s1 + $0x3a0] sm:$0xff]
  %v137 = vld [vmem:[%s1 + $0x3a8] sm:$0xff]
  %v138 = vld [vmem:[%s1 + $0x3b0] sm:$0xff]
  %v139 = vld [vmem:[%s1 + $0x3b8] sm:$0xff]
  %v140 = vld [vmem:[%s1 + $0x3c0] sm:$0xff]
  %v141 = vld [vmem:[%s1 + $0x3c8] sm:$0xff]
  %v142 = vld [vmem:[%s1 + $0x3d0] sm:$0xff]
  %v143 = vld [vmem:[%s1 + $0x3d8] sm:$0xff]
  %v144 = vld [vmem:[%s1 + $0x3e0] sm:$0xff]
  %v145 = vld [vmem:[%s1 + $0x3e8] sm:$0xff]
  %v146 = vld [vmem:[%s1 + $0x3f0] sm:$0xff]
  %v147 = vld [vmem:[%s1 + $0x3f8] sm:$0xff]
  %v148 = vld [vmem:[%s2] sm:$0xff]
  %v150 = vlaneseq
  %v151 = vshrl.u32 %v150, 7
  %v152 = vsub.s32 0, %v151
  %v153 = vrot.slane %v148, %v152
  %v154 = vlaneseq
  %v155 = vshrl.u32 %v154, 7
  %v156 = vsub.s32 1, %v155
  %v157 = vrot.slane %v148, %v156
  %v158 = vlaneseq
  %v159 = vshrl.u32 %v158, 7
  %v160 = vsub.s32 2, %v159
  %v161 = vrot.slane %v148, %v160
  %v162 = vlaneseq
  %v163 = vshrl.u32 %v162, 7
  %v164 = vsub.s32 3, %v163
  %v165 = vrot.slane %v148, %v164
  %v166 = vlaneseq
  %v167 = vshrl.u32 %v166, 7
  %v168 = vsub.s32 4, %v167
  %v169 = vrot.slane %v148, %v168
  %v170 = vlaneseq
  %v171 = vshrl.u32 %v170, 7
  %v172 = vsub.s32 5, %v171
  %v173 = vrot.slane %v148, %v172
  %v174 = vlaneseq
  %v175 = vshrl.u32 %v174, 7
  %v176 = vsub.s32 6, %v175
  %v177 = vrot.slane %v148, %v176
  %v178 = vlaneseq
  %v179 = vshrl.u32 %v178, 7
  %v180 = vsub.s32 7, %v179
  %v181 = vrot.slane %v148, %v180
  %v318 = vunpack.c.l.b16 %v20
  %v319 = vunpack.c.h.b16 %v20
  %v320 = vunpack.c.l.b16 %v21
  %v321 = vunpack.c.h.b16 %v21
  %v322 = vunpack.c.l.b16 %v22
  %v323 = vunpack.c.h.b16 %v22
  %v324 = vunpack.c.l.b16 %v23
  %v325 = vunpack.c.h.b16 %v23
  %v326 = vunpack.c.l.b16 %v24
  %v327 = vunpack.c.h.b16 %v24
  %v328 = vunpack.c.l.b16 %v25
  %v329 = vunpack.c.h.b16 %v25
  %v330 = vunpack.c.l.b16 %v26
  %v331 = vunpack.c.h.b16 %v26
  %v332 = vunpack.c.l.b16 %v27
  %v333 = vunpack.c.h.b16 %v27
  %v334 = vunpack.c.l.b16 %v28
  %v335 = vunpack.c.h.b16 %v28
  %v336 = vunpack.c.l.b16 %v29
  %v337 = vunpack.c.h.b16 %v29
  %v338 = vunpack.c.l.b16 %v30
  %v339 = vunpack.c.h.b16 %v30
  %v340 = vunpack.c.l.b16 %v31
  %v341 = vunpack.c.h.b16 %v31
  %v342 = vunpack.c.l.b16 %v32
  %v343 = vunpack.c.h.b16 %v32
  %v344 = vunpack.c.l.b16 %v33
  %v345 = vunpack.c.h.b16 %v33
  %v346 = vunpack.c.l.b16 %v34
  %v347 = vunpack.c.h.b16 %v34
  %v348 = vunpack.c.l.b16 %v35
  %v349 = vunpack.c.h.b16 %v35
  %v350 = vunpack.c.l.b16 %v36
  %v351 = vunpack.c.h.b16 %v36
  %v352 = vunpack.c.l.b16 %v37
  %v353 = vunpack.c.h.b16 %v37
  %v354 = vunpack.c.l.b16 %v38
  %v355 = vunpack.c.h.b16 %v38
  %v356 = vunpack.c.l.b16 %v39
  %v357 = vunpack.c.h.b16 %v39
  %v358 = vunpack.c.l.b16 %v40
  %v359 = vunpack.c.h.b16 %v40
  %v360 = vunpack.c.l.b16 %v41
  %v361 = vunpack.c.h.b16 %v41
  %v362 = vunpack.c.l.b16 %v42
  %v363 = vunpack.c.h.b16 %v42
  %v364 = vunpack.c.l.b16 %v43
  %v365 = vunpack.c.h.b16 %v43
  %v366 = vunpack.c.l.b16 %v44
  %v367 = vunpack.c.h.b16 %v44
  %v368 = vunpack.c.l.b16 %v45
  %v369 = vunpack.c.h.b16 %v45
  %v370 = vunpack.c.l.b16 %v46
  %v371 = vunpack.c.h.b16 %v46
  %v372 = vunpack.c.l.b16 %v47
  %v373 = vunpack.c.h.b16 %v47
  %v374 = vunpack.c.l.b16 %v48
  %v375 = vunpack.c.h.b16 %v48
  %v376 = vunpack.c.l.b16 %v49
  %v377 = vunpack.c.h.b16 %v49
  %v378 = vunpack.c.l.b16 %v50
  %v379 = vunpack.c.h.b16 %v50
  %v380 = vunpack.c.l.b16 %v51
  %v381 = vunpack.c.h.b16 %v51
  %v382 = vunpack.c.l.b16 %v52
  %v383 = vunpack.c.h.b16 %v52
  %v384 = vunpack.c.l.b16 %v53
  %v385 = vunpack.c.h.b16 %v53
  %v386 = vunpack.c.l.b16 %v54
  %v387 = vunpack.c.h.b16 %v54
  %v388 = vunpack.c.l.b16 %v55
  %v389 = vunpack.c.h.b16 %v55
  %v390 = vunpack.c.l.b16 %v56
  %v391 = vunpack.c.h.b16 %v56
  %v392 = vunpack.c.l.b16 %v57
  %v393 = vunpack.c.h.b16 %v57
  %v394 = vunpack.c.l.b16 %v58
  %v395 = vunpack.c.h.b16 %v58
  %v396 = vunpack.c.l.b16 %v59
  %v397 = vunpack.c.h.b16 %v59
  %v398 = vunpack.c.l.b16 %v60
  %v399 = vunpack.c.h.b16 %v60
  %v400 = vunpack.c.l.b16 %v61
  %v401 = vunpack.c.h.b16 %v61
  %v402 = vunpack.c.l.b16 %v62
  %v403 = vunpack.c.h.b16 %v62
  %v404 = vunpack.c.l.b16 %v63
  %v405 = vunpack.c.h.b16 %v63
  %v406 = vunpack.c.l.b16 %v64
  %v407 = vunpack.c.h.b16 %v64
  %v408 = vunpack.c.l.b16 %v65
  %v409 = vunpack.c.h.b16 %v65
  %v410 = vunpack.c.l.b16 %v66
  %v411 = vunpack.c.h.b16 %v66
  %v412 = vunpack.c.l.b16 %v67
  %v413 = vunpack.c.h.b16 %v67
  %v414 = vunpack.c.l.b16 %v68
  %v415 = vunpack.c.h.b16 %v68
  %v416 = vunpack.c.l.b16 %v69
  %v417 = vunpack.c.h.b16 %v69
  %v418 = vunpack.c.l.b16 %v70
  %v419 = vunpack.c.h.b16 %v70
  %v420 = vunpack.c.l.b16 %v71
  %v421 = vunpack.c.h.b16 %v71
  %v422 = vunpack.c.l.b16 %v72
  %v423 = vunpack.c.h.b16 %v72
  %v424 = vunpack.c.l.b16 %v73
  %v425 = vunpack.c.h.b16 %v73
  %v426 = vunpack.c.l.b16 %v74
  %v427 = vunpack.c.h.b16 %v74
  %v428 = vunpack.c.l.b16 %v75
  %v429 = vunpack.c.h.b16 %v75
  %v430 = vunpack.c.l.b16 %v76
  %v431 = vunpack.c.h.b16 %v76
  %v432 = vunpack.c.l.b16 %v77
  %v433 = vunpack.c.h.b16 %v77
  %v434 = vunpack.c.l.b16 %v78
  %v435 = vunpack.c.h.b16 %v78
  %v436 = vunpack.c.l.b16 %v79
  %v437 = vunpack.c.h.b16 %v79
  %v438 = vunpack.c.l.b16 %v80
  %v439 = vunpack.c.h.b16 %v80
  %v440 = vunpack.c.l.b16 %v81
  %v441 = vunpack.c.h.b16 %v81
  %v442 = vunpack.c.l.b16 %v82
  %v443 = vunpack.c.h.b16 %v82
  %v444 = vunpack.c.l.b16 %v83
  %v445 = vunpack.c.h.b16 %v83
  %v446 = vunpack.c.l.b16 %v84
  %v447 = vunpack.c.h.b16 %v84
  %v448 = vunpack.c.l.b16 %v85
  %v449 = vunpack.c.h.b16 %v85
  %v450 = vunpack.c.l.b16 %v86
  %v451 = vunpack.c.h.b16 %v86
  %v452 = vunpack.c.l.b16 %v87
  %v453 = vunpack.c.h.b16 %v87
  %v454 = vunpack.c.l.b16 %v88
  %v455 = vunpack.c.h.b16 %v88
  %v456 = vunpack.c.l.b16 %v89
  %v457 = vunpack.c.h.b16 %v89
  %v458 = vunpack.c.l.b16 %v90
  %v459 = vunpack.c.h.b16 %v90
  %v460 = vunpack.c.l.b16 %v91
  %v461 = vunpack.c.h.b16 %v91
  %v462 = vunpack.c.l.b16 %v92
  %v463 = vunpack.c.h.b16 %v92
  %v464 = vunpack.c.l.b16 %v93
  %v465 = vunpack.c.h.b16 %v93
  %v466 = vunpack.c.l.b16 %v94
  %v467 = vunpack.c.h.b16 %v94
  %v468 = vunpack.c.l.b16 %v95
  %v469 = vunpack.c.h.b16 %v95
  %v470 = vunpack.c.l.b16 %v96
  %v471 = vunpack.c.h.b16 %v96
  %v472 = vunpack.c.l.b16 %v97
  %v473 = vunpack.c.h.b16 %v97
  %v474 = vunpack.c.l.b16 %v98
  %v475 = vunpack.c.h.b16 %v98
  %v476 = vunpack.c.l.b16 %v99
  %v477 = vunpack.c.h.b16 %v99
  %v478 = vunpack.c.l.b16 %v100
  %v479 = vunpack.c.h.b16 %v100
  %v480 = vunpack.c.l.b16 %v101
  %v481 = vunpack.c.h.b16 %v101
  %v482 = vunpack.c.l.b16 %v102
  %v483 = vunpack.c.h.b16 %v102
  %v484 = vunpack.c.l.b16 %v103
  %v485 = vunpack.c.h.b16 %v103
  %v486 = vunpack.c.l.b16 %v104
  %v487 = vunpack.c.h.b16 %v104
  %v488 = vunpack.c.l.b16 %v105
  %v489 = vunpack.c.h.b16 %v105
  %v490 = vunpack.c.l.b16 %v106
  %v491 = vunpack.c.h.b16 %v106
  %v492 = vunpack.c.l.b16 %v107
  %v493 = vunpack.c.h.b16 %v107
  %v494 = vunpack.c.l.b16 %v108
  %v495 = vunpack.c.h.b16 %v108
  %v496 = vunpack.c.l.b16 %v109
  %v497 = vunpack.c.h.b16 %v109
  %v498 = vunpack.c.l.b16 %v110
  %v499 = vunpack.c.h.b16 %v110
  %v500 = vunpack.c.l.b16 %v111
  %v501 = vunpack.c.h.b16 %v111
  %v502 = vunpack.c.l.b16 %v112
  %v503 = vunpack.c.h.b16 %v112
  %v504 = vunpack.c.l.b16 %v113
  %v505 = vunpack.c.h.b16 %v113
  %v506 = vunpack.c.l.b16 %v114
  %v507 = vunpack.c.h.b16 %v114
  %v508 = vunpack.c.l.b16 %v115
  %v509 = vunpack.c.h.b16 %v115
  %v510 = vunpack.c.l.b16 %v116
  %v511 = vunpack.c.h.b16 %v116
  %v512 = vunpack.c.l.b16 %v117
  %v513 = vunpack.c.h.b16 %v117
  %v514 = vunpack.c.l.b16 %v118
  %v515 = vunpack.c.h.b16 %v118
  %v516 = vunpack.c.l.b16 %v119
  %v517 = vunpack.c.h.b16 %v119
  %v518 = vunpack.c.l.b16 %v120
  %v519 = vunpack.c.h.b16 %v120
  %v520 = vunpack.c.l.b16 %v121
  %v521 = vunpack.c.h.b16 %v121
  %v522 = vunpack.c.l.b16 %v122
  %v523 = vunpack.c.h.b16 %v122
  %v524 = vunpack.c.l.b16 %v123
  %v525 = vunpack.c.h.b16 %v123
  %v526 = vunpack.c.l.b16 %v124
  %v527 = vunpack.c.h.b16 %v124
  %v528 = vunpack.c.l.b16 %v125
  %v529 = vunpack.c.h.b16 %v125
  %v530 = vunpack.c.l.b16 %v126
  %v531 = vunpack.c.h.b16 %v126
  %v532 = vunpack.c.l.b16 %v127
  %v533 = vunpack.c.h.b16 %v127
  %v534 = vunpack.c.l.b16 %v128
  %v535 = vunpack.c.h.b16 %v128
  %v536 = vunpack.c.l.b16 %v129
  %v537 = vunpack.c.h.b16 %v129
  %v538 = vunpack.c.l.b16 %v130
  %v539 = vunpack.c.h.b16 %v130
  %v540 = vunpack.c.l.b16 %v131
  %v541 = vunpack.c.h.b16 %v131
  %v542 = vunpack.c.l.b16 %v132
  %v543 = vunpack.c.h.b16 %v132
  %v544 = vunpack.c.l.b16 %v133
  %v545 = vunpack.c.h.b16 %v133
  %v546 = vunpack.c.l.b16 %v134
  %v547 = vunpack.c.h.b16 %v134
  %v548 = vunpack.c.l.b16 %v135
  %v549 = vunpack.c.h.b16 %v135
  %v550 = vunpack.c.l.b16 %v136
  %v551 = vunpack.c.h.b16 %v136
  %v552 = vunpack.c.l.b16 %v137
  %v553 = vunpack.c.h.b16 %v137
  %v554 = vunpack.c.l.b16 %v138
  %v555 = vunpack.c.h.b16 %v138
  %v556 = vunpack.c.l.b16 %v139
  %v557 = vunpack.c.h.b16 %v139
  %v558 = vunpack.c.l.b16 %v140
  %v559 = vunpack.c.h.b16 %v140
  %v560 = vunpack.c.l.b16 %v141
  %v561 = vunpack.c.h.b16 %v141
  %v562 = vunpack.c.l.b16 %v142
  %v563 = vunpack.c.h.b16 %v142
  %v564 = vunpack.c.l.b16 %v143
  %v565 = vunpack.c.h.b16 %v143
  %v566 = vunpack.c.l.b16 %v144
  %v567 = vunpack.c.h.b16 %v144
  %v568 = vunpack.c.l.b16 %v145
  %v569 = vunpack.c.h.b16 %v145
  %v570 = vunpack.c.l.b16 %v146
  %v571 = vunpack.c.h.b16 %v146
  %v572 = vunpack.c.l.b16 %v147
  %v573 = vunpack.c.h.b16 %v147
  %v574 = vpack.c.b16 %v326, %v318
  %v575 = vpack.c.b16 %v327, %v319
  %v576 = vpack.c.b16 %v328, %v320
  %v577 = vpack.c.b16 %v329, %v321
  %v578 = vpack.c.b16 %v330, %v322
  %v579 = vpack.c.b16 %v331, %v323
  %v580 = vpack.c.b16 %v332, %v324
  %v581 = vpack.c.b16 %v333, %v325
  %v582 = vpack.c.b16 %v342, %v334
  %v583 = vpack.c.b16 %v343, %v335
  %v584 = vpack.c.b16 %v344, %v336
  %v585 = vpack.c.b16 %v345, %v337
  %v586 = vpack.c.b16 %v346, %v338
  %v587 = vpack.c.b16 %v347, %v339
  %v588 = vpack.c.b16 %v348, %v340
  %v589 = vpack.c.b16 %v349, %v341
  %v590 = vpack.c.b16 %v358, %v350
  %v591 = vpack.c.b16 %v359, %v351
  %v592 = vpack.c.b16 %v360, %v352
  %v593 = vpack.c.b16 %v361, %v353
  %v594 = vpack.c.b16 %v362, %v354
  %v595 = vpack.c.b16 %v363, %v355
  %v596 = vpack.c.b16 %v364, %v356
  %v597 = vpack.c.b16 %v365, %v357
  %v598 = vpack.c.b16 %v374, %v366
  %v599 = vpack.c.b16 %v375, %v367
  %v600 = vpack.c.b16 %v376, %v368
  %v601 = vpack.c.b16 %v377, %v369
  %v602 = vpack.c.b16 %v378, %v370
  %v603 = vpack.c.b16 %v379, %v371
  %v604 = vpack.c.b16 %v380, %v372
  %v605 = vpack.c.b16 %v381, %v373
  %v606 = vpack.c.b16 %v390, %v382
  %v607 = vpack.c.b16 %v391, %v383
  %v608 = vpack.c.b16 %v392, %v384
  %v609 = vpack.c.b16 %v393, %v385
  %v610 = vpack.c.b16 %v394, %v386
  %v611 = vpack.c.b16 %v395, %v387
  %v612 = vpack.c.b16 %v396, %v388
  %v613 = vpack.c.b16 %v397, %v389
  %v614 = vpack.c.b16 %v406, %v398
  %v615 = vpack.c.b16 %v407, %v399
  %v616 = vpack.c.b16 %v408, %v400
  %v617 = vpack.c.b16 %v409, %v401
  %v618 = vpack.c.b16 %v410, %v402
  %v619 = vpack.c.b16 %v411, %v403
  %v620 = vpack.c.b16 %v412, %v404
  %v621 = vpack.c.b16 %v413, %v405
  %v622 = vpack.c.b16 %v422, %v414
  %v623 = vpack.c.b16 %v423, %v415
  %v624 = vpack.c.b16 %v424, %v416
  %v625 = vpack.c.b16 %v425, %v417
  %v626 = vpack.c.b16 %v426, %v418
  %v627 = vpack.c.b16 %v427, %v419
  %v628 = vpack.c.b16 %v428, %v420
  %v629 = vpack.c.b16 %v429, %v421
  %v630 = vpack.c.b16 %v438, %v430
  %v631 = vpack.c.b16 %v439, %v431
  %v632 = vpack.c.b16 %v440, %v432
  %v633 = vpack.c.b16 %v441, %v433
  %v634 = vpack.c.b16 %v442, %v434
  %v635 = vpack.c.b16 %v443, %v435
  %v636 = vpack.c.b16 %v444, %v436
  %v637 = vpack.c.b16 %v445, %v437
  %v638 = vpack.c.b16 %v454, %v446
  %v639 = vpack.c.b16 %v455, %v447
  %v640 = vpack.c.b16 %v456, %v448
  %v641 = vpack.c.b16 %v457, %v449
  %v642 = vpack.c.b16 %v458, %v450
  %v643 = vpack.c.b16 %v459, %v451
  %v644 = vpack.c.b16 %v460, %v452
  %v645 = vpack.c.b16 %v461, %v453
  %v646 = vpack.c.b16 %v470, %v462
  %v647 = vpack.c.b16 %v471, %v463
  %v648 = vpack.c.b16 %v472, %v464
  %v649 = vpack.c.b16 %v473, %v465
  %v650 = vpack.c.b16 %v474, %v466
  %v651 = vpack.c.b16 %v475, %v467
  %v652 = vpack.c.b16 %v476, %v468
  %v653 = vpack.c.b16 %v477, %v469
  %v654 = vpack.c.b16 %v486, %v478
  %v655 = vpack.c.b16 %v487, %v479
  %v656 = vpack.c.b16 %v488, %v480
  %v657 = vpack.c.b16 %v489, %v481
  %v658 = vpack.c.b16 %v490, %v482
  %v659 = vpack.c.b16 %v491, %v483
  %v660 = vpack.c.b16 %v492, %v484
  %v661 = vpack.c.b16 %v493, %v485
  %v662 = vpack.c.b16 %v502, %v494
  %v663 = vpack.c.b16 %v503, %v495
  %v664 = vpack.c.b16 %v504, %v496
  %v665 = vpack.c.b16 %v505, %v497
  %v666 = vpack.c.b16 %v506, %v498
  %v667 = vpack.c.b16 %v507, %v499
  %v668 = vpack.c.b16 %v508, %v500
  %v669 = vpack.c.b16 %v509, %v501
  %v670 = vpack.c.b16 %v518, %v510
  %v671 = vpack.c.b16 %v519, %v511
  %v672 = vpack.c.b16 %v520, %v512
  %v673 = vpack.c.b16 %v521, %v513
  %v674 = vpack.c.b16 %v522, %v514
  %v675 = vpack.c.b16 %v523, %v515
  %v676 = vpack.c.b16 %v524, %v516
  %v677 = vpack.c.b16 %v525, %v517
  %v678 = vpack.c.b16 %v534, %v526
  %v679 = vpack.c.b16 %v535, %v527
  %v680 = vpack.c.b16 %v536, %v528
  %v681 = vpack.c.b16 %v537, %v529
  %v682 = vpack.c.b16 %v538, %v530
  %v683 = vpack.c.b16 %v539, %v531
  %v684 = vpack.c.b16 %v540, %v532
  %v685 = vpack.c.b16 %v541, %v533
  %v686 = vpack.c.b16 %v550, %v542
  %v687 = vpack.c.b16 %v551, %v543
  %v688 = vpack.c.b16 %v552, %v544
  %v689 = vpack.c.b16 %v553, %v545
  %v690 = vpack.c.b16 %v554, %v546
  %v691 = vpack.c.b16 %v555, %v547
  %v692 = vpack.c.b16 %v556, %v548
  %v693 = vpack.c.b16 %v557, %v549
  %v694 = vpack.c.b16 %v566, %v558
  %v695 = vpack.c.b16 %v567, %v559
  %v696 = vpack.c.b16 %v568, %v560
  %v697 = vpack.c.b16 %v569, %v561
  %v698 = vpack.c.b16 %v570, %v562
  %v699 = vpack.c.b16 %v571, %v563
  %v700 = vpack.c.b16 %v572, %v564
  %v701 = vpack.c.b16 %v573, %v565
  %830 = vmatprep.subr.bf16.mxu0 %v575
  %831 = vmatpush1.bf16.msra.mxu0 %v574
  %832 = vmatprep.subr.bf16.mxu0 %v583
  %833 = vmatpush1.bf16.msra.mxu0 %v582
  %834 = vmatprep.subr.bf16.mxu0 %v591
  %835 = vmatpush1.bf16.msra.mxu0 %v590
  %836 = vmatprep.subr.bf16.mxu0 %v599
  %837 = vmatpush1.bf16.msra.mxu0 %v598
  %838 = vmatprep.subr.bf16.mxu0 %v607
  %839 = vmatpush1.bf16.msra.mxu0 %v606
  %840 = vmatprep.subr.bf16.mxu0 %v615
  %841 = vmatpush1.bf16.msra.mxu0 %v614
  %842 = vmatprep.subr.bf16.mxu0 %v623
  %843 = vmatpush1.bf16.msra.mxu0 %v622
  %844 = vmatprep.subr.bf16.mxu0 %v631
  %845 = vmatpush1.bf16.msra.mxu0 %v630
  %846 = vmatprep.subr.bf16.mxu0 %v639
  %847 = vmatpush1.bf16.msra.mxu0 %v638
  %848 = vmatprep.subr.bf16.mxu0 %v647
  %849 = vmatpush1.bf16.msra.mxu0 %v646
  %850 = vmatprep.subr.bf16.mxu0 %v655
  %851 = vmatpush1.bf16.msra.mxu0 %v654
  %852 = vmatprep.subr.bf16.mxu0 %v663
  %853 = vmatpush1.bf16.msra.mxu0 %v662
  %854 = vmatprep.subr.bf16.mxu0 %v671
  %855 = vmatpush1.bf16.msra.mxu0 %v670
  %856 = vmatprep.subr.bf16.mxu0 %v679
  %857 = vmatpush1.bf16.msra.mxu0 %v678
  %858 = vmatprep.subr.bf16.mxu0 %v687
  %859 = vmatpush1.bf16.msra.mxu0 %v686
  %860 = vmatprep.subr.bf16.mxu0 %v695
  %861 = vmatpush1.bf16.msra.mxu0 %v694
  %862 = vmatprep.mubr.bf16.mxu0 %v19
  %863 = vmatmul.mubr.bf16.gmra.mrb[0].mxu0 %v18
  %v864 = vpop.f32.mrb[0].mxu0
  %v865 = vadd.f32 %v153, %v864
  %v866 = vpop.f32.mrb[0].mxu0
  %v867 = vadd.f32 %v157, %v866
  %v868 = vpop.f32.mrb[0].mxu0
  %v869 = vadd.f32 %v153, %v868
  %v870 = vpop.f32.mrb[0].mxu0
  %v871 = vadd.f32 %v157, %v870
  %872 = vdwg.mxu0
  %873 = vmatprep.subr.bf16.mxu0 %v577
  %874 = vmatpush1.bf16.msra.mxu0 %v576
  %875 = vmatprep.subr.bf16.mxu0 %v585
  %876 = vmatpush1.bf16.msra.mxu0 %v584
  %877 = vmatprep.subr.bf16.mxu0 %v593
  %878 = vmatpush1.bf16.msra.mxu0 %v592
  %879 = vmatprep.subr.bf16.mxu0 %v601
  %880 = vmatpush1.bf16.msra.mxu0 %v600
  %881 = vmatprep.subr.bf16.mxu0 %v609
  %882 = vmatpush1.bf16.msra.mxu0 %v608
  %883 = vmatprep.subr.bf16.mxu0 %v617
  %884 = vmatpush1.bf16.msra.mxu0 %v616
  %885 = vmatprep.subr.bf16.mxu0 %v625
  %886 = vmatpush1.bf16.msra.mxu0 %v624
  %887 = vmatprep.subr.bf16.mxu0 %v633
  %888 = vmatpush1.bf16.msra.mxu0 %v632
  %889 = vmatprep.subr.bf16.mxu0 %v641
  %890 = vmatpush1.bf16.msra.mxu0 %v640
  %891 = vmatprep.subr.bf16.mxu0 %v649
  %892 = vmatpush1.bf16.msra.mxu0 %v648
  %893 = vmatprep.subr.bf16.mxu0 %v657
  %894 = vmatpush1.bf16.msra.mxu0 %v656
  %895 = vmatprep.subr.bf16.mxu0 %v665
  %896 = vmatpush1.bf16.msra.mxu0 %v664
  %897 = vmatprep.subr.bf16.mxu0 %v673
  %898 = vmatpush1.bf16.msra.mxu0 %v672
  %899 = vmatprep.subr.bf16.mxu0 %v681
  %900 = vmatpush1.bf16.msra.mxu0 %v680
  %901 = vmatprep.subr.bf16.mxu0 %v689
  %902 = vmatpush1.bf16.msra.mxu0 %v688
  %903 = vmatprep.subr.bf16.mxu0 %v697
  %904 = vmatpush1.bf16.msra.mxu0 %v696
  %905 = vmatprep.mubr.bf16.mxu0 %v19
  %906 = vmatmul.mubr.bf16.gmra.mrb[0].mxu0 %v18
  %v907 = vpop.f32.mrb[0].mxu0
  %v908 = vadd.f32 %v161, %v907
  %v909 = vpop.f32.mrb[0].mxu0
  %v910 = vadd.f32 %v165, %v909
  %v911 = vpop.f32.mrb[0].mxu0
  %v912 = vadd.f32 %v161, %v911
  %v913 = vpop.f32.mrb[0].mxu0
  %v914 = vadd.f32 %v165, %v913
  %915 = vdwg.mxu0
  %916 = vmatprep.subr.bf16.mxu0 %v579
  %917 = vmatpush1.bf16.msra.mxu0 %v578
  %918 = vmatprep.subr.bf16.mxu0 %v587
  %919 = vmatpush1.bf16.msra.mxu0 %v586
  %920 = vmatprep.subr.bf16.mxu0 %v595
  %921 = vmatpush1.bf16.msra.mxu0 %v594
  %922 = vmatprep.subr.bf16.mxu0 %v603
  %923 = vmatpush1.bf16.msra.mxu0 %v602
  %924 = vmatprep.subr.bf16.mxu0 %v611
  %925 = vmatpush1.bf16.msra.mxu0 %v610
  %926 = vmatprep.subr.bf16.mxu0 %v619
  %927 = vmatpush1.bf16.msra.mxu0 %v618
  %928 = vmatprep.subr.bf16.mxu0 %v627
  %929 = vmatpush1.bf16.msra.mxu0 %v626
  %930 = vmatprep.subr.bf16.mxu0 %v635
  %931 = vmatpush1.bf16.msra.mxu0 %v634
  %932 = vmatprep.subr.bf16.mxu0 %v643
  %933 = vmatpush1.bf16.msra.mxu0 %v642
  %934 = vmatprep.subr.bf16.mxu0 %v651
  %935 = vmatpush1.bf16.msra.mxu0 %v650
  %936 = vmatprep.subr.bf16.mxu0 %v659
  %937 = vmatpush1.bf16.msra.mxu0 %v658
  %938 = vmatprep.subr.bf16.mxu0 %v667
  %939 = vmatpush1.bf16.msra.mxu0 %v666
  %940 = vmatprep.subr.bf16.mxu0 %v675
  %941 = vmatpush1.bf16.msra.mxu0 %v674
  %942 = vmatprep.subr.bf16.mxu0 %v683
  %943 = vmatpush1.bf16.msra.mxu0 %v682
  %944 = vmatprep.subr.bf16.mxu0 %v691
  %945 = vmatpush1.bf16.msra.mxu0 %v690
  %946 = vmatprep.subr.bf16.mxu0 %v699
  %947 = vmatpush1.bf16.msra.mxu0 %v698
  %948 = vmatprep.mubr.bf16.mxu0 %v19
  %949 = vmatmul.mubr.bf16.gmra.mrb[0].mxu0 %v18
  %v950 = vpop.f32.mrb[0].mxu0
  %v951 = vadd.f32 %v169, %v950
  %v952 = vpop.f32.mrb[0].mxu0
  %v953 = vadd.f32 %v173, %v952
  %v954 = vpop.f32.mrb[0].mxu0
  %v955 = vadd.f32 %v169, %v954
  %v956 = vpop.f32.mrb[0].mxu0
  %v957 = vadd.f32 %v173, %v956
  %958 = vdwg.mxu0
  %959 = vmatprep.subr.bf16.mxu0 %v581
  %960 = vmatpush1.bf16.msra.mxu0 %v580
  %961 = vmatprep.subr.bf16.mxu0 %v589
  %962 = vmatpush1.bf16.msra.mxu0 %v588
  %963 = vmatprep.subr.bf16.mxu0 %v597
  %964 = vmatpush1.bf16.msra.mxu0 %v596
  %965 = vmatprep.subr.bf16.mxu0 %v605
  %966 = vmatpush1.bf16.msra.mxu0 %v604
  %967 = vmatprep.subr.bf16.mxu0 %v613
  %968 = vmatpush1.bf16.msra.mxu0 %v612
  %969 = vmatprep.subr.bf16.mxu0 %v621
  %970 = vmatpush1.bf16.msra.mxu0 %v620
  %971 = vmatprep.subr.bf16.mxu0 %v629
  %972 = vmatpush1.bf16.msra.mxu0 %v628
  %973 = vmatprep.subr.bf16.mxu0 %v637
  %974 = vmatpush1.bf16.msra.mxu0 %v636
  %975 = vmatprep.subr.bf16.mxu0 %v645
  %976 = vmatpush1.bf16.msra.mxu0 %v644
  %977 = vmatprep.subr.bf16.mxu0 %v653
  %978 = vmatpush1.bf16.msra.mxu0 %v652
  %979 = vmatprep.subr.bf16.mxu0 %v661
  %980 = vmatpush1.bf16.msra.mxu0 %v660
  %981 = vmatprep.subr.bf16.mxu0 %v669
  %982 = vmatpush1.bf16.msra.mxu0 %v668
  %983 = vmatprep.subr.bf16.mxu0 %v677
  %984 = vmatpush1.bf16.msra.mxu0 %v676
  %985 = vmatprep.subr.bf16.mxu0 %v685
  %986 = vmatpush1.bf16.msra.mxu0 %v684
  %987 = vmatprep.subr.bf16.mxu0 %v693
  %988 = vmatpush1.bf16.msra.mxu0 %v692
  %989 = vmatprep.subr.bf16.mxu0 %v701
  %990 = vmatpush1.bf16.msra.mxu0 %v700
  %991 = vmatprep.mubr.bf16.mxu0 %v19
  %992 = vmatmul.mubr.bf16.gmra.mrb[0].mxu0 %v18
  %v993 = vpop.f32.mrb[0].mxu0
  %v994 = vadd.f32 %v177, %v993
  %v995 = vpop.f32.mrb[0].mxu0
  %v996 = vadd.f32 %v181, %v995
  %v997 = vpop.f32.mrb[0].mxu0
  %v998 = vadd.f32 %v177, %v997
  %v999 = vpop.f32.mrb[0].mxu0
  %v1000 = vadd.f32 %v181, %v999
  %1001 = vdwg.mxu0
  %1002 = vst [vmem:[%s3] sm:$0xff] %v865
  %1003 = vst [vmem:[%s3 + $0x8] sm:$0xff] %v867
  %1004 = vst [vmem:[%s3 + $0x10] sm:$0xff] %v908
  %1005 = vst [vmem:[%s3 + $0x18] sm:$0xff] %v910
  %1006 = vst [vmem:[%s3 + $0x20] sm:$0xff] %v951
  %1007 = vst [vmem:[%s3 + $0x28] sm:$0xff] %v953
  %1008 = vst [vmem:[%s3 + $0x30] sm:$0xff] %v994
  %1009 = vst [vmem:[%s3 + $0x38] sm:$0xff] %v996
  %1010 = vst [vmem:[%s3 + $0x40] sm:$0xff] %v869
  %1011 = vst [vmem:[%s3 + $0x48] sm:$0xff] %v871
  %1012 = vst [vmem:[%s3 + $0x50] sm:$0xff] %v912
  %1013 = vst [vmem:[%s3 + $0x58] sm:$0xff] %v914
  %1014 = vst [vmem:[%s3 + $0x60] sm:$0xff] %v955
  %1015 = vst [vmem:[%s3 + $0x68] sm:$0xff] %v957
  %1016 = vst [vmem:[%s3 + $0x70] sm:$0xff] %v998
  %1017 = vst [vmem:[%s3 + $0x78] sm:$0xff] %v1000
  // Predicated region
  $region14: #{crnn_forward.9} parent=0 // pred_check
    _
  $region15: #{crnn_forward.9} parent=0 // pred_check_branch
    %1019 = sbr.rel (0) target = $region17
  $region16: #{crnn_forward.9} parent=0 // pred_region
    _
  $region17: #{crnn_forward.9} parent=0 // pred_fallthru
    _
  // Predicated region
  $region18: #{crnn_forward.9} parent=0 // pred_check
    _
  $region19: #{crnn_forward.9} parent=0 // pred_check_branch
    %1021 = sbr.rel (0) target = $region21
  $region20: #{crnn_forward.9} parent=0 // pred_region
    _
  $region21: #{crnn_forward.9} parent=0 // pred_fallthru
    _

// kernel: crnn_forward.11
$region0: #{crnn_forward.11}
  #allocation0 [shape = 'u32[]', space=smem, size = 0x4, offset = 0x4, fixed_abs, tag = 'smem constant byte address 0x4 - core index']
  #allocation1 [shape = 'u32[144,128]{1,0:T(1,128)}', space=vmem, size = 0x12000, scoped, tag = 'internal scratch']
  %s0 = inlined_call_operand.vmem [shape: f32[16,256], index: 0, kind: input, shape index: {}]
  %s1 = inlined_call_operand.vmem [shape: bf16[128,1024], index: 1, kind: input, shape index: {}]
  %s2 = inlined_call_operand.vmem [shape: f32[1,1024], index: 2, kind: input, shape index: {}]
  %s3 = inlined_call_operand.vmem [shape: f32[16,1024], index: 3, kind: output, shape index: {}]
  %s4 = sld [smem:[#allocation0]]
  $region22: #{crnn_forward.11} parent=0
    _
  %s6 = ssub.s32 1, %s4
  %s7 = scalar_select 0, %s6, %s4
  // Predicated region
  $region2: #{crnn_forward.11} parent=0 // pred_check
    _
  $region3: #{crnn_forward.11} parent=0 // pred_check_branch
    %9 = sbr.rel (0) target = $region5
  $region4: #{crnn_forward.11} parent=0 // pred_region
    _
  $region5: #{crnn_forward.11} parent=0 // pred_fallthru
    _
  // Predicated region
  $region6: #{crnn_forward.11} parent=0 // pred_check
    _
  $region7: #{crnn_forward.11} parent=0 // pred_check_branch
    %11 = sbr.rel (0) target = $region9
  $region8: #{crnn_forward.11} parent=0 // pred_region
    _
  $region9: #{crnn_forward.11} parent=0 // pred_fallthru
    _
  // Predicated region
  $region10: #{crnn_forward.11} parent=0 // pred_check
    _
  $region11: #{crnn_forward.11} parent=0 // pred_check_branch
    %13 = sbr.rel (0) target = $region13
  $region12: #{crnn_forward.11} parent=0 // pred_region
    _
  $region13: #{crnn_forward.11} parent=0 // pred_fallthru
    _
  %v15 = vld [vmem:[%s0] sm:$0xff]
  %v16 = vld [vmem:[%s0 + $0x10] sm:$0xff]
  %v17 = vld [vmem:[%s0 + $0x8] sm:$0xff]
  %v18 = vld [vmem:[%s0 + $0x18] sm:$0xff]
  %v19 = vadd.f32 %v15, %v17
  %v20 = vadd.f32 %v16, %v18
  %v21 = vpack.c.bf16 %v20, %v19
  %v22 = vld [vmem:[%s1] sm:$0xff]
  %v23 = vld [vmem:[%s1 + $0x8] sm:$0xff]
  %v24 = vld [vmem:[%s1 + $0x10] sm:$0xff]
  %v25 = vld [vmem:[%s1 + $0x18] sm:$0xff]
  %v26 = vld [vmem:[%s1 + $0x20] sm:$0xff]
  %v27 = vld [vmem:[%s1 + $0x28] sm:$0xff]
  %v28 = vld [vmem:[%s1 + $0x30] sm:$0xff]
  %v29 = vld [vmem:[%s1 + $0x38] sm:$0xff]
  %v30 = vld [vmem:[%s1 + $0x40] sm:$0xff]
  %v31 = vld [vmem:[%s1 + $0x48] sm:$0xff]
  %v32 = vld [vmem:[%s1 + $0x50] sm:$0xff]
  %v33 = vld [vmem:[%s1 + $0x58] sm:$0xff]
  %v34 = vld [vmem:[%s1 + $0x60] sm:$0xff]
  %v35 = vld [vmem:[%s1 + $0x68] sm:$0xff]
  %v36 = vld [vmem:[%s1 + $0x70] sm:$0xff]
  %v37 = vld [vmem:[%s1 + $0x78] sm:$0xff]
  %v38 = vld [vmem:[%s1 + $0x80] sm:$0xff]
  %v39 = vld [vmem:[%s1 + $0x88] sm:$0xff]
  %v40 = vld [vmem:[%s1 + $0x90] sm:$0xff]
  %v41 = vld [vmem:[%s1 + $0x98] sm:$0xff]
  %v42 = vld [vmem:[%s1 + $0xa0] sm:$0xff]
  %v43 = vld [vmem:[%s1 + $0xa8] sm:$0xff]
  %v44 = vld [vmem:[%s1 + $0xb0] sm:$0xff]
  %v45 = vld [vmem:[%s1 + $0xb8] sm:$0xff]
  %v46 = vld [vmem:[%s1 + $0xc0] sm:$0xff]
  %v47 = vld [vmem:[%s1 + $0xc8] sm:$0xff]
  %v48 = vld [vmem:[%s1 + $0xd0] sm:$0xff]
  %v49 = vld [vmem:[%s1 + $0xd8] sm:$0xff]
  %v50 = vld [vmem:[%s1 + $0xe0] sm:$0xff]
  %v51 = vld [vmem:[%s1 + $0xe8] sm:$0xff]
  %v52 = vld [vmem:[%s1 + $0xf0] sm:$0xff]
  %v53 = vld [vmem:[%s1 + $0xf8] sm:$0xff]
  %v54 = vld [vmem:[%s1 + $0x100] sm:$0xff]
  %v55 = vld [vmem:[%s1 + $0x108] sm:$0xff]
  %v56 = vld [vmem:[%s1 + $0x110] sm:$0xff]
  %v57 = vld [vmem:[%s1 + $0x118] sm:$0xff]
  %v58 = vld [vmem:[%s1 + $0x120] sm:$0xff]
  %v59 = vld [vmem:[%s1 + $0x128] sm:$0xff]
  %v60 = vld [vmem:[%s1 + $0x130] sm:$0xff]
  %v61 = vld [vmem:[%s1 + $0x138] sm:$0xff]
  %v62 = vld [vmem:[%s1 + $0x140] sm:$0xff]
  %v63 = vld [vmem:[%s1 + $0x148] sm:$0xff]
  %v64 = vld [vmem:[%s1 + $0x150] sm:$0xff]
  %v65 = vld [vmem:[%s1 + $0x158] sm:$0xff]
  %v66 = vld [vmem:[%s1 + $0x160] sm:$0xff]
  %v67 = vld [vmem:[%s1 + $0x168] sm:$0xff]
  %v68 = vld [vmem:[%s1 + $0x170] sm:$0xff]
  %v69 = vld [vmem:[%s1 + $0x178] sm:$0xff]
  %v70 = vld [vmem:[%s1 + $0x180] sm:$0xff]
  %v71 = vld [vmem:[%s1 + $0x188] sm:$0xff]
  %v72 = vld [vmem:[%s1 + $0x190] sm:$0xff]
  %v73 = vld [vmem:[%s1 + $0x198] sm:$0xff]
  %v74 = vld [vmem:[%s1 + $0x1a0] sm:$0xff]
  %v75 = vld [vmem:[%s1 + $0x1a8] sm:$0xff]
  %v76 = vld [vmem:[%s1 + $0x1b0] sm:$0xff]
  %v77 = vld [vmem:[%s1 + $0x1b8] sm:$0xff]
  %v78 = vld [vmem:[%s1 + $0x1c0] sm:$0xff]
  %v79 = vld [vmem:[%s1 + $0x1c8] sm:$0xff]
  %v80 = vld [vmem:[%s1 + $0x1d0] sm:$0xff]
  %v81 = vld [vmem:[%s1 + $0x1d8] sm:$0xff]
  %v82 = vld [vmem:[%s1 + $0x1e0] sm:$0xff]
  %v83 = vld [vmem:[%s1 + $0x1e8] sm:$0xff]
  %v84 = vld [vmem:[%s1 + $0x1f0] sm:$0xff]
  %v85 = vld [vmem:[%s1 + $0x1f8] sm:$0xff]
  %v86 = vld [vmem:[%s2] sm:$0xff]
  %v88 = vlaneseq
  %v89 = vshrl.u32 %v88, 7
  %v90 = vsub.s32 0, %v89
  %v91 = vrot.slane %v86, %v90
  %v92 = vlaneseq
  %v93 = vshrl.u32 %v92, 7
  %v94 = vsub.s32 1, %v93
  %v95 = vrot.slane %v86, %v94
  %v96 = vlaneseq
  %v97 = vshrl.u32 %v96, 7
  %v98 = vsub.s32 2, %v97
  %v99 = vrot.slane %v86, %v98
  %v100 = vlaneseq
  %v101 = vshrl.u32 %v100, 7
  %v102 = vsub.s32 3, %v101
  %v103 = vrot.slane %v86, %v102
  %v104 = vlaneseq
  %v105 = vshrl.u32 %v104, 7
  %v106 = vsub.s32 4, %v105
  %v107 = vrot.slane %v86, %v106
  %v108 = vlaneseq
  %v109 = vshrl.u32 %v108, 7
  %v110 = vsub.s32 5, %v109
  %v111 = vrot.slane %v86, %v110
  %v112 = vlaneseq
  %v113 = vshrl.u32 %v112, 7
  %v114 = vsub.s32 6, %v113
  %v115 = vrot.slane %v86, %v114
  %v116 = vlaneseq
  %v117 = vshrl.u32 %v116, 7
  %v118 = vsub.s32 7, %v117
  %v119 = vrot.slane %v86, %v118
  %v192 = vunpack.c.l.b16 %v22
  %v193 = vunpack.c.h.b16 %v22
  %v194 = vunpack.c.l.b16 %v23
  %v195 = vunpack.c.h.b16 %v23
  %v196 = vunpack.c.l.b16 %v24
  %v197 = vunpack.c.h.b16 %v24
  %v198 = vunpack.c.l.b16 %v25
  %v199 = vunpack.c.h.b16 %v25
  %v200 = vunpack.c.l.b16 %v26
  %v201 = vunpack.c.h.b16 %v26
  %v202 = vunpack.c.l.b16 %v27
  %v203 = vunpack.c.h.b16 %v27
  %v204 = vunpack.c.l.b16 %v28
  %v205 = vunpack.c.h.b16 %v28
  %v206 = vunpack.c.l.b16 %v29
  %v207 = vunpack.c.h.b16 %v29
  %v208 = vunpack.c.l.b16 %v30
  %v209 = vunpack.c.h.b16 %v30
  %v210 = vunpack.c.l.b16 %v31
  %v211 = vunpack.c.h.b16 %v31
  %v212 = vunpack.c.l.b16 %v32
  %v213 = vunpack.c.h.b16 %v32
  %v214 = vunpack.c.l.b16 %v33
  %v215 = vunpack.c.h.b16 %v33
  %v216 = vunpack.c.l.b16 %v34
  %v217 = vunpack.c.h.b16 %v34
  %v218 = vunpack.c.l.b16 %v35
  %v219 = vunpack.c.h.b16 %v35
  %v220 = vunpack.c.l.b16 %v36
  %v221 = vunpack.c.h.b16 %v36
  %v222 = vunpack.c.l.b16 %v37
  %v223 = vunpack.c.h.b16 %v37
  %v224 = vunpack.c.l.b16 %v38
  %v225 = vunpack.c.h.b16 %v38
  %v226 = vunpack.c.l.b16 %v39
  %v227 = vunpack.c.h.b16 %v39
  %v228 = vunpack.c.l.b16 %v40
  %v229 = vunpack.c.h.b16 %v40
  %v230 = vunpack.c.l.b16 %v41
  %v231 = vunpack.c.h.b16 %v41
  %v232 = vunpack.c.l.b16 %v42
  %v233 = vunpack.c.h.b16 %v42
  %v234 = vunpack.c.l.b16 %v43
  %v235 = vunpack.c.h.b16 %v43
  %v236 = vunpack.c.l.b16 %v44
  %v237 = vunpack.c.h.b16 %v44
  %v238 = vunpack.c.l.b16 %v45
  %v239 = vunpack.c.h.b16 %v45
  %v240 = vunpack.c.l.b16 %v46
  %v241 = vunpack.c.h.b16 %v46
  %v242 = vunpack.c.l.b16 %v47
  %v243 = vunpack.c.h.b16 %v47
  %v244 = vunpack.c.l.b16 %v48
  %v245 = vunpack.c.h.b16 %v48
  %v246 = vunpack.c.l.b16 %v49
  %v247 = vunpack.c.h.b16 %v49
  %v248 = vunpack.c.l.b16 %v50
  %v249 = vunpack.c.h.b16 %v50
  %v250 = vunpack.c.l.b16 %v51
  %v251 = vunpack.c.h.b16 %v51
  %v252 = vunpack.c.l.b16 %v52
  %v253 = vunpack.c.h.b16 %v52
  %v254 = vunpack.c.l.b16 %v53
  %v255 = vunpack.c.h.b16 %v53
  %v256 = vunpack.c.l.b16 %v54
  %v257 = vunpack.c.h.b16 %v54
  %v258 = vunpack.c.l.b16 %v55
  %v259 = vunpack.c.h.b16 %v55
  %v260 = vunpack.c.l.b16 %v56
  %v261 = vunpack.c.h.b16 %v56
  %v262 = vunpack.c.l.b16 %v57
  %v263 = vunpack.c.h.b16 %v57
  %v264 = vunpack.c.l.b16 %v58
  %v265 = vunpack.c.h.b16 %v58
  %v266 = vunpack.c.l.b16 %v59
  %v267 = vunpack.c.h.b16 %v59
  %v268 = vunpack.c.l.b16 %v60
  %v269 = vunpack.c.h.b16 %v60
  %v270 = vunpack.c.l.b16 %v61
  %v271 = vunpack.c.h.b16 %v61
  %v272 = vunpack.c.l.b16 %v62
  %v273 = vunpack.c.h.b16 %v62
  %v274 = vunpack.c.l.b16 %v63
  %v275 = vunpack.c.h.b16 %v63
  %v276 = vunpack.c.l.b16 %v64
  %v277 = vunpack.c.h.b16 %v64
  %v278 = vunpack.c.l.b16 %v65
  %v279 = vunpack.c.h.b16 %v65
  %v280 = vunpack.c.l.b16 %v66
  %v281 = vunpack.c.h.b16 %v66
  %v282 = vunpack.c.l.b16 %v67
  %v283 = vunpack.c.h.b16 %v67
  %v284 = vunpack.c.l.b16 %v68
  %v285 = vunpack.c.h.b16 %v68
  %v286 = vunpack.c.l.b16 %v69
  %v287 = vunpack.c.h.b16 %v69
  %v288 = vunpack.c.l.b16 %v70
  %v289 = vunpack.c.h.b16 %v70
  %v290 = vunpack.c.l.b16 %v71
  %v291 = vunpack.c.h.b16 %v71
  %v292 = vunpack.c.l.b16 %v72
  %v293 = vunpack.c.h.b16 %v72
  %v294 = vunpack.c.l.b16 %v73
  %v295 = vunpack.c.h.b16 %v73
  %v296 = vunpack.c.l.b16 %v74
  %v297 = vunpack.c.h.b16 %v74
  %v298 = vunpack.c.l.b16 %v75
  %v299 = vunpack.c.h.b16 %v75
  %v300 = vunpack.c.l.b16 %v76
  %v301 = vunpack.c.h.b16 %v76
  %v302 = vunpack.c.l.b16 %v77
  %v303 = vunpack.c.h.b16 %v77
  %v304 = vunpack.c.l.b16 %v78
  %v305 = vunpack.c.h.b16 %v78
  %v306 = vunpack.c.l.b16 %v79
  %v307 = vunpack.c.h.b16 %v79
  %v308 = vunpack.c.l.b16 %v80
  %v309 = vunpack.c.h.b16 %v80
  %v310 = vunpack.c.l.b16 %v81
  %v311 = vunpack.c.h.b16 %v81
  %v312 = vunpack.c.l.b16 %v82
  %v313 = vunpack.c.h.b16 %v82
  %v314 = vunpack.c.l.b16 %v83
  %v315 = vunpack.c.h.b16 %v83
  %v316 = vunpack.c.l.b16 %v84
  %v317 = vunpack.c.h.b16 %v84
  %v318 = vunpack.c.l.b16 %v85
  %v319 = vunpack.c.h.b16 %v85
  %v320 = vpack.c.b16 %v200, %v192
  %v321 = vpack.c.b16 %v201, %v193
  %v322 = vpack.c.b16 %v202, %v194
  %v323 = vpack.c.b16 %v203, %v195
  %v324 = vpack.c.b16 %v204, %v196
  %v325 = vpack.c.b16 %v205, %v197
  %v326 = vpack.c.b16 %v206, %v198
  %v327 = vpack.c.b16 %v207, %v199
  %v328 = vpack.c.b16 %v216, %v208
  %v329 = vpack.c.b16 %v217, %v209
  %v330 = vpack.c.b16 %v218, %v210
  %v331 = vpack.c.b16 %v219, %v211
  %v332 = vpack.c.b16 %v220, %v212
  %v333 = vpack.c.b16 %v221, %v213
  %v334 = vpack.c.b16 %v222, %v214
  %v335 = vpack.c.b16 %v223, %v215
  %v336 = vpack.c.b16 %v232, %v224
  %v337 = vpack.c.b16 %v233, %v225
  %v338 = vpack.c.b16 %v234, %v226
  %v339 = vpack.c.b16 %v235, %v227
  %v340 = vpack.c.b16 %v236, %v228
  %v341 = vpack.c.b16 %v237, %v229
  %v342 = vpack.c.b16 %v238, %v230
  %v343 = vpack.c.b16 %v239, %v231
  %v344 = vpack.c.b16 %v248, %v240
  %v345 = vpack.c.b16 %v249, %v241
  %v346 = vpack.c.b16 %v250, %v242
  %v347 = vpack.c.b16 %v251, %v243
  %v348 = vpack.c.b16 %v252, %v244
  %v349 = vpack.c.b16 %v253, %v245
  %v350 = vpack.c.b16 %v254, %v246
  %v351 = vpack.c.b16 %v255, %v247
  %v352 = vpack.c.b16 %v264, %v256
  %v353 = vpack.c.b16 %v265, %v257
  %v354 = vpack.c.b16 %v266, %v258
  %v355 = vpack.c.b16 %v267, %v259
  %v356 = vpack.c.b16 %v268, %v260
  %v357 = vpack.c.b16 %v269, %v261
  %v358 = vpack.c.b16 %v270, %v262
  %v359 = vpack.c.b16 %v271, %v263
  %v360 = vpack.c.b16 %v280, %v272
  %v361 = vpack.c.b16 %v281, %v273
  %v362 = vpack.c.b16 %v282, %v274
  %v363 = vpack.c.b16 %v283, %v275
  %v364 = vpack.c.b16 %v284, %v276
  %v365 = vpack.c.b16 %v285, %v277
  %v366 = vpack.c.b16 %v286, %v278
  %v367 = vpack.c.b16 %v287, %v279
  %v368 = vpack.c.b16 %v296, %v288
  %v369 = vpack.c.b16 %v297, %v289
  %v370 = vpack.c.b16 %v298, %v290
  %v371 = vpack.c.b16 %v299, %v291
  %v372 = vpack.c.b16 %v300, %v292
  %v373 = vpack.c.b16 %v301, %v293
  %v374 = vpack.c.b16 %v302, %v294
  %v375 = vpack.c.b16 %v303, %v295
  %v376 = vpack.c.b16 %v312, %v304
  %v377 = vpack.c.b16 %v313, %v305
  %v378 = vpack.c.b16 %v314, %v306
  %v379 = vpack.c.b16 %v315, %v307
  %v380 = vpack.c.b16 %v316, %v308
  %v381 = vpack.c.b16 %v317, %v309
  %v382 = vpack.c.b16 %v318, %v310
  %v383 = vpack.c.b16 %v319, %v311
  %448 = vmatprep.subr.bf16.mxu0 %v321
  %449 = vmatpush1.bf16.msra.mxu0 %v320
  %450 = vmatprep.subr.bf16.mxu0 %v329
  %451 = vmatpush1.bf16.msra.mxu0 %v328
  %452 = vmatprep.subr.bf16.mxu0 %v337
  %453 = vmatpush1.bf16.msra.mxu0 %v336
  %454 = vmatprep.subr.bf16.mxu0 %v345
  %455 = vmatpush1.bf16.msra.mxu0 %v344
  %456 = vmatprep.subr.bf16.mxu0 %v353
  %457 = vmatpush1.bf16.msra.mxu0 %v352
  %458 = vmatprep.subr.bf16.mxu0 %v361
  %459 = vmatpush1.bf16.msra.mxu0 %v360
  %460 = vmatprep.subr.bf16.mxu0 %v369
  %461 = vmatpush1.bf16.msra.mxu0 %v368
  %462 = vmatprep.subr.bf16.mxu0 %v377
  %463 = vmatpush1.bf16.msra.mxu0 %v376
  %464 = vmatprep.subr.bf16.mxu0 0
  %465 = vmatpush1.bf16.msra.mxu0 0
  %466 = vmatprep.subr.bf16.mxu0 0
  %467 = vmatpush1.bf16.msra.mxu0 0
  %468 = vmatprep.subr.bf16.mxu0 0
  %469 = vmatpush1.bf16.msra.mxu0 0
  %470 = vmatprep.subr.bf16.mxu0 0
  %471 = vmatpush1.bf16.msra.mxu0 0
  %472 = vmatprep.subr.bf16.mxu0 0
  %473 = vmatpush1.bf16.msra.mxu0 0
  %474 = vmatprep.subr.bf16.mxu0 0
  %475 = vmatpush1.bf16.msra.mxu0 0
  %476 = vmatprep.subr.bf16.mxu0 0
  %477 = vmatpush1.bf16.msra.mxu0 0
  %478 = vmatprep.subr.bf16.mxu0 0
  %479 = vmatpush1.bf16.msra.mxu0 0
  %480 = vmatprep.mubr.bf16.mxu0 0
  %481 = vmatmul.mubr.bf16.gmra.mrb[0].mxu0 %v21
  %v482 = vpop.f32.mrb[0].mxu0
  %v483 = vadd.f32 %v91, %v482
  %v484 = vpop.f32.mrb[0].mxu0
  %v485 = vadd.f32 %v95, %v484
  %v486 = vpop.f32.mrb[0].mxu0
  %v487 = vadd.f32 %v91, %v486
  %v488 = vpop.f32.mrb[0].mxu0
  %v489 = vadd.f32 %v95, %v488
  %490 = vdwg.mxu0
  %491 = vmatprep.subr.bf16.mxu0 %v323
  %492 = vmatpush1.bf16.msra.mxu0 %v322
  %493 = vmatprep.subr.bf16.mxu0 %v331
  %494 = vmatpush1.bf16.msra.mxu0 %v330
  %495 = vmatprep.subr.bf16.mxu0 %v339
  %496 = vmatpush1.bf16.msra.mxu0 %v338
  %497 = vmatprep.subr.bf16.mxu0 %v347
  %498 = vmatpush1.bf16.msra.mxu0 %v346
  %499 = vmatprep.subr.bf16.mxu0 %v355
  %500 = vmatpush1.bf16.msra.mxu0 %v354
  %501 = vmatprep.subr.bf16.mxu0 %v363
  %502 = vmatpush1.bf16.msra.mxu0 %v362
  %503 = vmatprep.subr.bf16.mxu0 %v371
  %504 = vmatpush1.bf16.msra.mxu0 %v370
  %505 = vmatprep.subr.bf16.mxu0 %v379
  %506 = vmatpush1.bf16.msra.mxu0 %v378
  %507 = vmatprep.subr.bf16.mxu0 0
  %508 = vmatpush1.bf16.msra.mxu0 0
  %509 = vmatprep.subr.bf16.mxu0 0
  %510 = vmatpush1.bf16.msra.mxu0 0
  %511 = vmatprep.subr.bf16.mxu0 0
  %512 = vmatpush1.bf16.msra.mxu0 0
  %513 = vmatprep.subr.bf16.mxu0 0
  %514 = vmatpush1.bf16.msra.mxu0 0
  %515 = vmatprep.subr.bf16.mxu0 0
  %516 = vmatpush1.bf16.msra.mxu0 0
  %517 = vmatprep.subr.bf16.mxu0 0
  %518 = vmatpush1.bf16.msra.mxu0 0
  %519 = vmatprep.subr.bf16.mxu0 0
  %520 = vmatpush1.bf16.msra.mxu0 0
  %521 = vmatprep.subr.bf16.mxu0 0
  %522 = vmatpush1.bf16.msra.mxu0 0
  %523 = vmatprep.mubr.bf16.mxu0 0
  %524 = vmatmul.mubr.bf16.gmra.mrb[0].mxu0 %v21
  %v525 = vpop.f32.mrb[0].mxu0
  %v526 = vadd.f32 %v99, %v525
  %v527 = vpop.f32.mrb[0].mxu0
  %v528 = vadd.f32 %v103, %v527
  %v529 = vpop.f32.mrb[0].mxu0
  %v530 = vadd.f32 %v99, %v529
  %v531 = vpop.f32.mrb[0].mxu0
  %v532 = vadd.f32 %v103, %v531
  %533 = vdwg.mxu0
  %534 = vmatprep.subr.bf16.mxu0 %v325
  %535 = vmatpush1.bf16.msra.mxu0 %v324
  %536 = vmatprep.subr.bf16.mxu0 %v333
  %537 = vmatpush1.bf16.msra.mxu0 %v332
  %538 = vmatprep.subr.bf16.mxu0 %v341
  %539 = vmatpush1.bf16.msra.mxu0 %v340
  %540 = vmatprep.subr.bf16.mxu0 %v349
  %541 = vmatpush1.bf16.msra.mxu0 %v348
  %542 = vmatprep.subr.bf16.mxu0 %v357
  %543 = vmatpush1.bf16.msra.mxu0 %v356
  %544 = vmatprep.subr.bf16.mxu0 %v365
  %545 = vmatpush1.bf16.msra.mxu0 %v364
  %546 = vmatprep.subr.bf16.mxu0 %v373
  %547 = vmatpush1.bf16.msra.mxu0 %v372
  %548 = vmatprep.subr.bf16.mxu0 %v381
  %549 = vmatpush1.bf16.msra.mxu0 %v380
  %550 = vmatprep.subr.bf16.mxu0 0
  %551 = vmatpush1.bf16.msra.mxu0 0
  %552 = vmatprep.subr.bf16.mxu0 0
  %553 = vmatpush1.bf16.msra.mxu0 0
  %554 = vmatprep.subr.bf16.mxu0 0
  %555 = vmatpush1.bf16.msra.mxu0 0
  %556 = vmatprep.subr.bf16.mxu0 0
  %557 = vmatpush1.bf16.msra.mxu0 0
  %558 = vmatprep.subr.bf16.mxu0 0
  %559 = vmatpush1.bf16.msra.mxu0 0
  %560 = vmatprep.subr.bf16.mxu0 0
  %561 = vmatpush1.bf16.msra.mxu0 0
  %562 = vmatprep.subr.bf16.mxu0 0
  %563 = vmatpush1.bf16.msra.mxu0 0
  %564 = vmatprep.subr.bf16.mxu0 0
  %565 = vmatpush1.bf16.msra.mxu0 0
  %566 = vmatprep.mubr.bf16.mxu0 0
  %567 = vmatmul.mubr.bf16.gmra.mrb[0].mxu0 %v21
  %v568 = vpop.f32.mrb[0].mxu0
  %v569 = vadd.f32 %v107, %v568
  %v570 = vpop.f32.mrb[0].mxu0
  %v571 = vadd.f32 %v111, %v570
  %v572 = vpop.f32.mrb[0].mxu0
  %v573 = vadd.f32 %v107, %v572
  %v574 = vpop.f32.mrb[0].mxu0
  %v575 = vadd.f32 %v111, %v574
  %576 = vdwg.mxu0
  %577 = vmatprep.subr.bf16.mxu0 %v327
  %578 = vmatpush1.bf16.msra.mxu0 %v326
  %579 = vmatprep.subr.bf16.mxu0 %v335
  %580 = vmatpush1.bf16.msra.mxu0 %v334
  %581 = vmatprep.subr.bf16.mxu0 %v343
  %582 = vmatpush1.bf16.msra.mxu0 %v342
  %583 = vmatprep.subr.bf16.mxu0 %v351
  %584 = vmatpush1.bf16.msra.mxu0 %v350
  %585 = vmatprep.subr.bf16.mxu0 %v359
  %586 = vmatpush1.bf16.msra.mxu0 %v358
  %587 = vmatprep.subr.bf16.mxu0 %v367
  %588 = vmatpush1.bf16.msra.mxu0 %v366
  %589 = vmatprep.subr.bf16.mxu0 %v375
  %590 = vmatpush1.bf16.msra.mxu0 %v374
  %591 = vmatprep.subr.bf16.mxu0 %v383
  %592 = vmatpush1.bf16.msra.mxu0 %v382
  %593 = vmatprep.subr.bf16.mxu0 0
  %594 = vmatpush1.bf16.msra.mxu0 0
  %595 = vmatprep.subr.bf16.mxu0 0
  %596 = vmatpush1.bf16.msra.mxu0 0
  %597 = vmatprep.subr.bf16.mxu0 0
  %598 = vmatpush1.bf16.msra.mxu0 0
  %599 = vmatprep.subr.bf16.mxu0 0
  %600 = vmatpush1.bf16.msra.mxu0 0
  %601 = vmatprep.subr.bf16.mxu0 0
  %602 = vmatpush1.bf16.msra.mxu0 0
  %603 = vmatprep.subr.bf16.mxu0 0
  %604 = vmatpush1.bf16.msra.mxu0 0
  %605 = vmatprep.subr.bf16.mxu0 0
  %606 = vmatpush1.bf16.msra.mxu0 0
  %607 = vmatprep.subr.bf16.mxu0 0
  %608 = vmatpush1.bf16.msra.mxu0 0
  %609 = vmatprep.mubr.bf16.mxu0 0
  %610 = vmatmul.mubr.bf16.gmra.mrb[0].mxu0 %v21
  %v611 = vpop.f32.mrb[0].mxu0
  %v612 = vadd.f32 %v115, %v611
  %v613 = vpop.f32.mrb[0].mxu0
  %v614 = vadd.f32 %v119, %v613
  %v615 = vpop.f32.mrb[0].mxu0
  %v616 = vadd.f32 %v115, %v615
  %v617 = vpop.f32.mrb[0].mxu0
  %v618 = vadd.f32 %v119, %v617
  %619 = vdwg.mxu0
  %620 = vst [vmem:[%s3] sm:$0xff] %v483
  %621 = vst [vmem:[%s3 + $0x8] sm:$0xff] %v485
  %622 = vst [vmem:[%s3 + $0x10] sm:$0xff] %v526
  %623 = vst [vmem:[%s3 + $0x18] sm:$0xff] %v528
  %624 = vst [vmem:[%s3 + $0x20] sm:$0xff] %v569
  %625 = vst [vmem:[%s3 + $0x28] sm:$0xff] %v571
  %626 = vst [vmem:[%s3 + $0x30] sm:$0xff] %v612
  %627 = vst [vmem:[%s3 + $0x38] sm:$0xff] %v614
  %628 = vst [vmem:[%s3 + $0x40] sm:$0xff] %v487
  %629 = vst [vmem:[%s3 + $0x48] sm:$0xff] %v489
  %630 = vst [vmem:[%s3 + $0x50] sm:$0xff] %v530
  %631 = vst [vmem:[%s3 + $0x58] sm:$0xff] %v532
  %632 = vst [vmem:[%s3 + $0x60] sm:$0xff] %v573
  %633 = vst [vmem:[%s3 + $0x68] sm:$0xff] %v575
  %634 = vst [vmem:[%s3 + $0x70] sm:$0xff] %v616
  %635 = vst [vmem:[%s3 + $0x78] sm:$0xff] %v618
  // Predicated region
  $region14: #{crnn_forward.11} parent=0 // pred_check
    _
  $region15: #{crnn_forward.11} parent=0 // pred_check_branch
    %637 = sbr.rel (0) target = $region17
  $region16: #{crnn_forward.11} parent=0 // pred_region
    _
  $region17: #{crnn_forward.11} parent=0 // pred_fallthru
    _
  // Predicated region
  $region18: #{crnn_forward.11} parent=0 // pred_check
    _
  $region19: #{crnn_forward.11} parent=0 // pred_check_branch
    %639 = sbr.rel (0) target = $region21
  $region20: #{crnn_forward.11} parent=0 // pred_region
    _
  $region21: #{crnn_forward.11} parent=0 // pred_fallthru
    _

// kernel: crnn_forward.13
$region0: #{crnn_forward.13}
  #allocation0 [shape = 'u32[]', space=smem, size = 0x4, offset = 0x4, fixed_abs, tag = 'smem constant byte address 0x4 - core index']
  #allocation1 [shape = 'u32[144,128]{1,0:T(1,128)}', space=vmem, size = 0x12000, scoped, tag = 'internal scratch']
  %s0 = inlined_call_operand.vmem [shape: f32[16,256], index: 0, kind: input, shape index: {}]
  %s1 = inlined_call_operand.vmem [shape: bf16[256,128], index: 1, kind: input, shape index: {}]
  %s2 = inlined_call_operand.vmem [shape: f32[1,128], index: 2, kind: input, shape index: {}]
  %s3 = inlined_call_operand.vmem [shape: f32[16,128], index: 3, kind: output, shape index: {}]
  %s4 = sld [smem:[#allocation0]]
  $region22: #{crnn_forward.13} parent=0
    _
  %s6 = ssub.s32 1, %s4
  %s7 = scalar_select 0, %s6, %s4
  // Predicated region
  $region2: #{crnn_forward.13} parent=0 // pred_check
    _
  $region3: #{crnn_forward.13} parent=0 // pred_check_branch
    %9 = sbr.rel (0) target = $region5
  $region4: #{crnn_forward.13} parent=0 // pred_region
    _
  $region5: #{crnn_forward.13} parent=0 // pred_fallthru
    _
  // Predicated region
  $region6: #{crnn_forward.13} parent=0 // pred_check
    _
  $region7: #{crnn_forward.13} parent=0 // pred_check_branch
    %11 = sbr.rel (0) target = $region9
  $region8: #{crnn_forward.13} parent=0 // pred_region
    _
  $region9: #{crnn_forward.13} parent=0 // pred_fallthru
    _
  // Predicated region
  $region10: #{crnn_forward.13} parent=0 // pred_check
    _
  $region11: #{crnn_forward.13} parent=0 // pred_check_branch
    %13 = sbr.rel (0) target = $region13
  $region12: #{crnn_forward.13} parent=0 // pred_region
    _
  $region13: #{crnn_forward.13} parent=0 // pred_fallthru
    _
  %v15 = vld [vmem:[%s0] sm:$0xff]
  %v16 = vld [vmem:[%s0 + $0x8] sm:$0xff]
  %v17 = vld [vmem:[%s0 + $0x10] sm:$0xff]
  %v18 = vld [vmem:[%s0 + $0x18] sm:$0xff]
  %v19 = vpack.c.bf16 %v17, %v15
  %v20 = vpack.c.bf16 %v18, %v16
  %v21 = vld [vmem:[%s1] sm:$0xf]
  %v22 = vld [vmem:[%s1 + $0x4] sm:$0xf]
  %v23 = vld [vmem:[%s1 + $0x8] sm:$0xf]
  %v24 = vld [vmem:[%s1 + $0xc] sm:$0xf]
  %v25 = vld [vmem:[%s1 + $0x10] sm:$0xf]
  %v26 = vld [vmem:[%s1 + $0x14] sm:$0xf]
  %v27 = vld [vmem:[%s1 + $0x18] sm:$0xf]
  %v28 = vld [vmem:[%s1 + $0x1c] sm:$0xf]
  %v29 = vld [vmem:[%s1 + $0x20] sm:$0xf]
  %v30 = vld [vmem:[%s1 + $0x24] sm:$0xf]
  %v31 = vld [vmem:[%s1 + $0x28] sm:$0xf]
  %v32 = vld [vmem:[%s1 + $0x2c] sm:$0xf]
  %v33 = vld [vmem:[%s1 + $0x30] sm:$0xf]
  %v34 = vld [vmem:[%s1 + $0x34] sm:$0xf]
  %v35 = vld [vmem:[%s1 + $0x38] sm:$0xf]
  %v36 = vld [vmem:[%s1 + $0x3c] sm:$0xf]
  %v37 = vld [vmem:[%s1 + $0x40] sm:$0xf]
  %v38 = vld [vmem:[%s1 + $0x44] sm:$0xf]
  %v39 = vld [vmem:[%s1 + $0x48] sm:$0xf]
  %v40 = vld [vmem:[%s1 + $0x4c] sm:$0xf]
  %v41 = vld [vmem:[%s1 + $0x50] sm:$0xf]
  %v42 = vld [vmem:[%s1 + $0x54] sm:$0xf]
  %v43 = vld [vmem:[%s1 + $0x58] sm:$0xf]
  %v44 = vld [vmem:[%s1 + $0x5c] sm:$0xf]
  %v45 = vld [vmem:[%s1 + $0x60] sm:$0xf]
  %v46 = vld [vmem:[%s1 + $0x64] sm:$0xf]
  %v47 = vld [vmem:[%s1 + $0x68] sm:$0xf]
  %v48 = vld [vmem:[%s1 + $0x6c] sm:$0xf]
  %v49 = vld [vmem:[%s1 + $0x70] sm:$0xf]
  %v50 = vld [vmem:[%s1 + $0x74] sm:$0xf]
  %v51 = vld [vmem:[%s1 + $0x78] sm:$0xf]
  %v52 = vld [vmem:[%s1 + $0x7c] sm:$0xf]
  %v53 = vld [vmem:[%s2] sm:$0x1]
  %v55 = vlaneseq
  %v56 = vshrl.u32 %v55, 7
  %v57 = vsub.s32 0, %v56
  %v58 = vrot.slane %v53, %v57
  %v92 = vunpack.c.l.b16 %v21
  %v93 = vunpack.c.l.b16 %v22
  %v94 = vunpack.c.l.b16 %v23
  %v95 = vunpack.c.l.b16 %v24
  %v96 = vunpack.c.l.b16 %v25
  %v97 = vunpack.c.l.b16 %v26
  %v98 = vunpack.c.l.b16 %v27
  %v99 = vunpack.c.l.b16 %v28
  %v100 = vunpack.c.l.b16 %v29
  %v101 = vunpack.c.l.b16 %v30
  %v102 = vunpack.c.l.b16 %v31
  %v103 = vunpack.c.l.b16 %v32
  %v104 = vunpack.c.l.b16 %v33
  %v105 = vunpack.c.l.b16 %v34
  %v106 = vunpack.c.l.b16 %v35
  %v107 = vunpack.c.l.b16 %v36
  %v108 = vunpack.c.l.b16 %v37
  %v109 = vunpack.c.l.b16 %v38
  %v110 = vunpack.c.l.b16 %v39
  %v111 = vunpack.c.l.b16 %v40
  %v112 = vunpack.c.l.b16 %v41
  %v113 = vunpack.c.l.b16 %v42
  %v114 = vunpack.c.l.b16 %v43
  %v115 = vunpack.c.l.b16 %v44
  %v116 = vunpack.c.l.b16 %v45
  %v117 = vunpack.c.l.b16 %v46
  %v118 = vunpack.c.l.b16 %v47
  %v119 = vunpack.c.l.b16 %v48
  %v120 = vunpack.c.l.b16 %v49
  %v121 = vunpack.c.l.b16 %v50
  %v122 = vunpack.c.l.b16 %v51
  %v123 = vunpack.c.l.b16 %v52
  %v124 = vpack.c.b16 %v93, %v92
  %v125 = vpack.c.b16 %v95, %v94
  %v126 = vpack.c.b16 %v97, %v96
  %v127 = vpack.c.b16 %v99, %v98
  %v128 = vpack.c.b16 %v101, %v100
  %v129 = vpack.c.b16 %v103, %v102
  %v130 = vpack.c.b16 %v105, %v104
  %v131 = vpack.c.b16 %v107, %v106
  %v132 = vpack.c.b16 %v109, %v108
  %v133 = vpack.c.b16 %v111, %v110
  %v134 = vpack.c.b16 %v113, %v112
  %v135 = vpack.c.b16 %v115, %v114
  %v136 = vpack.c.b16 %v117, %v116
  %v137 = vpack.c.b16 %v119, %v118
  %v138 = vpack.c.b16 %v121, %v120
  %v139 = vpack.c.b16 %v123, %v122
  %156 = vmatprep.subr.bf16.mxu0 0
  %157 = vmatpush1.bf16.msra.mxu0 %v124
  %158 = vmatprep.subr.bf16.mxu0 0
  %159 = vmatpush1.bf16.msra.mxu0 %v125
  %160 = vmatprep.subr.bf16.mxu0 0
  %161 = vmatpush1.bf16.msra.mxu0 %v126
  %162 = vmatprep.subr.bf16.mxu0 0
  %163 = vmatpush1.bf16.msra.mxu0 %v127
  %164 = vmatprep.subr.bf16.mxu0 0
  %165 = vmatpush1.bf16.msra.mxu0 %v128
  %166 = vmatprep.subr.bf16.mxu0 0
  %167 = vmatpush1.bf16.msra.mxu0 %v129
  %168 = vmatprep.subr.bf16.mxu0 0
  %169 = vmatpush1.bf16.msra.mxu0 %v130
  %170 = vmatprep.subr.bf16.mxu0 0
  %171 = vmatpush1.bf16.msra.mxu0 %v131
  %172 = vmatprep.subr.bf16.mxu0 0
  %173 = vmatpush1.bf16.msra.mxu0 %v132
  %174 = vmatprep.subr.bf16.mxu0 0
  %175 = vmatpush1.bf16.msra.mxu0 %v133
  %176 = vmatprep.subr.bf16.mxu0 0
  %177 = vmatpush1.bf16.msra.mxu0 %v134
  %178 = vmatprep.subr.bf16.mxu0 0
  %179 = vmatpush1.bf16.msra.mxu0 %v135
  %180 = vmatprep.subr.bf16.mxu0 0
  %181 = vmatpush1.bf16.msra.mxu0 %v136
  %182 = vmatprep.subr.bf16.mxu0 0
  %183 = vmatpush1.bf16.msra.mxu0 %v137
  %184 = vmatprep.subr.bf16.mxu0 0
  %185 = vmatpush1.bf16.msra.mxu0 %v138
  %186 = vmatprep.subr.bf16.mxu0 0
  %187 = vmatpush1.bf16.msra.mxu0 %v139
  %188 = vmatprep.mubr.bf16.mxu0 %v20
  %189 = vmatmul.mubr.bf16.gmra.mrb[0].mxu0 %v19
  %v190 = vpop.f32.mrb[0].mxu0
  %v191 = vadd.f32 %v58, %v190
  %v192 = vpop.f32.mrb[0].mxu0
  %v193 = vpop.f32.mrb[0].mxu0
  %v194 = vadd.f32 %v58, %v193
  %v195 = vpop.f32.mrb[0].mxu0
  %196 = vdwg.mxu0
  %197 = vst [vmem:[%s3] sm:$0xff] %v191
  %198 = vst [vmem:[%s3 + $0x8] sm:$0xff] %v194
  // Predicated region
  $region14: #{crnn_forward.13} parent=0 // pred_check
    _
  $region15: #{crnn_forward.13} parent=0 // pred_check_branch
    %200 = sbr.rel (0) target = $region17
  $region16: #{crnn_forward.13} parent=0 // pred_region
    _
  $region17: #{crnn_forward.13} parent=0 // pred_fallthru
    _
  // Predicated region
  $region18: #{crnn_forward.13} parent=0 // pred_check
    _
  $region19: #{crnn_forward.13} parent=0 // pred_check_branch
    %202 = sbr.rel (0) target = $region21
  $region20: #{crnn_forward.13} parent=0 // pred_region
    _
  $region21: #{crnn_forward.13} parent=0 // pred_fallthru
    _

</llo_original>
